<compile_context>
chip_gen: v6e
topology: v6e:2x2x1
jax: 0.10.0
libtpu: 0.0.40
codegen_flags: <defaults>
</compile_context>

<pallas_src>
import math

import numpy as np
import jax
import jax.numpy as jnp
from jax.experimental import pallas as pl
from jax.experimental.pallas import tpu as pltpu

# ----------------------------- config -----------------------------------------
B = 2                       # batch
WINDOW = 4                  # patches per side (224/16 analogue -> 14; scaled to 4)
S = WINDOW * WINDOW + 1     # 17 tokens (CLS + patches)
SP = 24                     # padded sequence length (multiple of 8)
D = 32                      # hidden size
NUM_HEADS = 4
HEAD_DIM = D // NUM_HEADS   # 8
INTER = 64                  # intermediate (MLP) size
LAYERS = 2
NUM_CLASSES = 2
NC_PAD = 128                # lane-padded classifier width
ROWS = B * SP               # 48
LN_EPS = 1e-12              # BeitConfig.layer_norm_eps
LAYER_SCALE_INIT = 0.1      # BeitConfig.layer_scale_init_value
NEG_BIAS = -1e9             # mask value for padded key columns
ATTN_SCALE = 1.0 / math.sqrt(HEAD_DIM)


# ----------------------------- in-kernel helpers --------------------------------
def _gelu_tanh(x):
    # tanh-approx GELU (routes to EUP). ~1e-3 max abs diff vs exact erf GELU.
    c = 0.7978845608028654  # sqrt(2/pi)
    return 0.5 * x * (1.0 + jnp.tanh(c * (x + 0.044715 * x * x * x)))


def _layernorm(x, g, b):
    mean = jnp.mean(x, axis=-1, keepdims=True)
    var = jnp.mean((x - mean) ** 2, axis=-1, keepdims=True)
    return (x - mean) * jax.lax.rsqrt(var + LN_EPS) * g + b


# ----------------------------- fused encoder kernel -----------------------------
def _fused_encoder_kernel(
        x_ref, ln1g_ref, ln1b_ref, wqkv_ref, bqkv_ref, relb_ref,
        wo_ref, bo_ref, lam1_ref, ln2g_ref, ln2b_ref,
        w1_ref, b1_ref, w2_ref, b2_ref, lam2_ref,
        fcw_ref, fcb_ref,
        logits_ref, act_ref):
    layer = pl.program_id(0)

    # Load the (padded, flattened) input once; activation lives in VMEM scratch.
    @pl.when(layer == 0)
    def _():
        act_ref[...] = x_ref[...]

    x = act_ref[...]                                      # [ROWS, D] f32

    # ---- self-attention block ----
    h = _layernorm(x, ln1g_ref[...], ln1b_ref[...])
    qkv = jnp.dot(h, wqkv_ref[...], preferred_element_type=jnp.float32) + bqkv_ref[...]
    q = qkv[:, 0:D]
    k = qkv[:, D:2 * D]
    v = qkv[:, 2 * D:3 * D]

    batch_ctx = []
    for b in range(B):                                    # static unroll
        r0 = b * SP
        qb = q[r0:r0 + SP]
        kb = k[r0:r0 + SP]
        vb = v[r0:r0 + SP]
        head_out = []
        for hh in range(NUM_HEADS):                       # static unroll
            c0 = hh * HEAD_DIM
            qh = qb[:, c0:c0 + HEAD_DIM]
            kh = kb[:, c0:c0 + HEAD_DIM]
            vh = vb[:, c0:c0 + HEAD_DIM]
            scores = jax.lax.dot_general(
                qh, kh, dimension_numbers=(((1,), (1,)), ((), ())),
                preferred_element_type=jnp.float32) * ATTN_SCALE + relb_ref[hh]
            m = jnp.max(scores, axis=-1, keepdims=True)
            p = jnp.exp(scores - m)
            p = p * pl.reciprocal(jnp.sum(p, axis=-1, keepdims=True), approx=True)
            head_out.append(jnp.dot(p, vh, preferred_element_type=jnp.float32))
        batch_ctx.append(jnp.concatenate(head_out, axis=1))       # [SP, D]
    ctx = jnp.concatenate(batch_ctx, axis=0)                      # [ROWS, D]

    attn_out = jnp.dot(ctx, wo_ref[...], preferred_element_type=jnp.float32) + bo_ref[...]
    x = x + lam1_ref[...] * attn_out          # drop_path is identity in eval mode

    # ---- MLP block ----
    h2 = _layernorm(x, ln2g_ref[...], ln2b_ref[...])
    inter = _gelu_tanh(
        jnp.dot(h2, w1_ref[...], preferred_element_type=jnp.float32) + b1_ref[...])
    mlp = jnp.dot(inter, w2_ref[...], preferred_element_type=jnp.float32) + b2_ref[...]
    x = x + lam2_ref[...] * mlp

    act_ref[...] = x

    # ---- classifier head (last layer only) ----
    @pl.when(layer == pl.num_programs(0) - 1)
    def _():
        # CLS tokens sit at rows b*SP. nn.Dropout(0.1) is identity in eval mode.
        cls = jnp.concatenate([x[b * SP:b * SP + 1, :] for b in range(B)], axis=0)  # [B, D]
        logits = jnp.dot(cls, fcw_ref[...], preferred_element_type=jnp.float32) + fcb_ref[...]
        pad = jnp.zeros((8 - B, NC_PAD), jnp.float32)
        logits_ref[...] = jnp.concatenate([logits, pad], axis=0)   # full-tile store


# ----------------------------- BEiT glue / params -------------------------------
def make_relative_position_index(window):
    # Same construction as HF BeitRelativePositionBias.
    wh = ww = window
    coords = np.stack(np.meshgrid(np.arange(wh), np.arange(ww), indexing="ij"))
    coords_flat = coords.reshape(2, -1)
    rel = coords_flat[:, :, None] - coords_flat[:, None, :]
    rel = rel.transpose(1, 2, 0).astype(np.int64)
    rel[:, :, 0] += wh - 1
    rel[:, :, 1] += ww - 1
    rel[:, :, 0] *= 2 * ww - 1
    num_rel = (2 * wh - 1) * (2 * ww - 1) + 3
    n = wh * ww
    idx = np.zeros((n + 1, n + 1), dtype=np.int64)
    idx[1:, 1:] = rel.sum(-1)
    idx[0, 0:] = num_rel - 3
    idx[0:, 0] = num_rel - 2
    idx[0, 0] = num_rel - 1
    return idx, num_rel


def init_params(key):
    rel_idx_np, num_rel = make_relative_position_index(WINDOW)
    rel_idx = jnp.asarray(rel_idx_np.reshape(-1), jnp.int32)

    def nrm(k, shape):
        return 0.02 * jax.random.normal(k, shape, jnp.float32)

    per_layer = {name: [] for name in (
        "ln1_g", "ln1_b", "wqkv", "bqkv", "relb", "wo", "bo", "lam1",
        "ln2_g", "ln2_b", "w1", "b1", "w2", "b2", "lam2")}

    for li in range(LAYERS):
        lk = jax.random.fold_in(key, li)
        ks = jax.random.split(lk, 10)
        wq = nrm(ks[0], (D, D)); bq = jnp.zeros((D,), jnp.float32)
        wk = nrm(ks[1], (D, D))                               # key proj has no bias in BEiT
        wv = nrm(ks[2], (D, D)); bv = jnp.zeros((D,), jnp.float32)
        wqkv = jnp.concatenate([wq, wk, wv], axis=1)          # [D, 3D]
        bqkv = jnp.concatenate([bq, jnp.zeros((D,), jnp.float32), bv])  # K-bias slot is 0

        # Precompute per-layer relative-position bias, padded & key-masked: [H, SP, SP]
        rel_table = nrm(ks[4], (num_rel, NUM_HEADS))
        rb = rel_table[rel_idx].reshape(S, S, NUM_HEADS).transpose(2, 0, 1)   # [H, S, S]
        rb = jnp.pad(rb, ((0, 0), (0, SP - S), (0, SP - S)))
        rb = rb.at[:, :, S:].set(NEG_BIAS)                    # mask padded key columns

        per_layer["ln1_g"].append(jnp.ones((1, D), jnp.float32))
        per_layer["ln1_b"].append(jnp.zeros((1, D), jnp.float32))
        per_layer["wqkv"].append(wqkv)
        per_layer["bqkv"].append(bqkv.reshape(1, 3 * D))
        per_layer["relb"].append(rb)
        per_layer["wo"].append(nrm(ks[3], (D, D)))
        per_layer["bo"].append(jnp.zeros((1, D), jnp.float32))
        per_layer["lam1"].append(LAYER_SCALE_INIT * jnp.ones((1, D), jnp.float32))
        per_layer["ln2_g"].append(jnp.ones((1, D), jnp.float32))
        per_layer["ln2_b"].append(jnp.zeros((1, D), jnp.float32))
        per_layer["w1"].append(nrm(ks[5], (D, INTER)))
        per_layer["b1"].append(jnp.zeros((1, INTER), jnp.float32))
        per_layer["w2"].append(nrm(ks[6], (INTER, D)))
        per_layer["b2"].append(jnp.zeros((1, D), jnp.float32))
        per_layer["lam2"].append(LAYER_SCALE_INIT * jnp.ones((1, D), jnp.float32))

    params = {name: jnp.stack(vals, axis=0) for name, vals in per_layer.items()}

    hk = jax.random.fold_in(key, 10_000)
    hks = jax.random.split(hk, 2)
    fc_w = nrm(hks[0], (D, NUM_CLASSES))
    params["fc_w"] = jnp.pad(fc_w, ((0, 0), (0, NC_PAD - NUM_CLASSES)))    # lane-pad to 128
    params["fc_b"] = jnp.zeros((1, NC_PAD), jnp.float32)
    return params


# ----------------------------- forward -------------------------------------------
def nlp_beit_forward(params, hidden_states):
    # Pad sequence 17 -> 24 and flatten to a lane/sublane-friendly [B*SP, D] slab.
    x = jnp.pad(hidden_states, ((0, 0), (0, SP - S), (0, 0))).reshape(ROWS, D)

    layer_vec = lambda l: (l, 0, 0)
    logits_pad = pl.pallas_call(
        _fused_encoder_kernel,
        grid=(LAYERS,),
        in_specs=[
            pl.BlockSpec((ROWS, D), lambda l: (0, 0)),                       # x (loaded once)
            pl.BlockSpec((None, 1, D), layer_vec),                           # ln1_g
            pl.BlockSpec((None, 1, D), layer_vec),                           # ln1_b
            pl.BlockSpec((None, D, 3 * D), layer_vec),                       # wqkv
            pl.BlockSpec((None, 1, 3 * D), layer_vec),                       # bqkv
            pl.BlockSpec((None, NUM_HEADS, SP, SP), lambda l: (l, 0, 0, 0)), # rel bias
            pl.BlockSpec((None, D, D), layer_vec),                           # wo
            pl.BlockSpec((None, 1, D), layer_vec),                           # bo
            pl.BlockSpec((None, 1, D), layer_vec),                           # lambda1
            pl.BlockSpec((None, 1, D), layer_vec),                           # ln2_g
            pl.BlockSpec((None, 1, D), layer_vec),                           # ln2_b
            pl.BlockSpec((None, D, INTER), layer_vec),                       # w1
            pl.BlockSpec((None, 1, INTER), layer_vec),                       # b1
            pl.BlockSpec((None, INTER, D), layer_vec),                       # w2
            pl.BlockSpec((None, 1, D), layer_vec),                           # b2
            pl.BlockSpec((None, 1, D), layer_vec),                           # lambda2
            pl.BlockSpec((D, NC_PAD), lambda l: (0, 0)),                     # fc_w (padded)
            pl.BlockSpec((1, NC_PAD), lambda l: (0, 0)),                     # fc_b (padded)
        ],
        out_specs=pl.BlockSpec((8, NC_PAD), lambda l: (0, 0)),
        out_shape=jax.ShapeDtypeStruct((8, NC_PAD), jnp.float32),
        scratch_shapes=[pltpu.VMEM((ROWS, D), jnp.float32)],                 # resident activation
        compiler_params=pltpu.CompilerParams(
            dimension_semantics=("arbitrary",)),    # layer axis carries state in scratch
    )(x,
      params["ln1_g"], params["ln1_b"], params["wqkv"], params["bqkv"], params["relb"],
      params["wo"], params["bo"], params["lam1"], params["ln2_g"], params["ln2_b"],
      params["w1"], params["b1"], params["w2"], params["b2"], params["lam2"],
      params["fc_w"], params["fc_b"])

    return logits_pad[:B, :NUM_CLASSES]


# ----------------------------- main -----------------------------------------------
if __name__ == "__main__":
    key = jax.random.PRNGKey(0)
    params = init_params(key)
    x = jax.random.normal(jax.random.fold_in(key, 12345), (B, S, D), jnp.float32)

    logits = jax.jit(nlp_beit_forward)(params, x)
    logits = jax.block_until_ready(logits)
    assert logits.shape == (B, NUM_CLASSES), logits.shape
    assert bool(jnp.all(jnp.isfinite(logits)))
    print("KERNEL_OK")
</pallas_src>

<mosaic_0001>
module attributes {stable_mosaic.version = 11 : i64} {
  func.func @_fused_encoder_kernel(%arg0: i32, %arg1: memref<48x32xf32, #tpu.memory_space<vmem>>, %arg2: memref<1x1x32xf32, #tpu.memory_space<vmem>>, %arg3: memref<1x1x32xf32, #tpu.memory_space<vmem>>, %arg4: memref<1x32x96xf32, #tpu.memory_space<vmem>>, %arg5: memref<1x1x96xf32, #tpu.memory_space<vmem>>, %arg6: memref<1x4x24x24xf32, #tpu.memory_space<vmem>>, %arg7: memref<1x32x32xf32, #tpu.memory_space<vmem>>, %arg8: memref<1x1x32xf32, #tpu.memory_space<vmem>>, %arg9: memref<1x1x32xf32, #tpu.memory_space<vmem>>, %arg10: memref<1x1x32xf32, #tpu.memory_space<vmem>>, %arg11: memref<1x1x32xf32, #tpu.memory_space<vmem>>, %arg12: memref<1x32x64xf32, #tpu.memory_space<vmem>>, %arg13: memref<1x1x64xf32, #tpu.memory_space<vmem>>, %arg14: memref<1x64x32xf32, #tpu.memory_space<vmem>>, %arg15: memref<1x1x32xf32, #tpu.memory_space<vmem>>, %arg16: memref<1x1x32xf32, #tpu.memory_space<vmem>>, %arg17: memref<32x128xf32, #tpu.memory_space<vmem>>, %arg18: memref<1x128xf32, #tpu.memory_space<vmem>>, %arg19: memref<8x128xf32, #tpu.memory_space<vmem>>, %arg20: memref<48x32xf32, #tpu.memory_space<vmem>>) attributes {dimension_semantics = [#tpu.dimension_semantics<arbitrary>], iteration_bounds = array<i64: 2>, scalar_prefetch = 0 : i64, scratch_operands = 1 : i64, tpu.core_type = #tpu.core_type<tc>, window_params = [{pipeline_mode = #tpu.pipeline_mode<synchronous>, transform_indices = @transform_0, window_bounds = array<i64: 48, 32>}, {transform_indices = @transform_1, window_bounds = array<i64: 1, 1, 32>}, {transform_indices = @transform_2, window_bounds = array<i64: 1, 1, 32>}, {transform_indices = @transform_3, window_bounds = array<i64: 1, 32, 96>}, {transform_indices = @transform_4, window_bounds = array<i64: 1, 1, 96>}, {transform_indices = @transform_5, window_bounds = array<i64: 1, 4, 24, 24>}, {transform_indices = @transform_6, window_bounds = array<i64: 1, 32, 32>}, {transform_indices = @transform_7, window_bounds = array<i64: 1, 1, 32>}, {transform_indices = @transform_8, window_bounds = array<i64: 1, 1, 32>}, {transform_indices = @transform_9, window_bounds = array<i64: 1, 1, 32>}, {transform_indices = @transform_10, window_bounds = array<i64: 1, 1, 32>}, {transform_indices = @transform_11, window_bounds = array<i64: 1, 32, 64>}, {transform_indices = @transform_12, window_bounds = array<i64: 1, 1, 64>}, {transform_indices = @transform_13, window_bounds = array<i64: 1, 64, 32>}, {transform_indices = @transform_14, window_bounds = array<i64: 1, 1, 32>}, {transform_indices = @transform_15, window_bounds = array<i64: 1, 1, 32>}, {pipeline_mode = #tpu.pipeline_mode<synchronous>, transform_indices = @transform_16, window_bounds = array<i64: 32, 128>}, {pipeline_mode = #tpu.pipeline_mode<synchronous>, transform_indices = @transform_17, window_bounds = array<i64: 1, 128>}, {pipeline_mode = #tpu.pipeline_mode<synchronous>, transform_indices = @transform_18, window_bounds = array<i64: 8, 128>}]} {
    %c0_i32 = arith.constant 0 : i32
    %0 = arith.cmpi eq, %arg0, %c0_i32 : i32
    %1 = arith.extui %0 : i1 to i32
    %c0_i32_0 = arith.constant 0 : i32
    %2 = arith.cmpi ne, %1, %c0_i32_0 : i32
    scf.if %2 {
      %c0_133 = arith.constant 0 : index
      %c0_134 = arith.constant 0 : index
      %283 = vector.load %arg1[%c0_133, %c0_134] : memref<48x32xf32, #tpu.memory_space<vmem>>, vector<48x32xf32>
      %c0_135 = arith.constant 0 : index
      %c0_136 = arith.constant 0 : index
      %284 = vector.load %arg20[%c0_135, %c0_136] : memref<48x32xf32, #tpu.memory_space<vmem>>, vector<48x32xf32>
      tpu.vector_store %arg20[%c0_135, %c0_136], %283 {strides = array<i32>} : memref<48x32xf32, #tpu.memory_space<vmem>>, vector<48x32xf32>,
    } else {
    }
    %c0 = arith.constant 0 : index
    %c0_1 = arith.constant 0 : index
    %3 = vector.load %arg20[%c0, %c0_1] : memref<48x32xf32, #tpu.memory_space<vmem>>, vector<48x32xf32>
    %c0_2 = arith.constant 0 : index
    %c0_3 = arith.constant 0 : index
    %c0_4 = arith.constant 0 : index
    %4 = vector.load %arg2[%c0_2, %c0_3, %c0_4] : memref<1x1x32xf32, #tpu.memory_space<vmem>>, vector<1x1x32xf32>
    %5 = vector.shape_cast %4 : vector<1x1x32xf32> to vector<1x32xf32>
    %c0_5 = arith.constant 0 : index
    %c0_6 = arith.constant 0 : index
    %c0_7 = arith.constant 0 : index
    %6 = vector.load %arg3[%c0_5, %c0_6, %c0_7] : memref<1x1x32xf32, #tpu.memory_space<vmem>>, vector<1x1x32xf32>
    %7 = vector.shape_cast %6 : vector<1x1x32xf32> to vector<1x32xf32>
    %cst = arith.constant dense<0.000000e+00> : vector<48xf32>
    %8 = vector.multi_reduction <add>, %3, %cst [1] : vector<48x32xf32> to vector<48xf32>
    %9 = vector.shape_cast %8 : vector<48xf32> to vector<48x1xf32>
    %cst_8 = arith.constant 3.200000e+01 : f32
    %10 = vector.broadcast %cst_8 : f32 to vector<48x1xf32>
    %11 = arith.divf %9, %10 : vector<48x1xf32>
    %12 = vector.broadcast %11 : vector<48x1xf32> to vector<48x32xf32>
    %13 = arith.subf %3, %12 : vector<48x32xf32>
    %14 = arith.mulf %13, %13 : vector<48x32xf32>
    %cst_9 = arith.constant dense<0.000000e+00> : vector<48xf32>
    %15 = vector.multi_reduction <add>, %14, %cst_9 [1] : vector<48x32xf32> to vector<48xf32>
    %16 = vector.shape_cast %15 : vector<48xf32> to vector<48x1xf32>
    %cst_10 = arith.constant 3.200000e+01 : f32
    %17 = vector.broadcast %cst_10 : f32 to vector<48x1xf32>
    %18 = arith.divf %16, %17 : vector<48x1xf32>
    %19 = vector.broadcast %11 : vector<48x1xf32> to vector<48x32xf32>
    %20 = arith.subf %3, %19 : vector<48x32xf32>
    %cst_11 = arith.constant 9.99999996E-13 : f32
    %21 = vector.broadcast %cst_11 : f32 to vector<48x1xf32>
    %22 = arith.addf %18, %21 : vector<48x1xf32>
    %23 = math.rsqrt %22 : vector<48x1xf32>
    %24 = vector.broadcast %23 : vector<48x1xf32> to vector<48x32xf32>
    %25 = arith.mulf %20, %24 : vector<48x32xf32>
    %26 = vector.broadcast %5 : vector<1x32xf32> to vector<48x32xf32>
    %27 = arith.mulf %25, %26 : vector<48x32xf32>
    %28 = vector.broadcast %7 : vector<1x32xf32> to vector<48x32xf32>
    %29 = arith.addf %27, %28 : vector<48x32xf32>
    %c0_12 = arith.constant 0 : index
    %c0_13 = arith.constant 0 : index
    %c0_14 = arith.constant 0 : index
    %30 = vector.load %arg4[%c0_12, %c0_13, %c0_14] : memref<1x32x96xf32, #tpu.memory_space<vmem>>, vector<1x32x96xf32>
    %31 = vector.shape_cast %30 : vector<1x32x96xf32> to vector<32x96xf32>
    %cst_15 = arith.constant dense<0.000000e+00> : vector<48x96xf32>
    %32 = tpu.matmul %29, %31, %cst_15 {dimension_numbers = #tpu.dot_dimension_numbers<[1], [0], [0], [1], [0, 0, 1, 1], [], []>} : vector<48x32xf32>, vector<32x96xf32>, vector<48x96xf32> -> vector<48x96xf32>
    %c0_16 = arith.constant 0 : index
    %c0_17 = arith.constant 0 : index
    %c0_18 = arith.constant 0 : index
    %33 = vector.load %arg5[%c0_16, %c0_17, %c0_18] : memref<1x1x96xf32, #tpu.memory_space<vmem>>, vector<1x1x96xf32>
    %34 = vector.shape_cast %33 : vector<1x1x96xf32> to vector<1x96xf32>
    %35 = vector.broadcast %34 : vector<1x96xf32> to vector<48x96xf32>
    %36 = arith.addf %32, %35 : vector<48x96xf32>
    %37 = vector.extract_strided_slice %36 {offsets = [0, 0], sizes = [48, 32], strides = [1, 1]} : vector<48x96xf32> to vector<48x32xf32>
    %38 = vector.extract_strided_slice %36 {offsets = [0, 32], sizes = [48, 32], strides = [1, 1]} : vector<48x96xf32> to vector<48x32xf32>
    %39 = vector.extract_strided_slice %36 {offsets = [0, 64], sizes = [48, 32], strides = [1, 1]} : vector<48x96xf32> to vector<48x32xf32>
    %40 = vector.extract_strided_slice %37 {offsets = [0, 0], sizes = [24, 32], strides = [1, 1]} : vector<48x32xf32> to vector<24x32xf32>
    %41 = vector.extract_strided_slice %38 {offsets = [0, 0], sizes = [24, 32], strides = [1, 1]} : vector<48x32xf32> to vector<24x32xf32>
    %42 = vector.extract_strided_slice %39 {offsets = [0, 0], sizes = [24, 32], strides = [1, 1]} : vector<48x32xf32> to vector<24x32xf32>
    %43 = vector.extract_strided_slice %40 {offsets = [0, 0], sizes = [24, 8], strides = [1, 1]} : vector<24x32xf32> to vector<24x8xf32>
    %44 = vector.extract_strided_slice %41 {offsets = [0, 0], sizes = [24, 8], strides = [1, 1]} : vector<24x32xf32> to vector<24x8xf32>
    %45 = vector.extract_strided_slice %42 {offsets = [0, 0], sizes = [24, 8], strides = [1, 1]} : vector<24x32xf32> to vector<24x8xf32>
    %cst_19 = arith.constant dense<0.000000e+00> : vector<24x24xf32>
    %46 = tpu.matmul %43, %44, %cst_19 {dimension_numbers = #tpu.dot_dimension_numbers<[1], [1], [0], [0], [0, 0, 1, 0], [], []>} : vector<24x8xf32>, vector<24x8xf32>, vector<24x24xf32> -> vector<24x24xf32>
    %cst_20 = arith.constant 0.353553385 : f32
    %47 = vector.broadcast %cst_20 : f32 to vector<24x24xf32>
    %48 = arith.mulf %46, %47 : vector<24x24xf32>
    %c0_21 = arith.constant 0 : index
    %c0_22 = arith.constant 0 : index
    %c0_23 = arith.constant 0 : index
    %c0_24 = arith.constant 0 : index
    %49 = vector.load %arg6[%c0_21, %c0_22, %c0_23, %c0_24] : memref<1x4x24x24xf32, #tpu.memory_space<vmem>>, vector<1x1x24x24xf32>
    %50 = vector.shape_cast %49 : vector<1x1x24x24xf32> to vector<24x24xf32>
    %51 = arith.addf %48, %50 : vector<24x24xf32>
    %cst_25 = arith.constant dense<0xFF800000> : vector<24xf32>
    %52 = vector.multi_reduction <maximumf>, %51, %cst_25 [1] : vector<24x24xf32> to vector<24xf32>
    %53 = vector.shape_cast %52 : vector<24xf32> to vector<24x1xf32>
    %54 = vector.broadcast %53 : vector<24x1xf32> to vector<24x24xf32>
    %55 = arith.subf %51, %54 : vector<24x24xf32>
    %56 = math.exp %55 : vector<24x24xf32>
    %cst_26 = arith.constant dense<0.000000e+00> : vector<24xf32>
    %57 = vector.multi_reduction <add>, %56, %cst_26 [1] : vector<24x24xf32> to vector<24xf32>
    %58 = vector.shape_cast %57 : vector<24xf32> to vector<24x1xf32>
    %59 = tpu.reciprocal %58 {approx = true} : vector<24x1xf32> -> vector<24x1xf32>
    %60 = vector.broadcast %59 : vector<24x1xf32> to vector<24x24xf32>
    %61 = arith.mulf %56, %60 : vector<24x24xf32>
    %cst_27 = arith.constant dense<0.000000e+00> : vector<24x8xf32>
    %62 = tpu.matmul %61, %45, %cst_27 {dimension_numbers = #tpu.dot_dimension_numbers<[1], [0], [0], [1], [0, 0, 1, 1], [], []>} : vector<24x24xf32>, vector<24x8xf32>, vector<24x8xf32> -> vector<24x8xf32>
    %63 = vector.extract_strided_slice %40 {offsets = [0, 8], sizes = [24, 8], strides = [1, 1]} : vector<24x32xf32> to vector<24x8xf32>
    %64 = vector.extract_strided_slice %41 {offsets = [0, 8], sizes = [24, 8], strides = [1, 1]} : vector<24x32xf32> to vector<24x8xf32>
    %65 = vector.extract_strided_slice %42 {offsets = [0, 8], sizes = [24, 8], strides = [1, 1]} : vector<24x32xf32> to vector<24x8xf32>
    %cst_28 = arith.constant dense<0.000000e+00> : vector<24x24xf32>
    %66 = tpu.matmul %63, %64, %cst_28 {dimension_numbers = #tpu.dot_dimension_numbers<[1], [1], [0], [0], [0, 0, 1, 0], [], []>} : vector<24x8xf32>, vector<24x8xf32>, vector<24x24xf32> -> vector<24x24xf32>
    %cst_29 = arith.constant 0.353553385 : f32
    %67 = vector.broadcast %cst_29 : f32 to vector<24x24xf32>
    %68 = arith.mulf %66, %67 : vector<24x24xf32>
    %c0_30 = arith.constant 0 : index
    %c1 = arith.constant 1 : index
    %c0_31 = arith.constant 0 : index
    %c0_32 = arith.constant 0 : index
    %69 = vector.load %arg6[%c0_30, %c1, %c0_31, %c0_32] : memref<1x4x24x24xf32, #tpu.memory_space<vmem>>, vector<1x1x24x24xf32>
    %70 = vector.shape_cast %69 : vector<1x1x24x24xf32> to vector<24x24xf32>
    %71 = arith.addf %68, %70 : vector<24x24xf32>
    %cst_33 = arith.constant dense<0xFF800000> : vector<24xf32>
    %72 = vector.multi_reduction <maximumf>, %71, %cst_33 [1] : vector<24x24xf32> to vector<24xf32>
    %73 = vector.shape_cast %72 : vector<24xf32> to vector<24x1xf32>
    %74 = vector.broadcast %73 : vector<24x1xf32> to vector<24x24xf32>
    %75 = arith.subf %71, %74 : vector<24x24xf32>
    %76 = math.exp %75 : vector<24x24xf32>
    %cst_34 = arith.constant dense<0.000000e+00> : vector<24xf32>
    %77 = vector.multi_reduction <add>, %76, %cst_34 [1] : vector<24x24xf32> to vector<24xf32>
    %78 = vector.shape_cast %77 : vector<24xf32> to vector<24x1xf32>
    %79 = tpu.reciprocal %78 {approx = true} : vector<24x1xf32> -> vector<24x1xf32>
    %80 = vector.broadcast %79 : vector<24x1xf32> to vector<24x24xf32>
    %81 = arith.mulf %76, %80 : vector<24x24xf32>
    %cst_35 = arith.constant dense<0.000000e+00> : vector<24x8xf32>
    %82 = tpu.matmul %81, %65, %cst_35 {dimension_numbers = #tpu.dot_dimension_numbers<[1], [0], [0], [1], [0, 0, 1, 1], [], []>} : vector<24x24xf32>, vector<24x8xf32>, vector<24x8xf32> -> vector<24x8xf32>
    %83 = vector.extract_strided_slice %40 {offsets = [0, 16], sizes = [24, 8], strides = [1, 1]} : vector<24x32xf32> to vector<24x8xf32>
    %84 = vector.extract_strided_slice %41 {offsets = [0, 16], sizes = [24, 8], strides = [1, 1]} : vector<24x32xf32> to vector<24x8xf32>
    %85 = vector.extract_strided_slice %42 {offsets = [0, 16], sizes = [24, 8], strides = [1, 1]} : vector<24x32xf32> to vector<24x8xf32>
    %cst_36 = arith.constant dense<0.000000e+00> : vector<24x24xf32>
    %86 = tpu.matmul %83, %84, %cst_36 {dimension_numbers = #tpu.dot_dimension_numbers<[1], [1], [0], [0], [0, 0, 1, 0], [], []>} : vector<24x8xf32>, vector<24x8xf32>, vector<24x24xf32> -> vector<24x24xf32>
    %cst_37 = arith.constant 0.353553385 : f32
    %87 = vector.broadcast %cst_37 : f32 to vector<24x24xf32>
    %88 = arith.mulf %86, %87 : vector<24x24xf32>
    %c0_38 = arith.constant 0 : index
    %c2 = arith.constant 2 : index
    %c0_39 = arith.constant 0 : index
    %c0_40 = arith.constant 0 : index
    %89 = vector.load %arg6[%c0_38, %c2, %c0_39, %c0_40] : memref<1x4x24x24xf32, #tpu.memory_space<vmem>>, vector<1x1x24x24xf32>
    %90 = vector.shape_cast %89 : vector<1x1x24x24xf32> to vector<24x24xf32>
    %91 = arith.addf %88, %90 : vector<24x24xf32>
    %cst_41 = arith.constant dense<0xFF800000> : vector<24xf32>
    %92 = vector.multi_reduction <maximumf>, %91, %cst_41 [1] : vector<24x24xf32> to vector<24xf32>
    %93 = vector.shape_cast %92 : vector<24xf32> to vector<24x1xf32>
    %94 = vector.broadcast %93 : vector<24x1xf32> to vector<24x24xf32>
    %95 = arith.subf %91, %94 : vector<24x24xf32>
    %96 = math.exp %95 : vector<24x24xf32>
    %cst_42 = arith.constant dense<0.000000e+00> : vector<24xf32>
    %97 = vector.multi_reduction <add>, %96, %cst_42 [1] : vector<24x24xf32> to vector<24xf32>
    %98 = vector.shape_cast %97 : vector<24xf32> to vector<24x1xf32>
    %99 = tpu.reciprocal %98 {approx = true} : vector<24x1xf32> -> vector<24x1xf32>
    %100 = vector.broadcast %99 : vector<24x1xf32> to vector<24x24xf32>
    %101 = arith.mulf %96, %100 : vector<24x24xf32>
    %cst_43 = arith.constant dense<0.000000e+00> : vector<24x8xf32>
    %102 = tpu.matmul %101, %85, %cst_43 {dimension_numbers = #tpu.dot_dimension_numbers<[1], [0], [0], [1], [0, 0, 1, 1], [], []>} : vector<24x24xf32>, vector<24x8xf32>, vector<24x8xf32> -> vector<24x8xf32>
    %103 = vector.extract_strided_slice %40 {offsets = [0, 24], sizes = [24, 8], strides = [1, 1]} : vector<24x32xf32> to vector<24x8xf32>
    %104 = vector.extract_strided_slice %41 {offsets = [0, 24], sizes = [24, 8], strides = [1, 1]} : vector<24x32xf32> to vector<24x8xf32>
    %105 = vector.extract_strided_slice %42 {offsets = [0, 24], sizes = [24, 8], strides = [1, 1]} : vector<24x32xf32> to vector<24x8xf32>
    %cst_44 = arith.constant dense<0.000000e+00> : vector<24x24xf32>
    %106 = tpu.matmul %103, %104, %cst_44 {dimension_numbers = #tpu.dot_dimension_numbers<[1], [1], [0], [0], [0, 0, 1, 0], [], []>} : vector<24x8xf32>, vector<24x8xf32>, vector<24x24xf32> -> vector<24x24xf32>
    %cst_45 = arith.constant 0.353553385 : f32
    %107 = vector.broadcast %cst_45 : f32 to vector<24x24xf32>
    %108 = arith.mulf %106, %107 : vector<24x24xf32>
    %c0_46 = arith.constant 0 : index
    %c3 = arith.constant 3 : index
    %c0_47 = arith.constant 0 : index
    %c0_48 = arith.constant 0 : index
    %109 = vector.load %arg6[%c0_46, %c3, %c0_47, %c0_48] : memref<1x4x24x24xf32, #tpu.memory_space<vmem>>, vector<1x1x24x24xf32>
    %110 = vector.shape_cast %109 : vector<1x1x24x24xf32> to vector<24x24xf32>
    %111 = arith.addf %108, %110 : vector<24x24xf32>
    %cst_49 = arith.constant dense<0xFF800000> : vector<24xf32>
    %112 = vector.multi_reduction <maximumf>, %111, %cst_49 [1] : vector<24x24xf32> to vector<24xf32>
    %113 = vector.shape_cast %112 : vector<24xf32> to vector<24x1xf32>
    %114 = vector.broadcast %113 : vector<24x1xf32> to vector<24x24xf32>
    %115 = arith.subf %111, %114 : vector<24x24xf32>
    %116 = math.exp %115 : vector<24x24xf32>
    %cst_50 = arith.constant dense<0.000000e+00> : vector<24xf32>
    %117 = vector.multi_reduction <add>, %116, %cst_50 [1] : vector<24x24xf32> to vector<24xf32>
    %118 = vector.shape_cast %117 : vector<24xf32> to vector<24x1xf32>
    %119 = tpu.reciprocal %118 {approx = true} : vector<24x1xf32> -> vector<24x1xf32>
    %120 = vector.broadcast %119 : vector<24x1xf32> to vector<24x24xf32>
    %121 = arith.mulf %116, %120 : vector<24x24xf32>
    %cst_51 = arith.constant dense<0.000000e+00> : vector<24x8xf32>
    %122 = tpu.matmul %121, %105, %cst_51 {dimension_numbers = #tpu.dot_dimension_numbers<[1], [0], [0], [1], [0, 0, 1, 1], [], []>} : vector<24x24xf32>, vector<24x8xf32>, vector<24x8xf32> -> vector<24x8xf32>
    %123 = tpu.concatenate %62, %82, %102, %122 in 1 : vector<24x8xf32>, vector<24x8xf32>, vector<24x8xf32>, vector<24x8xf32> -> vector<24x32xf32>
    %124 = vector.extract_strided_slice %37 {offsets = [24, 0], sizes = [24, 32], strides = [1, 1]} : vector<48x32xf32> to vector<24x32xf32>
    %125 = vector.extract_strided_slice %38 {offsets = [24, 0], sizes = [24, 32], strides = [1, 1]} : vector<48x32xf32> to vector<24x32xf32>
    %126 = vector.extract_strided_slice %39 {offsets = [24, 0], sizes = [24, 32], strides = [1, 1]} : vector<48x32xf32> to vector<24x32xf32>
    %127 = vector.extract_strided_slice %124 {offsets = [0, 0], sizes = [24, 8], strides = [1, 1]} : vector<24x32xf32> to vector<24x8xf32>
    %128 = vector.extract_strided_slice %125 {offsets = [0, 0], sizes = [24, 8], strides = [1, 1]} : vector<24x32xf32> to vector<24x8xf32>
    %129 = vector.extract_strided_slice %126 {offsets = [0, 0], sizes = [24, 8], strides = [1, 1]} : vector<24x32xf32> to vector<24x8xf32>
    %cst_52 = arith.constant dense<0.000000e+00> : vector<24x24xf32>
    %130 = tpu.matmul %127, %128, %cst_52 {dimension_numbers = #tpu.dot_dimension_numbers<[1], [1], [0], [0], [0, 0, 1, 0], [], []>} : vector<24x8xf32>, vector<24x8xf32>, vector<24x24xf32> -> vector<24x24xf32>
    %cst_53 = arith.constant 0.353553385 : f32
    %131 = vector.broadcast %cst_53 : f32 to vector<24x24xf32>
    %132 = arith.mulf %130, %131 : vector<24x24xf32>
    %c0_54 = arith.constant 0 : index
    %c0_55 = arith.constant 0 : index
    %c0_56 = arith.constant 0 : index
    %c0_57 = arith.constant 0 : index
    %133 = vector.load %arg6[%c0_54, %c0_55, %c0_56, %c0_57] : memref<1x4x24x24xf32, #tpu.memory_space<vmem>>, vector<1x1x24x24xf32>
    %134 = vector.shape_cast %133 : vector<1x1x24x24xf32> to vector<24x24xf32>
    %135 = arith.addf %132, %134 : vector<24x24xf32>
    %cst_58 = arith.constant dense<0xFF800000> : vector<24xf32>
    %136 = vector.multi_reduction <maximumf>, %135, %cst_58 [1] : vector<24x24xf32> to vector<24xf32>
    %137 = vector.shape_cast %136 : vector<24xf32> to vector<24x1xf32>
    %138 = vector.broadcast %137 : vector<24x1xf32> to vector<24x24xf32>
    %139 = arith.subf %135, %138 : vector<24x24xf32>
    %140 = math.exp %139 : vector<24x24xf32>
    %cst_59 = arith.constant dense<0.000000e+00> : vector<24xf32>
    %141 = vector.multi_reduction <add>, %140, %cst_59 [1] : vector<24x24xf32> to vector<24xf32>
    %142 = vector.shape_cast %141 : vector<24xf32> to vector<24x1xf32>
    %143 = tpu.reciprocal %142 {approx = true} : vector<24x1xf32> -> vector<24x1xf32>
    %144 = vector.broadcast %143 : vector<24x1xf32> to vector<24x24xf32>
    %145 = arith.mulf %140, %144 : vector<24x24xf32>
    %cst_60 = arith.constant dense<0.000000e+00> : vector<24x8xf32>
    %146 = tpu.matmul %145, %129, %cst_60 {dimension_numbers = #tpu.dot_dimension_numbers<[1], [0], [0], [1], [0, 0, 1, 1], [], []>} : vector<24x24xf32>, vector<24x8xf32>, vector<24x8xf32> -> vector<24x8xf32>
    %147 = vector.extract_strided_slice %124 {offsets = [0, 8], sizes = [24, 8], strides = [1, 1]} : vector<24x32xf32> to vector<24x8xf32>
    %148 = vector.extract_strided_slice %125 {offsets = [0, 8], sizes = [24, 8], strides = [1, 1]} : vector<24x32xf32> to vector<24x8xf32>
    %149 = vector.extract_strided_slice %126 {offsets = [0, 8], sizes = [24, 8], strides = [1, 1]} : vector<24x32xf32> to vector<24x8xf32>
    %cst_61 = arith.constant dense<0.000000e+00> : vector<24x24xf32>
    %150 = tpu.matmul %147, %148, %cst_61 {dimension_numbers = #tpu.dot_dimension_numbers<[1], [1], [0], [0], [0, 0, 1, 0], [], []>} : vector<24x8xf32>, vector<24x8xf32>, vector<24x24xf32> -> vector<24x24xf32>
    %cst_62 = arith.constant 0.353553385 : f32
    %151 = vector.broadcast %cst_62 : f32 to vector<24x24xf32>
    %152 = arith.mulf %150, %151 : vector<24x24xf32>
    %c0_63 = arith.constant 0 : index
    %c1_64 = arith.constant 1 : index
    %c0_65 = arith.constant 0 : index
    %c0_66 = arith.constant 0 : index
    %153 = vector.load %arg6[%c0_63, %c1_64, %c0_65, %c0_66] : memref<1x4x24x24xf32, #tpu.memory_space<vmem>>, vector<1x1x24x24xf32>
    %154 = vector.shape_cast %153 : vector<1x1x24x24xf32> to vector<24x24xf32>
    %155 = arith.addf %152, %154 : vector<24x24xf32>
    %cst_67 = arith.constant dense<0xFF800000> : vector<24xf32>
    %156 = vector.multi_reduction <maximumf>, %155, %cst_67 [1] : vector<24x24xf32> to vector<24xf32>
    %157 = vector.shape_cast %156 : vector<24xf32> to vector<24x1xf32>
    %158 = vector.broadcast %157 : vector<24x1xf32> to vector<24x24xf32>
    %159 = arith.subf %155, %158 : vector<24x24xf32>
    %160 = math.exp %159 : vector<24x24xf32>
    %cst_68 = arith.constant dense<0.000000e+00> : vector<24xf32>
    %161 = vector.multi_reduction <add>, %160, %cst_68 [1] : vector<24x24xf32> to vector<24xf32>
    %162 = vector.shape_cast %161 : vector<24xf32> to vector<24x1xf32>
    %163 = tpu.reciprocal %162 {approx = true} : vector<24x1xf32> -> vector<24x1xf32>
    %164 = vector.broadcast %163 : vector<24x1xf32> to vector<24x24xf32>
    %165 = arith.mulf %160, %164 : vector<24x24xf32>
    %cst_69 = arith.constant dense<0.000000e+00> : vector<24x8xf32>
    %166 = tpu.matmul %165, %149, %cst_69 {dimension_numbers = #tpu.dot_dimension_numbers<[1], [0], [0], [1], [0, 0, 1, 1], [], []>} : vector<24x24xf32>, vector<24x8xf32>, vector<24x8xf32> -> vector<24x8xf32>
    %167 = vector.extract_strided_slice %124 {offsets = [0, 16], sizes = [24, 8], strides = [1, 1]} : vector<24x32xf32> to vector<24x8xf32>
    %168 = vector.extract_strided_slice %125 {offsets = [0, 16], sizes = [24, 8], strides = [1, 1]} : vector<24x32xf32> to vector<24x8xf32>
    %169 = vector.extract_strided_slice %126 {offsets = [0, 16], sizes = [24, 8], strides = [1, 1]} : vector<24x32xf32> to vector<24x8xf32>
    %cst_70 = arith.constant dense<0.000000e+00> : vector<24x24xf32>
    %170 = tpu.matmul %167, %168, %cst_70 {dimension_numbers = #tpu.dot_dimension_numbers<[1], [1], [0], [0], [0, 0, 1, 0], [], []>} : vector<24x8xf32>, vector<24x8xf32>, vector<24x24xf32> -> vector<24x24xf32>
    %cst_71 = arith.constant 0.353553385 : f32
    %171 = vector.broadcast %cst_71 : f32 to vector<24x24xf32>
    %172 = arith.mulf %170, %171 : vector<24x24xf32>
    %c0_72 = arith.constant 0 : index
    %c2_73 = arith.constant 2 : index
    %c0_74 = arith.constant 0 : index
    %c0_75 = arith.constant 0 : index
    %173 = vector.load %arg6[%c0_72, %c2_73, %c0_74, %c0_75] : memref<1x4x24x24xf32, #tpu.memory_space<vmem>>, vector<1x1x24x24xf32>
    %174 = vector.shape_cast %173 : vector<1x1x24x24xf32> to vector<24x24xf32>
    %175 = arith.addf %172, %174 : vector<24x24xf32>
    %cst_76 = arith.constant dense<0xFF800000> : vector<24xf32>
    %176 = vector.multi_reduction <maximumf>, %175, %cst_76 [1] : vector<24x24xf32> to vector<24xf32>
    %177 = vector.shape_cast %176 : vector<24xf32> to vector<24x1xf32>
    %178 = vector.broadcast %177 : vector<24x1xf32> to vector<24x24xf32>
    %179 = arith.subf %175, %178 : vector<24x24xf32>
    %180 = math.exp %179 : vector<24x24xf32>
    %cst_77 = arith.constant dense<0.000000e+00> : vector<24xf32>
    %181 = vector.multi_reduction <add>, %180, %cst_77 [1] : vector<24x24xf32> to vector<24xf32>
    %182 = vector.shape_cast %181 : vector<24xf32> to vector<24x1xf32>
    %183 = tpu.reciprocal %182 {approx = true} : vector<24x1xf32> -> vector<24x1xf32>
    %184 = vector.broadcast %183 : vector<24x1xf32> to vector<24x24xf32>
    %185 = arith.mulf %180, %184 : vector<24x24xf32>
    %cst_78 = arith.constant dense<0.000000e+00> : vector<24x8xf32>
    %186 = tpu.matmul %185, %169, %cst_78 {dimension_numbers = #tpu.dot_dimension_numbers<[1], [0], [0], [1], [0, 0, 1, 1], [], []>} : vector<24x24xf32>, vector<24x8xf32>, vector<24x8xf32> -> vector<24x8xf32>
    %187 = vector.extract_strided_slice %124 {offsets = [0, 24], sizes = [24, 8], strides = [1, 1]} : vector<24x32xf32> to vector<24x8xf32>
    %188 = vector.extract_strided_slice %125 {offsets = [0, 24], sizes = [24, 8], strides = [1, 1]} : vector<24x32xf32> to vector<24x8xf32>
    %189 = vector.extract_strided_slice %126 {offsets = [0, 24], sizes = [24, 8], strides = [1, 1]} : vector<24x32xf32> to vector<24x8xf32>
    %cst_79 = arith.constant dense<0.000000e+00> : vector<24x24xf32>
    %190 = tpu.matmul %187, %188, %cst_79 {dimension_numbers = #tpu.dot_dimension_numbers<[1], [1], [0], [0], [0, 0, 1, 0], [], []>} : vector<24x8xf32>, vector<24x8xf32>, vector<24x24xf32> -> vector<24x24xf32>
    %cst_80 = arith.constant 0.353553385 : f32
    %191 = vector.broadcast %cst_80 : f32 to vector<24x24xf32>
    %192 = arith.mulf %190, %191 : vector<24x24xf32>
    %c0_81 = arith.constant 0 : index
    %c3_82 = arith.constant 3 : index
    %c0_83 = arith.constant 0 : index
    %c0_84 = arith.constant 0 : index
    %193 = vector.load %arg6[%c0_81, %c3_82, %c0_83, %c0_84] : memref<1x4x24x24xf32, #tpu.memory_space<vmem>>, vector<1x1x24x24xf32>
    %194 = vector.shape_cast %193 : vector<1x1x24x24xf32> to vector<24x24xf32>
    %195 = arith.addf %192, %194 : vector<24x24xf32>
    %cst_85 = arith.constant dense<0xFF800000> : vector<24xf32>
    %196 = vector.multi_reduction <maximumf>, %195, %cst_85 [1] : vector<24x24xf32> to vector<24xf32>
    %197 = vector.shape_cast %196 : vector<24xf32> to vector<24x1xf32>
    %198 = vector.broadcast %197 : vector<24x1xf32> to vector<24x24xf32>
    %199 = arith.subf %195, %198 : vector<24x24xf32>
    %200 = math.exp %199 : vector<24x24xf32>
    %cst_86 = arith.constant dense<0.000000e+00> : vector<24xf32>
    %201 = vector.multi_reduction <add>, %200, %cst_86 [1] : vector<24x24xf32> to vector<24xf32>
    %202 = vector.shape_cast %201 : vector<24xf32> to vector<24x1xf32>
    %203 = tpu.reciprocal %202 {approx = true} : vector<24x1xf32> -> vector<24x1xf32>
    %204 = vector.broadcast %203 : vector<24x1xf32> to vector<24x24xf32>
    %205 = arith.mulf %200, %204 : vector<24x24xf32>
    %cst_87 = arith.constant dense<0.000000e+00> : vector<24x8xf32>
    %206 = tpu.matmul %205, %189, %cst_87 {dimension_numbers = #tpu.dot_dimension_numbers<[1], [0], [0], [1], [0, 0, 1, 1], [], []>} : vector<24x24xf32>, vector<24x8xf32>, vector<24x8xf32> -> vector<24x8xf32>
    %207 = tpu.concatenate %146, %166, %186, %206 in 1 : vector<24x8xf32>, vector<24x8xf32>, vector<24x8xf32>, vector<24x8xf32> -> vector<24x32xf32>
    %208 = tpu.concatenate %123, %207 in 0 : vector<24x32xf32>, vector<24x32xf32> -> vector<48x32xf32>
    %c0_88 = arith.constant 0 : index
    %c0_89 = arith.constant 0 : index
    %c0_90 = arith.constant 0 : index
    %209 = vector.load %arg7[%c0_88, %c0_89, %c0_90] : memref<1x32x32xf32, #tpu.memory_space<vmem>>, vector<1x32x32xf32>
    %210 = vector.shape_cast %209 : vector<1x32x32xf32> to vector<32x32xf32>
    %cst_91 = arith.constant dense<0.000000e+00> : vector<48x32xf32>
    %211 = tpu.matmul %208, %210, %cst_91 {dimension_numbers = #tpu.dot_dimension_numbers<[1], [0], [0], [1], [0, 0, 1, 1], [], []>} : vector<48x32xf32>, vector<32x32xf32>, vector<48x32xf32> -> vector<48x32xf32>
    %c0_92 = arith.constant 0 : index
    %c0_93 = arith.constant 0 : index
    %c0_94 = arith.constant 0 : index
    %212 = vector.load %arg8[%c0_92, %c0_93, %c0_94] : memref<1x1x32xf32, #tpu.memory_space<vmem>>, vector<1x1x32xf32>
    %213 = vector.shape_cast %212 : vector<1x1x32xf32> to vector<1x32xf32>
    %214 = vector.broadcast %213 : vector<1x32xf32> to vector<48x32xf32>
    %215 = arith.addf %211, %214 : vector<48x32xf32>
    %c0_95 = arith.constant 0 : index
    %c0_96 = arith.constant 0 : index
    %c0_97 = arith.constant 0 : index
    %216 = vector.load %arg9[%c0_95, %c0_96, %c0_97] : memref<1x1x32xf32, #tpu.memory_space<vmem>>, vector<1x1x32xf32>
    %217 = vector.shape_cast %216 : vector<1x1x32xf32> to vector<1x32xf32>
    %218 = vector.broadcast %217 : vector<1x32xf32> to vector<48x32xf32>
    %219 = arith.mulf %218, %215 : vector<48x32xf32>
    %220 = arith.addf %3, %219 : vector<48x32xf32>
    %c0_98 = arith.constant 0 : index
    %c0_99 = arith.constant 0 : index
    %c0_100 = arith.constant 0 : index
    %221 = vector.load %arg10[%c0_98, %c0_99, %c0_100] : memref<1x1x32xf32, #tpu.memory_space<vmem>>, vector<1x1x32xf32>
    %222 = vector.shape_cast %221 : vector<1x1x32xf32> to vector<1x32xf32>
    %c0_101 = arith.constant 0 : index
    %c0_102 = arith.constant 0 : index
    %c0_103 = arith.constant 0 : index
    %223 = vector.load %arg11[%c0_101, %c0_102, %c0_103] : memref<1x1x32xf32, #tpu.memory_space<vmem>>, vector<1x1x32xf32>
    %224 = vector.shape_cast %223 : vector<1x1x32xf32> to vector<1x32xf32>
    %cst_104 = arith.constant dense<0.000000e+00> : vector<48xf32>
    %225 = vector.multi_reduction <add>, %220, %cst_104 [1] : vector<48x32xf32> to vector<48xf32>
    %226 = vector.shape_cast %225 : vector<48xf32> to vector<48x1xf32>
    %cst_105 = arith.constant 3.200000e+01 : f32
    %227 = vector.broadcast %cst_105 : f32 to vector<48x1xf32>
    %228 = arith.divf %226, %227 : vector<48x1xf32>
    %229 = vector.broadcast %228 : vector<48x1xf32> to vector<48x32xf32>
    %230 = arith.subf %220, %229 : vector<48x32xf32>
    %231 = arith.mulf %230, %230 : vector<48x32xf32>
    %cst_106 = arith.constant dense<0.000000e+00> : vector<48xf32>
    %232 = vector.multi_reduction <add>, %231, %cst_106 [1] : vector<48x32xf32> to vector<48xf32>
    %233 = vector.shape_cast %232 : vector<48xf32> to vector<48x1xf32>
    %cst_107 = arith.constant 3.200000e+01 : f32
    %234 = vector.broadcast %cst_107 : f32 to vector<48x1xf32>
    %235 = arith.divf %233, %234 : vector<48x1xf32>
    %236 = vector.broadcast %228 : vector<48x1xf32> to vector<48x32xf32>
    %237 = arith.subf %220, %236 : vector<48x32xf32>
    %cst_108 = arith.constant 9.99999996E-13 : f32
    %238 = vector.broadcast %cst_108 : f32 to vector<48x1xf32>
    %239 = arith.addf %235, %238 : vector<48x1xf32>
    %240 = math.rsqrt %239 : vector<48x1xf32>
    %241 = vector.broadcast %240 : vector<48x1xf32> to vector<48x32xf32>
    %242 = arith.mulf %237, %241 : vector<48x32xf32>
    %243 = vector.broadcast %222 : vector<1x32xf32> to vector<48x32xf32>
    %244 = arith.mulf %242, %243 : vector<48x32xf32>
    %245 = vector.broadcast %224 : vector<1x32xf32> to vector<48x32xf32>
    %246 = arith.addf %244, %245 : vector<48x32xf32>
    %c0_109 = arith.constant 0 : index
    %c0_110 = arith.constant 0 : index
    %c0_111 = arith.constant 0 : index
    %247 = vector.load %arg12[%c0_109, %c0_110, %c0_111] : memref<1x32x64xf32, #tpu.memory_space<vmem>>, vector<1x32x64xf32>
    %248 = vector.shape_cast %247 : vector<1x32x64xf32> to vector<32x64xf32>
    %cst_112 = arith.constant dense<0.000000e+00> : vector<48x64xf32>
    %249 = tpu.matmul %246, %248, %cst_112 {dimension_numbers = #tpu.dot_dimension_numbers<[1], [0], [0], [1], [0, 0, 1, 1], [], []>} : vector<48x32xf32>, vector<32x64xf32>, vector<48x64xf32> -> vector<48x64xf32>
    %c0_113 = arith.constant 0 : index
    %c0_114 = arith.constant 0 : index
    %c0_115 = arith.constant 0 : index
    %250 = vector.load %arg13[%c0_113, %c0_114, %c0_115] : memref<1x1x64xf32, #tpu.memory_space<vmem>>, vector<1x1x64xf32>
    %251 = vector.shape_cast %250 : vector<1x1x64xf32> to vector<1x64xf32>
    %252 = vector.broadcast %251 : vector<1x64xf32> to vector<48x64xf32>
    %253 = arith.addf %249, %252 : vector<48x64xf32>
    %cst_116 = arith.constant 5.000000e-01 : f32
    %254 = vector.broadcast %cst_116 : f32 to vector<48x64xf32>
    %255 = arith.mulf %254, %253 : vector<48x64xf32>
    %cst_117 = arith.constant 4.471500e-02 : f32
    %256 = vector.broadcast %cst_117 : f32 to vector<48x64xf32>
    %257 = arith.mulf %256, %253 : vector<48x64xf32>
    %258 = arith.mulf %257, %253 : vector<48x64xf32>
    %259 = arith.mulf %258, %253 : vector<48x64xf32>
    %260 = arith.addf %253, %259 : vector<48x64xf32>
    %cst_118 = arith.constant 0.797884583 : f32
    %261 = vector.broadcast %cst_118 : f32 to vector<48x64xf32>
    %262 = arith.mulf %261, %260 : vector<48x64xf32>
    %263 = math.tanh %262 : vector<48x64xf32>
    %cst_119 = arith.constant 1.000000e+00 : f32
    %264 = vector.broadcast %cst_119 : f32 to vector<48x64xf32>
    %265 = arith.addf %264, %263 : vector<48x64xf32>
    %266 = arith.mulf %255, %265 : vector<48x64xf32>
    %c0_120 = arith.constant 0 : index
    %c0_121 = arith.constant 0 : index
    %c0_122 = arith.constant 0 : index
    %267 = vector.load %arg14[%c0_120, %c0_121, %c0_122] : memref<1x64x32xf32, #tpu.memory_space<vmem>>, vector<1x64x32xf32>
    %268 = vector.shape_cast %267 : vector<1x64x32xf32> to vector<64x32xf32>
    %cst_123 = arith.constant dense<0.000000e+00> : vector<48x32xf32>
    %269 = tpu.matmul %266, %268, %cst_123 {dimension_numbers = #tpu.dot_dimension_numbers<[1], [0], [0], [1], [0, 0, 1, 1], [], []>} : vector<48x64xf32>, vector<64x32xf32>, vector<48x32xf32> -> vector<48x32xf32>
    %c0_124 = arith.constant 0 : index
    %c0_125 = arith.constant 0 : index
    %c0_126 = arith.constant 0 : index
    %270 = vector.load %arg15[%c0_124, %c0_125, %c0_126] : memref<1x1x32xf32, #tpu.memory_space<vmem>>, vector<1x1x32xf32>
    %271 = vector.shape_cast %270 : vector<1x1x32xf32> to vector<1x32xf32>
    %272 = vector.broadcast %271 : vector<1x32xf32> to vector<48x32xf32>
    %273 = arith.addf %269, %272 : vector<48x32xf32>
    %c0_127 = arith.constant 0 : index
    %c0_128 = arith.constant 0 : index
    %c0_129 = arith.constant 0 : index
    %274 = vector.load %arg16[%c0_127, %c0_128, %c0_129] : memref<1x1x32xf32, #tpu.memory_space<vmem>>, vector<1x1x32xf32>
    %275 = vector.shape_cast %274 : vector<1x1x32xf32> to vector<1x32xf32>
    %276 = vector.broadcast %275 : vector<1x32xf32> to vector<48x32xf32>
    %277 = arith.mulf %276, %273 : vector<48x32xf32>
    %278 = arith.addf %220, %277 : vector<48x32xf32>
    %c0_130 = arith.constant 0 : index
    %c0_131 = arith.constant 0 : index
    %279 = vector.load %arg20[%c0_130, %c0_131] : memref<48x32xf32, #tpu.memory_space<vmem>>, vector<48x32xf32>
    tpu.vector_store %arg20[%c0_130, %c0_131], %278 {strides = array<i32>} : memref<48x32xf32, #tpu.memory_space<vmem>>, vector<48x32xf32>,
    %c1_i32 = arith.constant 1 : i32
    %280 = arith.cmpi eq, %arg0, %c1_i32 : i32
    %281 = arith.extui %280 : i1 to i32
    %c0_i32_132 = arith.constant 0 : i32
    %282 = arith.cmpi ne, %281, %c0_i32_132 : i32
    scf.if %282 {
      %283 = vector.extract_strided_slice %278 {offsets = [0, 0], sizes = [1, 32], strides = [1, 1]} : vector<48x32xf32> to vector<1x32xf32>
      %284 = vector.extract_strided_slice %278 {offsets = [24, 0], sizes = [1, 32], strides = [1, 1]} : vector<48x32xf32> to vector<1x32xf32>
      %285 = tpu.concatenate %283, %284 in 0 : vector<1x32xf32>, vector<1x32xf32> -> vector<2x32xf32>
      %c0_133 = arith.constant 0 : index
      %c0_134 = arith.constant 0 : index
      %286 = vector.load %arg17[%c0_133, %c0_134] : memref<32x128xf32, #tpu.memory_space<vmem>>, vector<32x128xf32>
      %cst_135 = arith.constant dense<0.000000e+00> : vector<2x128xf32>
      %287 = tpu.matmul %285, %286, %cst_135 {dimension_numbers = #tpu.dot_dimension_numbers<[1], [0], [0], [1], [0, 0, 1, 1], [], []>} : vector<2x32xf32>, vector<32x128xf32>, vector<2x128xf32> -> vector<2x128xf32>
      %c0_136 = arith.constant 0 : index
      %c0_137 = arith.constant 0 : index
      %288 = vector.load %arg18[%c0_136, %c0_137] : memref<1x128xf32, #tpu.memory_space<vmem>>, vector<1x128xf32>
      %289 = vector.broadcast %288 : vector<1x128xf32> to vector<2x128xf32>
      %290 = arith.addf %287, %289 : vector<2x128xf32>
      %cst_138 = arith.constant 0.000000e+00 : f32
      %291 = vector.broadcast %cst_138 : f32 to vector<6x128xf32>
      %292 = tpu.concatenate %290, %291 in 0 : vector<2x128xf32>, vector<6x128xf32> -> vector<8x128xf32>
      %c0_139 = arith.constant 0 : index
      %c0_140 = arith.constant 0 : index
      %293 = vector.load %arg19[%c0_139, %c0_140] : memref<8x128xf32, #tpu.memory_space<vmem>>, vector<8x128xf32>
      tpu.vector_store %arg19[%c0_139, %c0_140], %292 {strides = array<i32>} : memref<8x128xf32, #tpu.memory_space<vmem>>, vector<8x128xf32>,
    } else {
    }
    return
  }
  func.func @transform_0(%arg0: i32) -> (i32, i32) {
    %c0_i32 = arith.constant 0 : i32
    %c0_i32_0 = arith.constant 0 : i32
    %c0_i32_1 = arith.constant 0 : i32
    return %c0_i32, %c0_i32_0 : i32, i32
  }
  func.func @transform_1(%arg0: i32) -> (i32, i32, i32) {
    %c0_i32 = arith.constant 0 : i32
    %c0_i32_0 = arith.constant 0 : i32
    %c0_i32_1 = arith.constant 0 : i32
    return %arg0, %c0_i32, %c0_i32_0 : i32, i32, i32
  }
  func.func @transform_2(%arg0: i32) -> (i32, i32, i32) {
    %c0_i32 = arith.constant 0 : i32
    %c0_i32_0 = arith.constant 0 : i32
    %c0_i32_1 = arith.constant 0 : i32
    return %arg0, %c0_i32, %c0_i32_0 : i32, i32, i32
  }
  func.func @transform_3(%arg0: i32) -> (i32, i32, i32) {
    %c0_i32 = arith.constant 0 : i32
    %c0_i32_0 = arith.constant 0 : i32
    %c0_i32_1 = arith.constant 0 : i32
    return %arg0, %c0_i32, %c0_i32_0 : i32, i32, i32
  }
  func.func @transform_4(%arg0: i32) -> (i32, i32, i32) {
    %c0_i32 = arith.constant 0 : i32
    %c0_i32_0 = arith.constant 0 : i32
    %c0_i32_1 = arith.constant 0 : i32
    return %arg0, %c0_i32, %c0_i32_0 : i32, i32, i32
  }
  func.func @transform_5(%arg0: i32) -> (i32, i32, i32, i32) {
    %c0_i32 = arith.constant 0 : i32
    %c0_i32_0 = arith.constant 0 : i32
    %c0_i32_1 = arith.constant 0 : i32
    %c0_i32_2 = arith.constant 0 : i32
    return %arg0, %c0_i32, %c0_i32_0, %c0_i32_1 : i32, i32, i32, i32
  }
  func.func @transform_6(%arg0: i32) -> (i32, i32, i32) {
    %c0_i32 = arith.constant 0 : i32
    %c0_i32_0 = arith.constant 0 : i32
    %c0_i32_1 = arith.constant 0 : i32
    return %arg0, %c0_i32, %c0_i32_0 : i32, i32, i32
  }
  func.func @transform_7(%arg0: i32) -> (i32, i32, i32) {
    %c0_i32 = arith.constant 0 : i32
    %c0_i32_0 = arith.constant 0 : i32
    %c0_i32_1 = arith.constant 0 : i32
    return %arg0, %c0_i32, %c0_i32_0 : i32, i32, i32
  }
  func.func @transform_8(%arg0: i32) -> (i32, i32, i32) {
    %c0_i32 = arith.constant 0 : i32
    %c0_i32_0 = arith.constant 0 : i32
    %c0_i32_1 = arith.constant 0 : i32
    return %arg0, %c0_i32, %c0_i32_0 : i32, i32, i32
  }
  func.func @transform_9(%arg0: i32) -> (i32, i32, i32) {
    %c0_i32 = arith.constant 0 : i32
    %c0_i32_0 = arith.constant 0 : i32
    %c0_i32_1 = arith.constant 0 : i32
    return %arg0, %c0_i32, %c0_i32_0 : i32, i32, i32
  }
  func.func @transform_10(%arg0: i32) -> (i32, i32, i32) {
    %c0_i32 = arith.constant 0 : i32
    %c0_i32_0 = arith.constant 0 : i32
    %c0_i32_1 = arith.constant 0 : i32
    return %arg0, %c0_i32, %c0_i32_0 : i32, i32, i32
  }
  func.func @transform_11(%arg0: i32) -> (i32, i32, i32) {
    %c0_i32 = arith.constant 0 : i32
    %c0_i32_0 = arith.constant 0 : i32
    %c0_i32_1 = arith.constant 0 : i32
    return %arg0, %c0_i32, %c0_i32_0 : i32, i32, i32
  }
  func.func @transform_12(%arg0: i32) -> (i32, i32, i32) {
    %c0_i32 = arith.constant 0 : i32
    %c0_i32_0 = arith.constant 0 : i32
    %c0_i32_1 = arith.constant 0 : i32
    return %arg0, %c0_i32, %c0_i32_0 : i32, i32, i32
  }
  func.func @transform_13(%arg0: i32) -> (i32, i32, i32) {
    %c0_i32 = arith.constant 0 : i32
    %c0_i32_0 = arith.constant 0 : i32
    %c0_i32_1 = arith.constant 0 : i32
    return %arg0, %c0_i32, %c0_i32_0 : i32, i32, i32
  }
  func.func @transform_14(%arg0: i32) -> (i32, i32, i32) {
    %c0_i32 = arith.constant 0 : i32
    %c0_i32_0 = arith.constant 0 : i32
    %c0_i32_1 = arith.constant 0 : i32
    return %arg0, %c0_i32, %c0_i32_0 : i32, i32, i32
  }
  func.func @transform_15(%arg0: i32) -> (i32, i32, i32) {
    %c0_i32 = arith.constant 0 : i32
    %c0_i32_0 = arith.constant 0 : i32
    %c0_i32_1 = arith.constant 0 : i32
    return %arg0, %c0_i32, %c0_i32_0 : i32, i32, i32
  }
  func.func @transform_16(%arg0: i32) -> (i32, i32) {
    %c0_i32 = arith.constant 0 : i32
    %c0_i32_0 = arith.constant 0 : i32
    %c0_i32_1 = arith.constant 0 : i32
    return %c0_i32, %c0_i32_0 : i32, i32
  }
  func.func @transform_17(%arg0: i32) -> (i32, i32) {
    %c0_i32 = arith.constant 0 : i32
    %c0_i32_0 = arith.constant 0 : i32
    %c0_i32_1 = arith.constant 0 : i32
    return %c0_i32, %c0_i32_0 : i32, i32
  }
  func.func @transform_18(%arg0: i32) -> (i32, i32) {
    %c0_i32 = arith.constant 0 : i32
    %c0_i32_0 = arith.constant 0 : i32
    %c0_i32_1 = arith.constant 0 : i32
    return %c0_i32, %c0_i32_0 : i32, i32
  }
}

</mosaic_0001>

<llo_original>
// kernel: nlp_beit_forward.1
$region0: #{nlp_beit_forward.1}
  #allocation0 [shape = 'u32[]', space=smem, size = 0x4, offset = 0x4, fixed_abs, tag = 'smem constant byte address 0x4 - core index']
  #allocation1 [shape = 'u32[144,128]{1,0:T(1,128)}', space=vmem, size = 0x12000, scoped, tag = 'internal scratch']
  #allocation2 [shape = 'f32[48,32]{1,0:T(8,128)}', space=vmem, size = 0x6000, scoped, tag = 'scratch operand']
  %s0 = inlined_call_operand.vmem [shape: f32[48,32], index: 0, kind: input, shape index: {}]
  %s1 = inlined_call_operand.vmem [shape: f32[2,1,32], index: 1, kind: input, shape index: {}]
  %s2 = inlined_call_operand.hbm [shape: f32[2,1,32], index: 2, kind: input, shape index: {}]
  %s3 = inlined_call_operand.vmem [shape: f32[2,32,96], index: 3, kind: input, shape index: {}]
  %s4 = inlined_call_operand.hbm [shape: f32[2,1,96], index: 4, kind: input, shape index: {}]
  %s5 = inlined_call_operand.vmem [shape: f32[2,4,24,24], index: 5, kind: input, shape index: {}]
  %s6 = inlined_call_operand.vmem [shape: f32[2,32,32], index: 6, kind: input, shape index: {}]
  %s7 = inlined_call_operand.hbm [shape: f32[2,1,32], index: 7, kind: input, shape index: {}]
  %s8 = inlined_call_operand.hbm [shape: f32[2,1,32], index: 8, kind: input, shape index: {}]
  %s9 = inlined_call_operand.vmem [shape: f32[2,1,32], index: 9, kind: input, shape index: {}]
  %s10 = inlined_call_operand.hbm [shape: f32[2,1,32], index: 10, kind: input, shape index: {}]
  %s11 = inlined_call_operand.hbm [shape: f32[2,32,64], index: 11, kind: input, shape index: {}]
  %s12 = inlined_call_operand.hbm [shape: f32[2,1,64], index: 12, kind: input, shape index: {}]
  %s13 = inlined_call_operand.vmem [shape: f32[2,64,32], index: 13, kind: input, shape index: {}]
  %s14 = inlined_call_operand.hbm [shape: f32[2,1,32], index: 14, kind: input, shape index: {}]
  %s15 = inlined_call_operand.hbm [shape: f32[2,1,32], index: 15, kind: input, shape index: {}]
  %s16 = inlined_call_operand.hbm [shape: f32[32,128], index: 16, kind: input, shape index: {}]
  %s17 = inlined_call_operand.vmem [shape: f32[1,128], index: 17, kind: input, shape index: {}]
  %s18 = inlined_call_operand.vmem [shape: f32[8,128], index: 18, kind: output, shape index: {}]
  %s19 = sld [smem:[#allocation0]]
  $region153: #{nlp_beit_forward.1} parent=0
    _
  %s21 = ssub.s32 1, %s19
  %s22 = scalar_select 0, %s21, %s19
  $region1: #{nlp_beit_forward.1} parent=0
    #allocation3 [shape = 'u8[1024]{0}', space=vmem, size = 0x400, scoped, tag = 'input window, operand 2']
    #allocation4 [shape = 's32[2]{0}', space=sflag, size = 0x8, scoped, tag = 'scoped memory for nlp_beit_forward.1']
    #allocation5 [shape = 'u8[1024]{0}', space=vmem, size = 0x400, scoped, tag = 'input window, operand 4']
    #allocation6 [shape = 's32[2]{0}', space=sflag, size = 0x8, scoped, tag = 'scoped memory for nlp_beit_forward.1']
    #allocation7 [shape = 'u8[1024]{0}', space=vmem, size = 0x400, scoped, tag = 'input window, operand 7']
    #allocation8 [shape = 'u8[1024]{0}', space=vmem, size = 0x400, scoped, tag = 'input window, operand 8']
    #allocation9 [shape = 's32[2]{0}', space=sflag, size = 0x8, scoped, tag = 'scoped memory for nlp_beit_forward.1']
    #allocation10 [shape = 'u8[1024]{0}', space=vmem, size = 0x400, scoped, tag = 'input window, operand 10']
    #allocation11 [shape = 'u8[32768]{0}', space=vmem, size = 0x8000, scoped, tag = 'input window, operand 11']
    #allocation12 [shape = 's32[2]{0}', space=sflag, size = 0x8, scoped, tag = 'scoped memory for nlp_beit_forward.1']
    #allocation13 [shape = 'u8[1024]{0}', space=vmem, size = 0x400, scoped, tag = 'input window, operand 12']
    #allocation14 [shape = 'u8[1024]{0}', space=vmem, size = 0x400, scoped, tag = 'input window, operand 14']
    #allocation15 [shape = 's32[2]{0}', space=sflag, size = 0x8, scoped, tag = 'scoped memory for nlp_beit_forward.1']
    #allocation16 [shape = 'u8[1024]{0}', space=vmem, size = 0x400, scoped, tag = 'input window, operand 15']
    #allocation17 [shape = 'u8[16384]{0}', space=vmem, size = 0x4000, scoped, tag = 'input window, operand 16, single buffered']
    #allocation18 [shape = 's32[1]{0}', space=sflag, size = 0x4, scoped, tag = 'scoped memory for nlp_beit_forward.1']
    %23 = vsyncpa [#allocation4], 0
    %s24 = scalar_lea.sflag [#allocation4], 1
    %25 = vsyncpa %s24, 0
    %26 = vsyncpa [#allocation6], 0
    %s27 = scalar_lea.sflag [#allocation6], 1
    %28 = vsyncpa %s27, 0
    %29 = vsyncpa [#allocation9], 0
    %s30 = scalar_lea.sflag [#allocation9], 1
    %31 = vsyncpa %s30, 0
    %32 = vsyncpa [#allocation12], 0
    %s33 = scalar_lea.sflag [#allocation12], 1
    %34 = vsyncpa %s33, 0
    %35 = vsyncpa [#allocation15], 0
    %s36 = scalar_lea.sflag [#allocation15], 1
    %37 = vsyncpa %s36, 0
    %38 = vsyncpa [#allocation18], 0
    loop: start=0, step=1, limit=4
    $region2: #{nlp_beit_forward.1} parent=1 // loop_pre_header
      _
    $region3: #{nlp_beit_forward.1} parent=1 // loop_header
      %s40 = sphi 0, %s44
      %p41 = scmp.ge.s32.totalorder %s40, 4
      %s48 = sphi 0, %s48
      %s50 = sphi 0, %s48
      %s51 = sphi 0, %s50
      %s65 = sphi 0, %s51
      %s71 = sphi 0, %s73
      %s74 = sphi 0, %s71
      %s75 = sphi 0, %s74
      %s91 = sphi 0, %s75
      %s97 = sphi 0, %s99
      %s100 = sphi 0, %s97
      %s101 = sphi 0, %s100
      %s117 = sphi 0, %s101
      %s123 = sphi 0, %s125
      %s126 = sphi 0, %s123
      %s127 = sphi 0, %s126
      %s143 = sphi 0, %s127
      %s149 = sphi 0, %s151
      %s152 = sphi 0, %s149
      %s153 = sphi 0, %s152
      %s169 = sphi 0, %s153
      %s175 = sphi 0, %s177
      %s178 = sphi 0, %s175
      %s179 = sphi 0, %s178
      %s195 = sphi 0, %s179
      %s201 = sphi 0, %s203
      %s204 = sphi 0, %s201
      %s205 = sphi 0, %s204
      %s221 = sphi 0, %s205
      %s227 = sphi 0, %s229
      %s230 = sphi 0, %s227
      %s231 = sphi 0, %s230
      %s247 = sphi 0, %s231
      %s253 = sphi 0, %s255
      %s256 = sphi 0, %s253
      %s257 = sphi 0, %s256
      %s273 = sphi 0, %s257
      %s279 = sphi 0, %s281
      %s282 = sphi 0, %s279
      %s283 = sphi 0, %s282
      %s299 = sphi 0, %s283
      %s305 = sphi 0, %s307
      %s308 = sphi 0, %s305
      %s309 = sphi 0, %s308
      %s325 = sphi 0, %s309
      %s331 = sphi 0, %s333
      %s334 = sphi 0, %s331
      %s335 = sphi 0, %s334
      %s351 = sphi 0, %s335
      %s357 = sphi 0, %s359
      %s360 = sphi 0, %s357
      %s361 = sphi 0, %s360
      %s377 = sphi 0, %s361
      %s383 = sphi 0, %s385
      %s386 = sphi 0, %s383
      %s387 = sphi 0, %s386
      %s403 = sphi 0, %s387
      %s409 = sphi 0, %s411
      %s412 = sphi 0, %s409
      %s413 = sphi 0, %s412
      %s429 = sphi 0, %s413
      %s435 = sphi 0, %s437
      %s438 = sphi 0, %s435
      %s439 = sphi 0, %s438
      %s455 = sphi 0, %s439
      %s459 = sphi 0, %s459
      %s461 = sphi 0, %s459
      %s462 = sphi 0, %s461
      %s476 = sphi 0, %s462
      %s480 = sphi 0, %s480
      %s482 = sphi 0, %s480
      %s483 = sphi 0, %s482
      %s497 = sphi 0, %s483
      %s501 = sphi 0, %s501
      %s503 = sphi 0, %s501
      %s504 = sphi 0, %s503
      %s518 = sphi 0, %s504
    $region4: #{nlp_beit_forward.1} parent=1 // loop_header_branch
      %43 = sbr.rel (%p41) target = $region8
    $region5: #{nlp_beit_forward.1} parent=1 // loop_body
      %s45 = ssub.s32 %s40, 1
      %s46 = ssub.s32 %s40, 2
      %s47 = sadd.s32 %s40, 1
      %s49 = sadd.s32 %s48, 1
      %p52 = scmp.eq.s32.totalorder %s40, 1
      %p53 = scmp.ne.s32.totalorder %s48, %s50
      %p54 = scmp.eq.s32.totalorder %s40, 0
      %p55 = por %p53, %p54
      %p56 = scmp.ne.s32.totalorder %s48, %s50
      %p57 = scmp.eq.s32.totalorder %s45, 1
      %p58 = por %p56, %p57
      %p59 = scmp.ne.s32.totalorder %s50, %s51
      %p60 = scmp.eq.s32.totalorder %s45, 0
      %p61 = por %p59, %p60
      %p62 = scmp.ne.s32.totalorder %s50, %s51
      %p63 = scmp.eq.s32.totalorder %s46, 1
      %p64 = por %p62, %p63
      %p66 = scmp.ne.s32.totalorder %s51, %s65
      %p67 = scmp.eq.s32.totalorder %s46, 0
      %p68 = por %p66, %p67
      %s69 = ssub.s32 %s40, %s47
      %p70 = scmp.eq.s32.totalorder %s69, 0
      %s72 = sadd.s32 %s71, 1
      %s73 = scalar_select %p70, %s71, %s72
      %p76 = pneg %p70
      %p77 = scmp.eq.s32.totalorder %s40, 1
      %p78 = por %p76, %p77
      %p79 = scmp.ne.s32.totalorder %s71, %s74
      %p80 = scmp.eq.s32.totalorder %s40, 0
      %p81 = por %p79, %p80
      %p82 = scmp.ne.s32.totalorder %s71, %s74
      %p83 = scmp.eq.s32.totalorder %s45, 1
      %p84 = por %p82, %p83
      %p85 = scmp.ne.s32.totalorder %s74, %s75
      %p86 = scmp.eq.s32.totalorder %s45, 0
      %p87 = por %p85, %p86
      %p88 = scmp.ne.s32.totalorder %s74, %s75
      %p89 = scmp.eq.s32.totalorder %s46, 1
      %p90 = por %p88, %p89
      %p92 = scmp.ne.s32.totalorder %s75, %s91
      %p93 = scmp.eq.s32.totalorder %s46, 0
      %p94 = por %p92, %p93
      %s95 = ssub.s32 %s40, %s47
      %p96 = scmp.eq.s32.totalorder %s95, 0
      %s98 = sadd.s32 %s97, 1
      %s99 = scalar_select %p96, %s97, %s98
      %p102 = pneg %p96
      %p103 = scmp.eq.s32.totalorder %s40, 1
      %p104 = por %p102, %p103
      %p105 = scmp.ne.s32.totalorder %s97, %s100
      %p106 = scmp.eq.s32.totalorder %s40, 0
      %p107 = por %p105, %p106
      %p108 = scmp.ne.s32.totalorder %s97, %s100
      %p109 = scmp.eq.s32.totalorder %s45, 1
      %p110 = por %p108, %p109
      %p111 = scmp.ne.s32.totalorder %s100, %s101
      %p112 = scmp.eq.s32.totalorder %s45, 0
      %p113 = por %p111, %p112
      %p114 = scmp.ne.s32.totalorder %s100, %s101
      %p115 = scmp.eq.s32.totalorder %s46, 1
      %p116 = por %p114, %p115
      %p118 = scmp.ne.s32.totalorder %s101, %s117
      %p119 = scmp.eq.s32.totalorder %s46, 0
      %p120 = por %p118, %p119
      %s121 = ssub.s32 %s40, %s47
      %p122 = scmp.eq.s32.totalorder %s121, 0
      %s124 = sadd.s32 %s123, 1
      %s125 = scalar_select %p122, %s123, %s124
      %p128 = pneg %p122
      %p129 = scmp.eq.s32.totalorder %s40, 1
      %p130 = por %p128, %p129
      %p131 = scmp.ne.s32.totalorder %s123, %s126
      %p132 = scmp.eq.s32.totalorder %s40, 0
      %p133 = por %p131, %p132
      %p134 = scmp.ne.s32.totalorder %s123, %s126
      %p135 = scmp.eq.s32.totalorder %s45, 1
      %p136 = por %p134, %p135
      %p137 = scmp.ne.s32.totalorder %s126, %s127
      %p138 = scmp.eq.s32.totalorder %s45, 0
      %p139 = por %p137, %p138
      %p140 = scmp.ne.s32.totalorder %s126, %s127
      %p141 = scmp.eq.s32.totalorder %s46, 1
      %p142 = por %p140, %p141
      %p144 = scmp.ne.s32.totalorder %s127, %s143
      %p145 = scmp.eq.s32.totalorder %s46, 0
      %p146 = por %p144, %p145
      %s147 = ssub.s32 %s40, %s47
      %p148 = scmp.eq.s32.totalorder %s147, 0
      %s150 = sadd.s32 %s149, 1
      %s151 = scalar_select %p148, %s149, %s150
      %p154 = pneg %p148
      %p155 = scmp.eq.s32.totalorder %s40, 1
      %p156 = por %p154, %p155
      %p157 = scmp.ne.s32.totalorder %s149, %s152
      %p158 = scmp.eq.s32.totalorder %s40, 0
      %p159 = por %p157, %p158
      %p160 = scmp.ne.s32.totalorder %s149, %s152
      %p161 = scmp.eq.s32.totalorder %s45, 1
      %p162 = por %p160, %p161
      %p163 = scmp.ne.s32.totalorder %s152, %s153
      %p164 = scmp.eq.s32.totalorder %s45, 0
      %p165 = por %p163, %p164
      %p166 = scmp.ne.s32.totalorder %s152, %s153
      %p167 = scmp.eq.s32.totalorder %s46, 1
      %p168 = por %p166, %p167
      %p170 = scmp.ne.s32.totalorder %s153, %s169
      %p171 = scmp.eq.s32.totalorder %s46, 0
      %p172 = por %p170, %p171
      %s173 = ssub.s32 %s40, %s47
      %p174 = scmp.eq.s32.totalorder %s173, 0
      %s176 = sadd.s32 %s175, 1
      %s177 = scalar_select %p174, %s175, %s176
      %p180 = pneg %p174
      %p181 = scmp.eq.s32.totalorder %s40, 1
      %p182 = por %p180, %p181
      %p183 = scmp.ne.s32.totalorder %s175, %s178
      %p184 = scmp.eq.s32.totalorder %s40, 0
      %p185 = por %p183, %p184
      %p186 = scmp.ne.s32.totalorder %s175, %s178
      %p187 = scmp.eq.s32.totalorder %s45, 1
      %p188 = por %p186, %p187
      %p189 = scmp.ne.s32.totalorder %s178, %s179
      %p190 = scmp.eq.s32.totalorder %s45, 0
      %p191 = por %p189, %p190
      %p192 = scmp.ne.s32.totalorder %s178, %s179
      %p193 = scmp.eq.s32.totalorder %s46, 1
      %p194 = por %p192, %p193
      %p196 = scmp.ne.s32.totalorder %s179, %s195
      %p197 = scmp.eq.s32.totalorder %s46, 0
      %p198 = por %p196, %p197
      %s199 = ssub.s32 %s40, %s47
      %p200 = scmp.eq.s32.totalorder %s199, 0
      %s202 = sadd.s32 %s201, 1
      %s203 = scalar_select %p200, %s201, %s202
      %p206 = pneg %p200
      %p207 = scmp.eq.s32.totalorder %s40, 1
      %p208 = por %p206, %p207
      %p209 = scmp.ne.s32.totalorder %s201, %s204
      %p210 = scmp.eq.s32.totalorder %s40, 0
      %p211 = por %p209, %p210
      %p212 = scmp.ne.s32.totalorder %s201, %s204
      %p213 = scmp.eq.s32.totalorder %s45, 1
      %p214 = por %p212, %p213
      %p215 = scmp.ne.s32.totalorder %s204, %s205
      %p216 = scmp.eq.s32.totalorder %s45, 0
      %p217 = por %p215, %p216
      %p218 = scmp.ne.s32.totalorder %s204, %s205
      %p219 = scmp.eq.s32.totalorder %s46, 1
      %p220 = por %p218, %p219
      %p222 = scmp.ne.s32.totalorder %s205, %s221
      %p223 = scmp.eq.s32.totalorder %s46, 0
      %p224 = por %p222, %p223
      %s225 = ssub.s32 %s40, %s47
      %p226 = scmp.eq.s32.totalorder %s225, 0
      %s228 = sadd.s32 %s227, 1
      %s229 = scalar_select %p226, %s227, %s228
      %p232 = pneg %p226
      %p233 = scmp.eq.s32.totalorder %s40, 1
      %p234 = por %p232, %p233
      %p235 = scmp.ne.s32.totalorder %s227, %s230
      %p236 = scmp.eq.s32.totalorder %s40, 0
      %p237 = por %p235, %p236
      %p238 = scmp.ne.s32.totalorder %s227, %s230
      %p239 = scmp.eq.s32.totalorder %s45, 1
      %p240 = por %p238, %p239
      %p241 = scmp.ne.s32.totalorder %s230, %s231
      %p242 = scmp.eq.s32.totalorder %s45, 0
      %p243 = por %p241, %p242
      %p244 = scmp.ne.s32.totalorder %s230, %s231
      %p245 = scmp.eq.s32.totalorder %s46, 1
      %p246 = por %p244, %p245
      %p248 = scmp.ne.s32.totalorder %s231, %s247
      %p249 = scmp.eq.s32.totalorder %s46, 0
      %p250 = por %p248, %p249
      %s251 = ssub.s32 %s40, %s47
      %p252 = scmp.eq.s32.totalorder %s251, 0
      %s254 = sadd.s32 %s253, 1
      %s255 = scalar_select %p252, %s253, %s254
      %p258 = pneg %p252
      %p259 = scmp.eq.s32.totalorder %s40, 1
      %p260 = por %p258, %p259
      %p261 = scmp.ne.s32.totalorder %s253, %s256
      %p262 = scmp.eq.s32.totalorder %s40, 0
      %p263 = por %p261, %p262
      %p264 = scmp.ne.s32.totalorder %s253, %s256
      %p265 = scmp.eq.s32.totalorder %s45, 1
      %p266 = por %p264, %p265
      %p267 = scmp.ne.s32.totalorder %s256, %s257
      %p268 = scmp.eq.s32.totalorder %s45, 0
      %p269 = por %p267, %p268
      %p270 = scmp.ne.s32.totalorder %s256, %s257
      %p271 = scmp.eq.s32.totalorder %s46, 1
      %p272 = por %p270, %p271
      %p274 = scmp.ne.s32.totalorder %s257, %s273
      %p275 = scmp.eq.s32.totalorder %s46, 0
      %p276 = por %p274, %p275
      %s277 = ssub.s32 %s40, %s47
      %p278 = scmp.eq.s32.totalorder %s277, 0
      %s280 = sadd.s32 %s279, 1
      %s281 = scalar_select %p278, %s279, %s280
      %p284 = pneg %p278
      %p285 = scmp.eq.s32.totalorder %s40, 1
      %p286 = por %p284, %p285
      %p287 = scmp.ne.s32.totalorder %s279, %s282
      %p288 = scmp.eq.s32.totalorder %s40, 0
      %p289 = por %p287, %p288
      %p290 = scmp.ne.s32.totalorder %s279, %s282
      %p291 = scmp.eq.s32.totalorder %s45, 1
      %p292 = por %p290, %p291
      %p293 = scmp.ne.s32.totalorder %s282, %s283
      %p294 = scmp.eq.s32.totalorder %s45, 0
      %p295 = por %p293, %p294
      %p296 = scmp.ne.s32.totalorder %s282, %s283
      %p297 = scmp.eq.s32.totalorder %s46, 1
      %p298 = por %p296, %p297
      %p300 = scmp.ne.s32.totalorder %s283, %s299
      %p301 = scmp.eq.s32.totalorder %s46, 0
      %p302 = por %p300, %p301
      %s303 = ssub.s32 %s40, %s47
      %p304 = scmp.eq.s32.totalorder %s303, 0
      %s306 = sadd.s32 %s305, 1
      %s307 = scalar_select %p304, %s305, %s306
      %p310 = pneg %p304
      %p311 = scmp.eq.s32.totalorder %s40, 1
      %p312 = por %p310, %p311
      %p313 = scmp.ne.s32.totalorder %s305, %s308
      %p314 = scmp.eq.s32.totalorder %s40, 0
      %p315 = por %p313, %p314
      %p316 = scmp.ne.s32.totalorder %s305, %s308
      %p317 = scmp.eq.s32.totalorder %s45, 1
      %p318 = por %p316, %p317
      %p319 = scmp.ne.s32.totalorder %s308, %s309
      %p320 = scmp.eq.s32.totalorder %s45, 0
      %p321 = por %p319, %p320
      %p322 = scmp.ne.s32.totalorder %s308, %s309
      %p323 = scmp.eq.s32.totalorder %s46, 1
      %p324 = por %p322, %p323
      %p326 = scmp.ne.s32.totalorder %s309, %s325
      %p327 = scmp.eq.s32.totalorder %s46, 0
      %p328 = por %p326, %p327
      %s329 = ssub.s32 %s40, %s47
      %p330 = scmp.eq.s32.totalorder %s329, 0
      %s332 = sadd.s32 %s331, 1
      %s333 = scalar_select %p330, %s331, %s332
      %p336 = pneg %p330
      %p337 = scmp.eq.s32.totalorder %s40, 1
      %p338 = por %p336, %p337
      %p339 = scmp.ne.s32.totalorder %s331, %s334
      %p340 = scmp.eq.s32.totalorder %s40, 0
      %p341 = por %p339, %p340
      %p342 = scmp.ne.s32.totalorder %s331, %s334
      %p343 = scmp.eq.s32.totalorder %s45, 1
      %p344 = por %p342, %p343
      %p345 = scmp.ne.s32.totalorder %s334, %s335
      %p346 = scmp.eq.s32.totalorder %s45, 0
      %p347 = por %p345, %p346
      %p348 = scmp.ne.s32.totalorder %s334, %s335
      %p349 = scmp.eq.s32.totalorder %s46, 1
      %p350 = por %p348, %p349
      %p352 = scmp.ne.s32.totalorder %s335, %s351
      %p353 = scmp.eq.s32.totalorder %s46, 0
      %p354 = por %p352, %p353
      %s355 = ssub.s32 %s40, %s47
      %p356 = scmp.eq.s32.totalorder %s355, 0
      %s358 = sadd.s32 %s357, 1
      %s359 = scalar_select %p356, %s357, %s358
      %p362 = pneg %p356
      %p363 = scmp.eq.s32.totalorder %s40, 1
      %p364 = por %p362, %p363
      %p365 = scmp.ne.s32.totalorder %s357, %s360
      %p366 = scmp.eq.s32.totalorder %s40, 0
      %p367 = por %p365, %p366
      %p368 = scmp.ne.s32.totalorder %s357, %s360
      %p369 = scmp.eq.s32.totalorder %s45, 1
      %p370 = por %p368, %p369
      %p371 = scmp.ne.s32.totalorder %s360, %s361
      %p372 = scmp.eq.s32.totalorder %s45, 0
      %p373 = por %p371, %p372
      %p374 = scmp.ne.s32.totalorder %s360, %s361
      %p375 = scmp.eq.s32.totalorder %s46, 1
      %p376 = por %p374, %p375
      %p378 = scmp.ne.s32.totalorder %s361, %s377
      %p379 = scmp.eq.s32.totalorder %s46, 0
      %p380 = por %p378, %p379
      %s381 = ssub.s32 %s40, %s47
      %p382 = scmp.eq.s32.totalorder %s381, 0
      %s384 = sadd.s32 %s383, 1
      %s385 = scalar_select %p382, %s383, %s384
      %p388 = pneg %p382
      %p389 = scmp.eq.s32.totalorder %s40, 1
      %p390 = por %p388, %p389
      %p391 = scmp.ne.s32.totalorder %s383, %s386
      %p392 = scmp.eq.s32.totalorder %s40, 0
      %p393 = por %p391, %p392
      %p394 = scmp.ne.s32.totalorder %s383, %s386
      %p395 = scmp.eq.s32.totalorder %s45, 1
      %p396 = por %p394, %p395
      %p397 = scmp.ne.s32.totalorder %s386, %s387
      %p398 = scmp.eq.s32.totalorder %s45, 0
      %p399 = por %p397, %p398
      %p400 = scmp.ne.s32.totalorder %s386, %s387
      %p401 = scmp.eq.s32.totalorder %s46, 1
      %p402 = por %p400, %p401
      %p404 = scmp.ne.s32.totalorder %s387, %s403
      %p405 = scmp.eq.s32.totalorder %s46, 0
      %p406 = por %p404, %p405
      %s407 = ssub.s32 %s40, %s47
      %p408 = scmp.eq.s32.totalorder %s407, 0
      %s410 = sadd.s32 %s409, 1
      %s411 = scalar_select %p408, %s409, %s410
      %p414 = pneg %p408
      %p415 = scmp.eq.s32.totalorder %s40, 1
      %p416 = por %p414, %p415
      %p417 = scmp.ne.s32.totalorder %s409, %s412
      %p418 = scmp.eq.s32.totalorder %s40, 0
      %p419 = por %p417, %p418
      %p420 = scmp.ne.s32.totalorder %s409, %s412
      %p421 = scmp.eq.s32.totalorder %s45, 1
      %p422 = por %p420, %p421
      %p423 = scmp.ne.s32.totalorder %s412, %s413
      %p424 = scmp.eq.s32.totalorder %s45, 0
      %p425 = por %p423, %p424
      %p426 = scmp.ne.s32.totalorder %s412, %s413
      %p427 = scmp.eq.s32.totalorder %s46, 1
      %p428 = por %p426, %p427
      %p430 = scmp.ne.s32.totalorder %s413, %s429
      %p431 = scmp.eq.s32.totalorder %s46, 0
      %p432 = por %p430, %p431
      %s433 = ssub.s32 %s40, %s47
      %p434 = scmp.eq.s32.totalorder %s433, 0
      %s436 = sadd.s32 %s435, 1
      %s437 = scalar_select %p434, %s435, %s436
      %p440 = pneg %p434
      %p441 = scmp.eq.s32.totalorder %s40, 1
      %p442 = por %p440, %p441
      %p443 = scmp.ne.s32.totalorder %s435, %s438
      %p444 = scmp.eq.s32.totalorder %s40, 0
      %p445 = por %p443, %p444
      %p446 = scmp.ne.s32.totalorder %s435, %s438
      %p447 = scmp.eq.s32.totalorder %s45, 1
      %p448 = por %p446, %p447
      %p449 = scmp.ne.s32.totalorder %s438, %s439
      %p450 = scmp.eq.s32.totalorder %s45, 0
      %p451 = por %p449, %p450
      %p452 = scmp.ne.s32.totalorder %s438, %s439
      %p453 = scmp.eq.s32.totalorder %s46, 1
      %p454 = por %p452, %p453
      %p456 = scmp.ne.s32.totalorder %s439, %s455
      %p457 = scmp.eq.s32.totalorder %s46, 0
      %p458 = por %p456, %p457
      %s460 = sadd.s32 %s459, 1
      %p463 = scmp.eq.s32.totalorder %s40, 1
      %p464 = scmp.ne.s32.totalorder %s459, %s461
      %p465 = scmp.eq.s32.totalorder %s40, 0
      %p466 = por %p464, %p465
      %p467 = scmp.ne.s32.totalorder %s459, %s461
      %p468 = scmp.eq.s32.totalorder %s45, 1
      %p469 = por %p467, %p468
      %p470 = scmp.ne.s32.totalorder %s461, %s462
      %p471 = scmp.eq.s32.totalorder %s45, 0
      %p472 = por %p470, %p471
      %p473 = scmp.ne.s32.totalorder %s461, %s462
      %p474 = scmp.eq.s32.totalorder %s46, 1
      %p475 = por %p473, %p474
      %p477 = scmp.ne.s32.totalorder %s462, %s476
      %p478 = scmp.eq.s32.totalorder %s46, 0
      %p479 = por %p477, %p478
      %s481 = sadd.s32 %s480, 1
      %p484 = scmp.eq.s32.totalorder %s40, 1
      %p485 = scmp.ne.s32.totalorder %s480, %s482
      %p486 = scmp.eq.s32.totalorder %s40, 0
      %p487 = por %p485, %p486
      %p488 = scmp.ne.s32.totalorder %s480, %s482
      %p489 = scmp.eq.s32.totalorder %s45, 1
      %p490 = por %p488, %p489
      %p491 = scmp.ne.s32.totalorder %s482, %s483
      %p492 = scmp.eq.s32.totalorder %s45, 0
      %p493 = por %p491, %p492
      %p494 = scmp.ne.s32.totalorder %s482, %s483
      %p495 = scmp.eq.s32.totalorder %s46, 1
      %p496 = por %p494, %p495
      %p498 = scmp.ne.s32.totalorder %s483, %s497
      %p499 = scmp.eq.s32.totalorder %s46, 0
      %p500 = por %p498, %p499
      %s502 = sadd.s32 %s501, 1
      %p505 = scmp.eq.s32.totalorder %s40, 1
      %p506 = scmp.ne.s32.totalorder %s501, %s503
      %p507 = scmp.eq.s32.totalorder %s40, 0
      %p508 = por %p506, %p507
      %p509 = scmp.ne.s32.totalorder %s501, %s503
      %p510 = scmp.eq.s32.totalorder %s45, 1
      %p511 = por %p509, %p510
      %p512 = scmp.ne.s32.totalorder %s503, %s504
      %p513 = scmp.eq.s32.totalorder %s45, 0
      %p514 = por %p512, %p513
      %p515 = scmp.ne.s32.totalorder %s503, %s504
      %p516 = scmp.eq.s32.totalorder %s46, 1
      %p517 = por %p515, %p516
      %p519 = scmp.ne.s32.totalorder %s504, %s518
      %p520 = scmp.eq.s32.totalorder %s46, 0
      %p521 = por %p519, %p520
      %p522 = scmp.le.s32.totalorder 1, %s40
      %p523 = scmp.lt.s32.totalorder %s40, 3
      %p524 = pnand %p522, %p523
      %p525 = pneg %p524
      // Predicated region
      $region9: #{nlp_beit_forward.1} parent=5 // pred_check
        _
      $region10: #{nlp_beit_forward.1} parent=5 // pred_check_branch
        %527 = sbr.rel (%p524) target = $region12
      $region11: #{nlp_beit_forward.1} parent=5 // pred_region
        %s528 = ssub.s32 %s40, 1
        // Predicated region
        $region13: #{nlp_beit_forward.1} parent=11 // pred_check
          %p529 = pneg %p61
        $region14: #{nlp_beit_forward.1} parent=11 // pred_check_branch
          %531 = sbr.rel (%p529) target = $region16
        $region15: #{nlp_beit_forward.1} parent=11 // pred_region
          _
        $region16: #{nlp_beit_forward.1} parent=11 // pred_fallthru
          _
        // Predicated region
        $region17: #{nlp_beit_forward.1} parent=11 // pred_check
          %p532 = pneg %p472
        $region18: #{nlp_beit_forward.1} parent=11 // pred_check_branch
          %534 = sbr.rel (%p532) target = $region20
        $region19: #{nlp_beit_forward.1} parent=11 // pred_region
          %s536 = ssub.s32 512, 512
          %537 = vsyncadd [#allocation18], %s536
          %s538 = sshll.u32 [#allocation17], 4
          %s539 = int_to_ptr.vmem [resolvable:$true] %s538
          %544 = dma.hbm_to_vmem [thread:$0]  %s16, 512, %s539, [#allocation18], 128, 128, 8
        $region20: #{nlp_beit_forward.1} parent=11 // pred_fallthru
          _
        // Predicated region
        $region21: #{nlp_beit_forward.1} parent=11 // pred_check
          %p545 = pneg %p493
        $region22: #{nlp_beit_forward.1} parent=11 // pred_check_branch
          %547 = sbr.rel (%p545) target = $region24
        $region23: #{nlp_beit_forward.1} parent=11 // pred_region
          _
        $region24: #{nlp_beit_forward.1} parent=11 // pred_fallthru
          _
      $region12: #{nlp_beit_forward.1} parent=5 // pred_fallthru
        _
      %p548 = scmp.lt.s32.totalorder %s40, 2
      // Predicated region
      $region25: #{nlp_beit_forward.1} parent=5 // pred_check
        %p549 = pneg %p548
      $region26: #{nlp_beit_forward.1} parent=5 // pred_check_branch
        %551 = sbr.rel (%p549) target = $region28
      $region27: #{nlp_beit_forward.1} parent=5 // pred_region
        // Predicated region
        $region29: #{nlp_beit_forward.1} parent=27 // pred_check
          %p552 = pneg %p81
        $region30: #{nlp_beit_forward.1} parent=27 // pred_check_branch
          %554 = sbr.rel (%p552) target = $region32
        $region31: #{nlp_beit_forward.1} parent=27 // pred_region
          %p555 = scmp.lt.s32.totalorder %s40, 1
          %s556 = scalar_select %p555, %s40, 1
          %s557 = scalar_lea.vmem %s1, %s556
        $region32: #{nlp_beit_forward.1} parent=27 // pred_fallthru
          _
        // Predicated region
        $region33: #{nlp_beit_forward.1} parent=27 // pred_check
          %p558 = pneg %p107
        $region34: #{nlp_beit_forward.1} parent=27 // pred_check_branch
          %560 = sbr.rel (%p558) target = $region36
        $region35: #{nlp_beit_forward.1} parent=27 // pred_region
          %s561 = sand.u32 %s97, 1
          %s562 = scalar_lea.sflag [#allocation4], %s561
          %s563 = sand.u32 %s97, 1
          %s564 = scalar_lea.vmem [#allocation3], %s563
          %s566 = ssub.s32 16, 16
          %567 = vsyncadd %s562, %s566
          %s568 = smul.addr %s40, 16
          %s569 = scalar_lea.hbm %s2, %s568
          %s571 = sshll.u32 %s564, 4
          %s572 = int_to_ptr.vmem [resolvable:$true] %s571
          %574 = dma.hbm_to_vmem [thread:$0]  %s569, 16, %s572, %s562
        $region36: #{nlp_beit_forward.1} parent=27 // pred_fallthru
          _
        // Predicated region
        $region37: #{nlp_beit_forward.1} parent=27 // pred_check
          %p575 = pneg %p133
        $region38: #{nlp_beit_forward.1} parent=27 // pred_check_branch
          %577 = sbr.rel (%p575) target = $region40
        $region39: #{nlp_beit_forward.1} parent=27 // pred_region
          %p578 = scmp.lt.s32.totalorder %s40, 1
          %s579 = scalar_select %p578, %s40, 1
          %s580 = smul.addr %s579, 4
          %s581 = smul.addr %s580, 8
          %s582 = scalar_lea.vmem %s3, %s581
        $region40: #{nlp_beit_forward.1} parent=27 // pred_fallthru
          _
        // Predicated region
        $region41: #{nlp_beit_forward.1} parent=27 // pred_check
          %p583 = pneg %p159
        $region42: #{nlp_beit_forward.1} parent=27 // pred_check_branch
          %585 = sbr.rel (%p583) target = $region44
        $region43: #{nlp_beit_forward.1} parent=27 // pred_region
          %s586 = sand.u32 %s40, 1
          %s587 = scalar_lea.sflag [#allocation6], %s586
          %s588 = sand.u32 %s149, 1
          %s589 = scalar_lea.vmem [#allocation5], %s588
          %s591 = ssub.s32 16, 16
          %592 = vsyncadd %s587, %s591
          %s593 = smul.addr %s40, 16
          %s594 = scalar_lea.hbm %s4, %s593
          %s596 = sshll.u32 %s589, 4
          %s597 = int_to_ptr.vmem [resolvable:$true] %s596
          %599 = dma.hbm_to_vmem [thread:$0]  %s594, 16, %s597, %s587
        $region44: #{nlp_beit_forward.1} parent=27 // pred_fallthru
          _
        // Predicated region
        $region45: #{nlp_beit_forward.1} parent=27 // pred_check
          %p600 = pneg %p185
        $region46: #{nlp_beit_forward.1} parent=27 // pred_check_branch
          %602 = sbr.rel (%p600) target = $region48
        $region47: #{nlp_beit_forward.1} parent=27 // pred_region
          %p603 = scmp.lt.s32.totalorder %s40, 1
          %s604 = scalar_select %p603, %s40, 1
          %s605 = smul.addr %s604, 12
          %s606 = smul.addr %s605, 8
          %s607 = scalar_lea.vmem %s5, %s606
        $region48: #{nlp_beit_forward.1} parent=27 // pred_fallthru
          _
        // Predicated region
        $region49: #{nlp_beit_forward.1} parent=27 // pred_check
          %p608 = pneg %p211
        $region50: #{nlp_beit_forward.1} parent=27 // pred_check_branch
          %610 = sbr.rel (%p608) target = $region52
        $region51: #{nlp_beit_forward.1} parent=27 // pred_region
          %p611 = scmp.lt.s32.totalorder %s40, 1
          %s612 = scalar_select %p611, %s40, 1
          %s613 = smul.addr %s612, 4
          %s614 = smul.addr %s613, 8
          %s615 = scalar_lea.vmem %s6, %s614
        $region52: #{nlp_beit_forward.1} parent=27 // pred_fallthru
          _
        // Predicated region
        $region53: #{nlp_beit_forward.1} parent=27 // pred_check
          %p616 = pneg %p237
        $region54: #{nlp_beit_forward.1} parent=27 // pred_check_branch
          %618 = sbr.rel (%p616) target = $region56
        $region55: #{nlp_beit_forward.1} parent=27 // pred_region
          %s619 = sand.u32 %s40, 1
          %s620 = scalar_lea.sflag [#allocation6], %s619
          %s621 = sand.u32 %s227, 1
          %s622 = scalar_lea.vmem [#allocation7], %s621
          %s624 = ssub.s32 16, 16
          %625 = vsyncadd %s620, %s624
          %s626 = smul.addr %s40, 16
          %s627 = scalar_lea.hbm %s7, %s626
          %s629 = sshll.u32 %s622, 4
          %s630 = int_to_ptr.vmem [resolvable:$true] %s629
          %632 = dma.hbm_to_vmem [thread:$0]  %s627, 16, %s630, %s620
        $region56: #{nlp_beit_forward.1} parent=27 // pred_fallthru
          _
        // Predicated region
        $region57: #{nlp_beit_forward.1} parent=27 // pred_check
          %p633 = pneg %p263
        $region58: #{nlp_beit_forward.1} parent=27 // pred_check_branch
          %635 = sbr.rel (%p633) target = $region60
        $region59: #{nlp_beit_forward.1} parent=27 // pred_region
          %s636 = sand.u32 %s40, 1
          %s637 = scalar_lea.sflag [#allocation9], %s636
          %s638 = sand.u32 %s253, 1
          %s639 = scalar_lea.vmem [#allocation8], %s638
          %s641 = ssub.s32 16, 16
          %642 = vsyncadd %s637, %s641
          %s643 = smul.addr %s40, 16
          %s644 = scalar_lea.hbm %s8, %s643
          %s646 = sshll.u32 %s639, 4
          %s647 = int_to_ptr.vmem [resolvable:$true] %s646
          %649 = dma.hbm_to_vmem [thread:$0]  %s644, 16, %s647, %s637
        $region60: #{nlp_beit_forward.1} parent=27 // pred_fallthru
          _
        // Predicated region
        $region61: #{nlp_beit_forward.1} parent=27 // pred_check
          %p650 = pneg %p289
        $region62: #{nlp_beit_forward.1} parent=27 // pred_check_branch
          %652 = sbr.rel (%p650) target = $region64
        $region63: #{nlp_beit_forward.1} parent=27 // pred_region
          %p653 = scmp.lt.s32.totalorder %s40, 1
          %s654 = scalar_select %p653, %s40, 1
          %s655 = scalar_lea.vmem %s9, %s654
        $region64: #{nlp_beit_forward.1} parent=27 // pred_fallthru
          _
        // Predicated region
        $region65: #{nlp_beit_forward.1} parent=27 // pred_check
          %p656 = pneg %p315
        $region66: #{nlp_beit_forward.1} parent=27 // pred_check_branch
          %658 = sbr.rel (%p656) target = $region68
        $region67: #{nlp_beit_forward.1} parent=27 // pred_region
          %s659 = sand.u32 %s40, 1
          %s660 = scalar_lea.sflag [#allocation9], %s659
          %s661 = sand.u32 %s305, 1
          %s662 = scalar_lea.vmem [#allocation10], %s661
          %s664 = ssub.s32 16, 16
          %665 = vsyncadd %s660, %s664
          %s666 = smul.addr %s40, 16
          %s667 = scalar_lea.hbm %s10, %s666
          %s669 = sshll.u32 %s662, 4
          %s670 = int_to_ptr.vmem [resolvable:$true] %s669
          %672 = dma.hbm_to_vmem [thread:$0]  %s667, 16, %s670, %s660
        $region68: #{nlp_beit_forward.1} parent=27 // pred_fallthru
          _
        // Predicated region
        $region69: #{nlp_beit_forward.1} parent=27 // pred_check
          %p673 = pneg %p341
        $region70: #{nlp_beit_forward.1} parent=27 // pred_check_branch
          %675 = sbr.rel (%p673) target = $region72
        $region71: #{nlp_beit_forward.1} parent=27 // pred_region
          %s676 = sand.u32 %s40, 1
          %s677 = scalar_lea.sflag [#allocation12], %s676
          %s678 = sand.u32 %s331, 1
          %s679 = smul.addr %s678, 32
          %s680 = scalar_lea.vmem [#allocation11], %s679
          %s682 = ssub.s32 512, 512
          %683 = vsyncadd %s677, %s682
          %s684 = smul.addr %s40, 4
          %s685 = smul.addr %s684, 128
          %s686 = scalar_lea.hbm %s11, %s685
          %s687 = sshll.u32 %s680, 4
          %s688 = int_to_ptr.vmem [resolvable:$true] %s687
          %693 = dma.hbm_to_vmem [thread:$0]  %s686, 512, %s688, %s677, 128, 128, 8
        $region72: #{nlp_beit_forward.1} parent=27 // pred_fallthru
          _
        // Predicated region
        $region73: #{nlp_beit_forward.1} parent=27 // pred_check
          %p694 = pneg %p367
        $region74: #{nlp_beit_forward.1} parent=27 // pred_check_branch
          %696 = sbr.rel (%p694) target = $region76
        $region75: #{nlp_beit_forward.1} parent=27 // pred_region
          %s697 = sand.u32 %s40, 1
          %s698 = scalar_lea.sflag [#allocation12], %s697
          %s699 = sand.u32 %s357, 1
          %s700 = scalar_lea.vmem [#allocation13], %s699
          %s702 = ssub.s32 16, 16
          %703 = vsyncadd %s698, %s702
          %s704 = smul.addr %s40, 16
          %s705 = scalar_lea.hbm %s12, %s704
          %s707 = sshll.u32 %s700, 4
          %s708 = int_to_ptr.vmem [resolvable:$true] %s707
          %710 = dma.hbm_to_vmem [thread:$0]  %s705, 16, %s708, %s698
        $region76: #{nlp_beit_forward.1} parent=27 // pred_fallthru
          _
        // Predicated region
        $region77: #{nlp_beit_forward.1} parent=27 // pred_check
          %p711 = pneg %p393
        $region78: #{nlp_beit_forward.1} parent=27 // pred_check_branch
          %713 = sbr.rel (%p711) target = $region80
        $region79: #{nlp_beit_forward.1} parent=27 // pred_region
          %p714 = scmp.lt.s32.totalorder %s40, 1
          %s715 = scalar_select %p714, %s40, 1
          %s716 = smul.addr %s715, 8
          %s717 = smul.addr %s716, 8
          %s718 = scalar_lea.vmem %s13, %s717
        $region80: #{nlp_beit_forward.1} parent=27 // pred_fallthru
          _
        // Predicated region
        $region81: #{nlp_beit_forward.1} parent=27 // pred_check
          %p719 = pneg %p419
        $region82: #{nlp_beit_forward.1} parent=27 // pred_check_branch
          %721 = sbr.rel (%p719) target = $region84
        $region83: #{nlp_beit_forward.1} parent=27 // pred_region
          %s722 = sand.u32 %s40, 1
          %s723 = scalar_lea.sflag [#allocation15], %s722
          %s724 = sand.u32 %s409, 1
          %s725 = scalar_lea.vmem [#allocation14], %s724
          %s727 = ssub.s32 16, 16
          %728 = vsyncadd %s723, %s727
          %s729 = smul.addr %s40, 16
          %s730 = scalar_lea.hbm %s14, %s729
          %s732 = sshll.u32 %s725, 4
          %s733 = int_to_ptr.vmem [resolvable:$true] %s732
          %735 = dma.hbm_to_vmem [thread:$0]  %s730, 16, %s733, %s723
        $region84: #{nlp_beit_forward.1} parent=27 // pred_fallthru
          _
        // Predicated region
        $region85: #{nlp_beit_forward.1} parent=27 // pred_check
          %p736 = pneg %p445
        $region86: #{nlp_beit_forward.1} parent=27 // pred_check_branch
          %738 = sbr.rel (%p736) target = $region88
        $region87: #{nlp_beit_forward.1} parent=27 // pred_region
          %s739 = sand.u32 %s40, 1
          %s740 = scalar_lea.sflag [#allocation15], %s739
          %s741 = sand.u32 %s435, 1
          %s742 = scalar_lea.vmem [#allocation16], %s741
          %s744 = ssub.s32 16, 16
          %745 = vsyncadd %s740, %s744
          %s746 = smul.addr %s40, 16
          %s747 = scalar_lea.hbm %s15, %s746
          %s749 = sshll.u32 %s742, 4
          %s750 = int_to_ptr.vmem [resolvable:$true] %s749
          %752 = dma.hbm_to_vmem [thread:$0]  %s747, 16, %s750, %s740
        $region88: #{nlp_beit_forward.1} parent=27 // pred_fallthru
          _
      $region28: #{nlp_beit_forward.1} parent=5 // pred_fallthru
        _
      %p753 = scmp.le.s32.totalorder 1, %s40
      %p754 = scmp.lt.s32.totalorder %s40, 3
      %p755 = pnand %p753, %p754
      %p756 = pneg %p755
      // Predicated region
      $region89: #{nlp_beit_forward.1} parent=5 // pred_check
        _
      $region90: #{nlp_beit_forward.1} parent=5 // pred_check_branch
        %758 = sbr.rel (%p755) target = $region92
      $region91: #{nlp_beit_forward.1} parent=5 // pred_region
        %s759 = ssub.s32 %s40, 1
        %s760 = sand.u32 %s100, 1
        %s761 = scalar_lea.sflag [#allocation4], %s760
        %s762 = sand.u32 %s100, 1
        %s763 = scalar_lea.vmem [#allocation3], %s762
        // Predicated region
        $region93: #{nlp_beit_forward.1} parent=91 // pred_check
          %p764 = pneg %p113
        $region94: #{nlp_beit_forward.1} parent=91 // pred_check_branch
          %766 = sbr.rel (%p764) target = $region96
        $region95: #{nlp_beit_forward.1} parent=91 // pred_region
          %767 = dma.done %s761, 16
        $region96: #{nlp_beit_forward.1} parent=91 // pred_fallthru
          _
        %s768 = sand.u32 %s45, 1
        %s769 = scalar_lea.sflag [#allocation6], %s768
        %s770 = sand.u32 %s152, 1
        %s771 = scalar_lea.vmem [#allocation5], %s770
        // Predicated region
        $region97: #{nlp_beit_forward.1} parent=91 // pred_check
          %p772 = pneg %p165
        $region98: #{nlp_beit_forward.1} parent=91 // pred_check_branch
          %774 = sbr.rel (%p772) target = $region100
        $region99: #{nlp_beit_forward.1} parent=91 // pred_region
          %775 = dma.done %s769, 16
        $region100: #{nlp_beit_forward.1} parent=91 // pred_fallthru
          _
        %s776 = sand.u32 %s45, 1
        %s777 = scalar_lea.sflag [#allocation6], %s776
        %s778 = sand.u32 %s230, 1
        %s779 = scalar_lea.vmem [#allocation7], %s778
        // Predicated region
        $region101: #{nlp_beit_forward.1} parent=91 // pred_check
          %p780 = pneg %p243
        $region102: #{nlp_beit_forward.1} parent=91 // pred_check_branch
          %782 = sbr.rel (%p780) target = $region104
        $region103: #{nlp_beit_forward.1} parent=91 // pred_region
          %783 = dma.done %s777, 16
        $region104: #{nlp_beit_forward.1} parent=91 // pred_fallthru
          _
        %s784 = sand.u32 %s45, 1
        %s785 = scalar_lea.sflag [#allocation9], %s784
        %s786 = sand.u32 %s256, 1
        %s787 = scalar_lea.vmem [#allocation8], %s786
        // Predicated region
        $region105: #{nlp_beit_forward.1} parent=91 // pred_check
          %p788 = pneg %p269
        $region106: #{nlp_beit_forward.1} parent=91 // pred_check_branch
          %790 = sbr.rel (%p788) target = $region108
        $region107: #{nlp_beit_forward.1} parent=91 // pred_region
          %791 = dma.done %s785, 16
        $region108: #{nlp_beit_forward.1} parent=91 // pred_fallthru
          _
        %s792 = sand.u32 %s45, 1
        %s793 = scalar_lea.sflag [#allocation9], %s792
        %s794 = sand.u32 %s308, 1
        %s795 = scalar_lea.vmem [#allocation10], %s794
        // Predicated region
        $region109: #{nlp_beit_forward.1} parent=91 // pred_check
          %p796 = pneg %p321
        $region110: #{nlp_beit_forward.1} parent=91 // pred_check_branch
          %798 = sbr.rel (%p796) target = $region112
        $region111: #{nlp_beit_forward.1} parent=91 // pred_region
          %799 = dma.done %s793, 16
        $region112: #{nlp_beit_forward.1} parent=91 // pred_fallthru
          _
        %s800 = sand.u32 %s45, 1
        %s801 = scalar_lea.sflag [#allocation12], %s800
        %s802 = sand.u32 %s334, 1
        %s803 = smul.addr %s802, 32
        %s804 = scalar_lea.vmem [#allocation11], %s803
        // Predicated region
        $region113: #{nlp_beit_forward.1} parent=91 // pred_check
          %p805 = pneg %p347
        $region114: #{nlp_beit_forward.1} parent=91 // pred_check_branch
          %807 = sbr.rel (%p805) target = $region116
        $region115: #{nlp_beit_forward.1} parent=91 // pred_region
          %808 = dma.done %s801, 512
        $region116: #{nlp_beit_forward.1} parent=91 // pred_fallthru
          _
        %s809 = sand.u32 %s45, 1
        %s810 = scalar_lea.sflag [#allocation12], %s809
        %s811 = sand.u32 %s360, 1
        %s812 = scalar_lea.vmem [#allocation13], %s811
        // Predicated region
        $region117: #{nlp_beit_forward.1} parent=91 // pred_check
          %p813 = pneg %p373
        $region118: #{nlp_beit_forward.1} parent=91 // pred_check_branch
          %815 = sbr.rel (%p813) target = $region120
        $region119: #{nlp_beit_forward.1} parent=91 // pred_region
          %816 = dma.done %s810, 16
        $region120: #{nlp_beit_forward.1} parent=91 // pred_fallthru
          _
        %s817 = sand.u32 %s45, 1
        %s818 = scalar_lea.sflag [#allocation15], %s817
        %s819 = sand.u32 %s412, 1
        %s820 = scalar_lea.vmem [#allocation14], %s819
        // Predicated region
        $region121: #{nlp_beit_forward.1} parent=91 // pred_check
          %p821 = pneg %p425
        $region122: #{nlp_beit_forward.1} parent=91 // pred_check_branch
          %823 = sbr.rel (%p821) target = $region124
        $region123: #{nlp_beit_forward.1} parent=91 // pred_region
          %824 = dma.done %s818, 16
        $region124: #{nlp_beit_forward.1} parent=91 // pred_fallthru
          _
        %s825 = sand.u32 %s45, 1
        %s826 = scalar_lea.sflag [#allocation15], %s825
        %s827 = sand.u32 %s438, 1
        %s828 = scalar_lea.vmem [#allocation16], %s827
        // Predicated region
        $region125: #{nlp_beit_forward.1} parent=91 // pred_check
          %p829 = pneg %p451
        $region126: #{nlp_beit_forward.1} parent=91 // pred_check_branch
          %831 = sbr.rel (%p829) target = $region128
        $region127: #{nlp_beit_forward.1} parent=91 // pred_region
          %832 = dma.done %s826, 16
        $region128: #{nlp_beit_forward.1} parent=91 // pred_fallthru
          _
        // Predicated region
        $region129: #{nlp_beit_forward.1} parent=91 // pred_check
          %p833 = pneg %p472
        $region130: #{nlp_beit_forward.1} parent=91 // pred_check_branch
          %835 = sbr.rel (%p833) target = $region132
        $region131: #{nlp_beit_forward.1} parent=91 // pred_region
          %836 = dma.done [#allocation18], 512
        $region132: #{nlp_beit_forward.1} parent=91 // pred_fallthru
          _
        %p837 = pneg %p61
        %p838 = pneg %p58
        %p839 = scmp.lt.s32.totalorder %s45, 1
        %s840 = scalar_select %p839, %s45, 1
        %s841 = scalar_lea.vmem %s1, %s840
        %p842 = pneg %p87
        %p843 = pneg %p84
        %s844 = sand.u32 %s100, 1
        %s845 = scalar_lea.sflag [#allocation4], %s844
        %s846 = sand.u32 %s100, 1
        %s847 = scalar_lea.vmem [#allocation3], %s846
        %p848 = pneg %p113
        %p849 = pneg %p110
        %p850 = scmp.lt.s32.totalorder %s45, 1
        %s851 = scalar_select %p850, %s45, 1
        %s852 = smul.addr %s851, 4
        %s853 = smul.addr %s852, 8
        %s854 = scalar_lea.vmem %s3, %s853
        %p855 = pneg %p139
        %p856 = pneg %p136
        %s857 = sand.u32 %s45, 1
        %s858 = scalar_lea.sflag [#allocation6], %s857
        %s859 = sand.u32 %s152, 1
        %s860 = scalar_lea.vmem [#allocation5], %s859
        %p861 = pneg %p165
        %p862 = pneg %p162
        %p863 = scmp.lt.s32.totalorder %s45, 1
        %s864 = scalar_select %p863, %s45, 1
        %s865 = smul.addr %s864, 12
        %s866 = smul.addr %s865, 8
        %s867 = scalar_lea.vmem %s5, %s866
        %p868 = pneg %p191
        %p869 = pneg %p188
        %p870 = scmp.lt.s32.totalorder %s45, 1
        %s871 = scalar_select %p870, %s45, 1
        %s872 = smul.addr %s871, 4
        %s873 = smul.addr %s872, 8
        %s874 = scalar_lea.vmem %s6, %s873
        %p875 = pneg %p217
        %p876 = pneg %p214
        %s877 = sand.u32 %s45, 1
        %s878 = scalar_lea.sflag [#allocation6], %s877
        %s879 = sand.u32 %s230, 1
        %s880 = scalar_lea.vmem [#allocation7], %s879
        %p881 = pneg %p243
        %p882 = pneg %p240
        %s883 = sand.u32 %s45, 1
        %s884 = scalar_lea.sflag [#allocation9], %s883
        %s885 = sand.u32 %s256, 1
        %s886 = scalar_lea.vmem [#allocation8], %s885
        %p887 = pneg %p269
        %p888 = pneg %p266
        %p889 = scmp.lt.s32.totalorder %s45, 1
        %s890 = scalar_select %p889, %s45, 1
        %s891 = scalar_lea.vmem %s9, %s890
        %p892 = pneg %p295
        %p893 = pneg %p292
        %s894 = sand.u32 %s45, 1
        %s895 = scalar_lea.sflag [#allocation9], %s894
        %s896 = sand.u32 %s308, 1
        %s897 = scalar_lea.vmem [#allocation10], %s896
        %p898 = pneg %p321
        %p899 = pneg %p318
        %s900 = sand.u32 %s45, 1
        %s901 = scalar_lea.sflag [#allocation12], %s900
        %s902 = sand.u32 %s334, 1
        %s903 = smul.addr %s902, 32
        %s904 = scalar_lea.vmem [#allocation11], %s903
        %p905 = pneg %p347
        %p906 = pneg %p344
        %s907 = sand.u32 %s45, 1
        %s908 = scalar_lea.sflag [#allocation12], %s907
        %s909 = sand.u32 %s360, 1
        %s910 = scalar_lea.vmem [#allocation13], %s909
        %p911 = pneg %p373
        %p912 = pneg %p370
        %p913 = scmp.lt.s32.totalorder %s45, 1
        %s914 = scalar_select %p913, %s45, 1
        %s915 = smul.addr %s914, 8
        %s916 = smul.addr %s915, 8
        %s917 = scalar_lea.vmem %s13, %s916
        %p918 = pneg %p399
        %p919 = pneg %p396
        %s920 = sand.u32 %s45, 1
        %s921 = scalar_lea.sflag [#allocation15], %s920
        %s922 = sand.u32 %s412, 1
        %s923 = scalar_lea.vmem [#allocation14], %s922
        %p924 = pneg %p425
        %p925 = pneg %p422
        %s926 = sand.u32 %s45, 1
        %s927 = scalar_lea.sflag [#allocation15], %s926
        %s928 = sand.u32 %s438, 1
        %s929 = scalar_lea.vmem [#allocation16], %s928
        %p930 = pneg %p451
        %p931 = pneg %p448
        %p932 = pneg %p472
        %p933 = pneg %p469
        %p934 = pneg %p493
        %p935 = pneg %p490
        %p936 = pneg %p514
        %p937 = pneg %p511
        %p938 = scmp.lt.s32.totalorder %s45, 1
        %s939 = scalar_select %p938, %s45, 1
        %s940 = scalar_lea.vmem %s1, %s939
        %p941 = scmp.lt.s32.totalorder %s45, 1
        %s942 = scalar_select %p941, %s45, 1
        %s943 = smul.addr %s942, 4
        %s944 = smul.addr %s943, 8
        %s945 = scalar_lea.vmem %s3, %s944
        %p946 = scmp.lt.s32.totalorder %s45, 1
        %s947 = scalar_select %p946, %s45, 1
        %s948 = smul.addr %s947, 12
        %s949 = smul.addr %s948, 8
        %s950 = scalar_lea.vmem %s5, %s949
        %p951 = scmp.lt.s32.totalorder %s45, 1
        %s952 = scalar_select %p951, %s45, 1
        %s953 = smul.addr %s952, 4
        %s954 = smul.addr %s953, 8
        %s955 = scalar_lea.vmem %s6, %s954
        %p956 = scmp.lt.s32.totalorder %s45, 1
        %s957 = scalar_select %p956, %s45, 1
        %s958 = scalar_lea.vmem %s9, %s957
        %p959 = scmp.lt.s32.totalorder %s45, 1
        %s960 = scalar_select %p959, %s45, 1
        %s961 = smul.addr %s960, 8
        %s962 = smul.addr %s961, 8
        %s963 = scalar_lea.vmem %s13, %s962
        %p964 = scmp.eq.s32.totalorder %s45, 0
        // Predicated region
        $region133: #{nlp_beit_forward.1} parent=91 // pred_check
          %p965 = pneg %p964
        $region134: #{nlp_beit_forward.1} parent=91 // pred_check_branch
          %967 = sbr.rel (%p965) target = $region136
        $region135: #{nlp_beit_forward.1} parent=91 // pred_region
          %v968 = vld [vmem:[%s0] sm:$0xff]
          %v969 = vld [vmem:[%s0 + $0x8] sm:$0xff]
          %v970 = vld [vmem:[%s0 + $0x10] sm:$0xff]
          %v971 = vld [vmem:[%s0 + $0x18] sm:$0xff]
          %v972 = vld [vmem:[%s0 + $0x20] sm:$0xff]
          %v973 = vld [vmem:[%s0 + $0x28] sm:$0xff]
          %vm974 = vcmask 261120
          %975 = vst.msk [vmem:[#allocation2] sm:$0xff] %vm974, %v968
          %976 = vst.msk [vmem:[#allocation2 + $0x8] sm:$0xff] %vm974, %v969
          %977 = vst.msk [vmem:[#allocation2 + $0x10] sm:$0xff] %vm974, %v970
          %978 = vst.msk [vmem:[#allocation2 + $0x18] sm:$0xff] %vm974, %v971
          %979 = vst.msk [vmem:[#allocation2 + $0x20] sm:$0xff] %vm974, %v972
          %980 = vst.msk [vmem:[#allocation2 + $0x28] sm:$0xff] %vm974, %v973
        $region136: #{nlp_beit_forward.1} parent=91 // pred_fallthru
          _
        %v981 = vld [vmem:[#allocation2] sm:$0xff]
        %v982 = vld [vmem:[#allocation2 + $0x8] sm:$0xff]
        %v983 = vld [vmem:[#allocation2 + $0x10] sm:$0xff]
        %v984 = vld [vmem:[#allocation2 + $0x18] sm:$0xff]
        %v985 = vld [vmem:[#allocation2 + $0x20] sm:$0xff]
        %v986 = vld [vmem:[#allocation2 + $0x28] sm:$0xff]
        %v987 = vld [vmem:[%s940] sm:$0x1]
        %v988 = vld [vmem:[%s763] sm:$0x1]
        %vm989 = vcmask 261120
        %v990 = vsel %vm989, %v981, 0.0
        %991 = vadd.xlane.f32.xlu0 %v990
        %v992 = vpop.xlane.xlu0 %991
        %v993 = vsel %vm989, %v982, 0.0
        %994 = vadd.xlane.f32.xlu0 %v993
        %v995 = vpop.xlane.xlu0 %994
        %v996 = vsel %vm989, %v983, 0.0
        %997 = vadd.xlane.f32.xlu0 %v996
        %v998 = vpop.xlane.xlu0 %997
        %v999 = vsel %vm989, %v984, 0.0
        %1000 = vadd.xlane.f32.xlu0 %v999
        %v1001 = vpop.xlane.xlu0 %1000
        %v1002 = vsel %vm989, %v985, 0.0
        %1003 = vadd.xlane.f32.xlu0 %v1002
        %v1004 = vpop.xlane.xlu0 %1003
        %v1005 = vsel %vm989, %v986, 0.0
        %1006 = vadd.xlane.f32.xlu0 %v1005
        %v1007 = vpop.xlane.xlu0 %1006
        %v1008 = vrcp.pop 32.0
        %v1009 = vmul.f32 %v992, %v1008
        %v1010 = vmul.f32 %v995, %v1008
        %v1011 = vmul.f32 %v998, %v1008
        %v1012 = vmul.f32 %v1001, %v1008
        %v1013 = vmul.f32 %v1004, %v1008
        %v1014 = vmul.f32 %v1007, %v1008
        %v1015 = vsub.f32 %v981, %v1009
        %v1016 = vsub.f32 %v982, %v1010
        %v1017 = vsub.f32 %v983, %v1011
        %v1018 = vsub.f32 %v984, %v1012
        %v1019 = vsub.f32 %v985, %v1013
        %v1020 = vsub.f32 %v986, %v1014
        %v1021 = vmul.f32 %v1015, %v1015
        %v1022 = vmul.f32 %v1016, %v1016
        %v1023 = vmul.f32 %v1017, %v1017
        %v1024 = vmul.f32 %v1018, %v1018
        %v1025 = vmul.f32 %v1019, %v1019
        %v1026 = vmul.f32 %v1020, %v1020
        %v1027 = vsel %vm989, %v1021, 0.0
        %1028 = vadd.xlane.f32.xlu0 %v1027
        %v1029 = vpop.xlane.xlu0 %1028
        %v1030 = vsel %vm989, %v1022, 0.0
        %1031 = vadd.xlane.f32.xlu0 %v1030
        %v1032 = vpop.xlane.xlu0 %1031
        %v1033 = vsel %vm989, %v1023, 0.0
        %1034 = vadd.xlane.f32.xlu0 %v1033
        %v1035 = vpop.xlane.xlu0 %1034
        %v1036 = vsel %vm989, %v1024, 0.0
        %1037 = vadd.xlane.f32.xlu0 %v1036
        %v1038 = vpop.xlane.xlu0 %1037
        %v1039 = vsel %vm989, %v1025, 0.0
        %1040 = vadd.xlane.f32.xlu0 %v1039
        %v1041 = vpop.xlane.xlu0 %1040
        %v1042 = vsel %vm989, %v1026, 0.0
        %1043 = vadd.xlane.f32.xlu0 %v1042
        %v1044 = vpop.xlane.xlu0 %1043
        %v1045 = vmul.f32 %v1029, %v1008
        %v1046 = vmul.f32 %v1032, %v1008
        %v1047 = vmul.f32 %v1035, %v1008
        %v1048 = vmul.f32 %v1038, %v1008
        %v1049 = vmul.f32 %v1041, %v1008
        %v1050 = vmul.f32 %v1044, %v1008
        %v1051 = vadd.f32 %v1045, 1e-12
        %v1052 = vadd.f32 %v1046, 1e-12
        %v1053 = vadd.f32 %v1047, 1e-12
        %v1054 = vadd.f32 %v1048, 1e-12
        %v1055 = vadd.f32 %v1049, 1e-12
        %v1056 = vadd.f32 %v1050, 1e-12
        %v1057 = vrsqrt.pop %v1051
        %v1058 = vrsqrt.pop %v1052
        %v1059 = vrsqrt.pop %v1053
        %v1060 = vrsqrt.pop %v1054
        %v1061 = vrsqrt.pop %v1055
        %v1062 = vrsqrt.pop %v1056
        %v1063 = vmul.f32 %v1015, %v1057
        %v1064 = vmul.f32 %v1016, %v1058
        %v1065 = vmul.f32 %v1017, %v1059
        %v1066 = vmul.f32 %v1018, %v1060
        %v1067 = vmul.f32 %v1019, %v1061
        %v1068 = vmul.f32 %v1020, %v1062
        %v1070 = vlaneseq
        %v1071 = vshrl.u32 %v1070, 7
        %v1072 = vsub.s32 0, %v1071
        %v1073 = vrot.slane %v987, %v1072
        %v1075 = vmul.f32 %v1063, %v1073
        %v1076 = vmul.f32 %v1064, %v1073
        %v1077 = vmul.f32 %v1065, %v1073
        %v1078 = vmul.f32 %v1066, %v1073
        %v1079 = vmul.f32 %v1067, %v1073
        %v1080 = vmul.f32 %v1068, %v1073
        %v1082 = vlaneseq
        %v1083 = vshrl.u32 %v1082, 7
        %v1084 = vsub.s32 0, %v1083
        %v1085 = vrot.slane %v988, %v1084
        %v1087 = vadd.f32 %v1075, %v1085
        %v1088 = vadd.f32 %v1076, %v1085
        %v1089 = vadd.f32 %v1077, %v1085
        %v1090 = vadd.f32 %v1078, %v1085
        %v1091 = vadd.f32 %v1079, %v1085
        %v1092 = vadd.f32 %v1080, %v1085
        %v1093 = vld [vmem:[%s945] sm:$0xff]
        %v1094 = vld [vmem:[%s945 + $0x8] sm:$0xff]
        %v1095 = vld [vmem:[%s945 + $0x10] sm:$0xff]
        %v1096 = vld [vmem:[%s945 + $0x18] sm:$0xff]
        %v1097 = vld [vmem:[%s771] sm:$0x1]
        %v1099 = vlaneseq
        %v1100 = vshrl.u32 %v1099, 7
        %v1101 = vsub.s32 0, %v1100
        %v1102 = vrot.slane %v1097, %v1101
        %v1105 = vsel %vm989, %v1087, 0
        %v1108 = vsel %vm989, %v1088, 0
        %v1111 = vsel %vm989, %v1089, 0
        %v1114 = vsel %vm989, %v1090, 0
        %v1117 = vsel %vm989, %v1091, 0
        %v1120 = vsel %vm989, %v1092, 0
        %1122 = vmatprep.subr.mxu0 0.0
        %1123 = vmatpush1.msra.mxu0 0.0
        %1124 = vmatprep.subr.mxu0 0.0
        %1125 = vmatpush1.msra.mxu0 0.0
        %1126 = vmatprep.subr.mxu0 0.0
        %1127 = vmatpush1.msra.mxu0 0.0
        %1128 = vmatprep.subr.mxu0 0.0
        %1129 = vmatpush1.msra.mxu0 0.0
        %1130 = vmatprep.subr.mxu0 0.0
        %1131 = vmatpush1.msra.mxu0 0.0
        %1132 = vmatprep.subr.mxu0 0.0
        %1133 = vmatpush1.msra.mxu0 0.0
        %1134 = vmatprep.subr.mxu0 0.0
        %1135 = vmatpush1.msra.mxu0 0.0
        %1136 = vmatprep.subr.mxu0 0.0
        %1137 = vmatpush1.msra.mxu0 0.0
        %1138 = vmatprep.subr.mxu0 0.0
        %1139 = vmatpush1.msra.mxu0 0.0
        %1140 = vmatprep.subr.mxu0 0.0
        %1141 = vmatpush1.msra.mxu0 0.0
        %1142 = vmatprep.subr.mxu0 0.0
        %1143 = vmatpush1.msra.mxu0 0.0
        %1144 = vmatprep.subr.mxu0 0.0
        %1145 = vmatpush1.msra.mxu0 0.0
        %1146 = vmatprep.subr.mxu0 0.0
        %1147 = vmatpush1.msra.mxu0 %v1096
        %1148 = vmatprep.subr.mxu0 0.0
        %1149 = vmatpush1.msra.mxu0 %v1095
        %1150 = vmatprep.subr.mxu0 0.0
        %1151 = vmatpush1.msra.mxu0 %v1094
        %1152 = vmatprep.subr.mxu0 0.0
        %1153 = vmatpush1.msra.mxu0 %v1093
        %1154 = vmatprep.subr.mxu0 0.0
        %1155 = vmatpush2.msra.mxu0 0.0
        %1156 = vmatprep.subr.mxu0 0.0
        %1157 = vmatpush2.msra.mxu0 0.0
        %1158 = vmatprep.subr.mxu0 0.0
        %1159 = vmatpush2.msra.mxu0 0.0
        %1160 = vmatprep.subr.mxu0 0.0
        %1161 = vmatpush2.msra.mxu0 0.0
        %1162 = vmatprep.subr.mxu0 0.0
        %1163 = vmatpush2.msra.mxu0 0.0
        %1164 = vmatprep.subr.mxu0 0.0
        %1165 = vmatpush2.msra.mxu0 0.0
        %1166 = vmatprep.subr.mxu0 0.0
        %1167 = vmatpush2.msra.mxu0 0.0
        %1168 = vmatprep.subr.mxu0 0.0
        %1169 = vmatpush2.msra.mxu0 0.0
        %1170 = vmatprep.subr.mxu0 0.0
        %1171 = vmatpush2.msra.mxu0 0.0
        %1172 = vmatprep.subr.mxu0 0.0
        %1173 = vmatpush2.msra.mxu0 0.0
        %1174 = vmatprep.subr.mxu0 0.0
        %1175 = vmatpush2.msra.mxu0 0.0
        %1176 = vmatprep.subr.mxu0 0.0
        %1177 = vmatpush2.msra.mxu0 0.0
        %1178 = vmatprep.subr.mxu0 0.0
        %1179 = vmatpush2.msra.mxu0 0.0
        %1180 = vmatprep.subr.mxu0 0.0
        %1181 = vmatpush2.msra.mxu0 0.0
        %1182 = vmatprep.subr.mxu0 0.0
        %1183 = vmatpush2.msra.mxu0 0.0
        %1184 = vmatprep.subr.mxu0 0.0
        %1185 = vmatpush2.msra.mxu0 0.0
        %1186 = vmatprep.mubr.f32.mxu0 0.0
        %1187 = vmatmul.mubr.f32.gmra.mxu0 %v1105
        %v1188 = vpop.f32.mrf.mxu0
        %v1189 = vadd.f32 %v1102, %v1188
        %v1190 = vpop.f32.mrf.mxu0
        %1191 = vmatprep.mubr.f32.mxu0 0.0
        %1192 = vmatmul.mubr.f32.gmra.mxu0 %v1108
        %v1193 = vpop.f32.mrf.mxu0
        %v1194 = vadd.f32 %v1102, %v1193
        %v1195 = vpop.f32.mrf.mxu0
        %1196 = vmatprep.mubr.f32.mxu0 0.0
        %1197 = vmatmul.mubr.f32.gmra.mxu0 %v1111
        %v1198 = vpop.f32.mrf.mxu0
        %v1199 = vadd.f32 %v1102, %v1198
        %v1200 = vpop.f32.mrf.mxu0
        %1201 = vmatprep.mubr.f32.mxu0 0.0
        %1202 = vmatmul.mubr.f32.gmra.mxu0 %v1114
        %v1203 = vpop.f32.mrf.mxu0
        %v1204 = vadd.f32 %v1102, %v1203
        %v1205 = vpop.f32.mrf.mxu0
        %1206 = vmatprep.mubr.f32.mxu0 0.0
        %1207 = vmatmul.mubr.f32.gmra.mxu0 %v1117
        %v1208 = vpop.f32.mrf.mxu0
        %v1209 = vadd.f32 %v1102, %v1208
        %v1210 = vpop.f32.mrf.mxu0
        %1211 = vmatprep.mubr.f32.mxu0 0.0
        %1212 = vmatmul.mubr.f32.gmra.mxu0 %v1120
        %v1213 = vpop.f32.mrf.mxu0
        %v1214 = vadd.f32 %v1102, %v1213
        %v1215 = vpop.f32.mrf.mxu0
        %1216 = vdwg.mxu0
        %1220 = vrot.lane.b32.xlu0 %v1189, 96
        %v1221 = vpop.permute.xlu0 %1220
        %1222 = vrot.lane.b32.xlu0 %v1194, 96
        %v1223 = vpop.permute.xlu0 %1222
        %1224 = vrot.lane.b32.xlu0 %v1199, 96
        %v1225 = vpop.permute.xlu0 %1224
        %vm1226 = vcmask 64512
        %v1227 = vsel %vm1226, %v1189, 0
        %v1229 = vsel %vm1226, %v1194, 0
        %v1231 = vsel %vm1226, %v1199, 0
        %v1233 = vsel %vm1226, %v1221, 0
        %v1235 = vsel %vm1226, %v1223, 0
        %v1237 = vsel %vm1226, %v1225, 0
        %1239 = vmatprep.subr.mxu0 0.0
        %1240 = vmatpush1.xpose.msra.mxu0 0.0
        %1241 = vmatprep.subr.mxu0 0.0
        %1242 = vmatpush1.xpose.msra.mxu0 0.0
        %1243 = vmatprep.subr.mxu0 0.0
        %1244 = vmatpush1.xpose.msra.mxu0 0.0
        %1245 = vmatprep.subr.mxu0 0.0
        %1246 = vmatpush1.xpose.msra.mxu0 0.0
        %1247 = vmatprep.subr.mxu0 0.0
        %1248 = vmatpush1.xpose.msra.mxu0 0.0
        %1249 = vmatprep.subr.mxu0 0.0
        %1250 = vmatpush1.xpose.msra.mxu0 0.0
        %1251 = vmatprep.subr.mxu0 0.0
        %1252 = vmatpush1.xpose.msra.mxu0 0.0
        %1253 = vmatprep.subr.mxu0 0.0
        %1254 = vmatpush1.xpose.msra.mxu0 0.0
        %1255 = vmatprep.subr.mxu0 0.0
        %1256 = vmatpush1.xpose.msra.mxu0 0.0
        %1257 = vmatprep.subr.mxu0 0.0
        %1258 = vmatpush1.xpose.msra.mxu0 0.0
        %1259 = vmatprep.subr.mxu0 0.0
        %1260 = vmatpush1.xpose.msra.mxu0 0.0
        %1261 = vmatprep.subr.mxu0 0.0
        %1262 = vmatpush1.xpose.msra.mxu0 0.0
        %1263 = vmatprep.subr.mxu0 0.0
        %1264 = vmatpush1.xpose.msra.mxu0 0.0
        %1265 = vmatprep.subr.mxu0 0.0
        %1266 = vmatpush1.xpose.msra.mxu0 %v1237
        %1267 = vmatprep.subr.mxu0 0.0
        %1268 = vmatpush1.xpose.msra.mxu0 %v1235
        %1269 = vmatprep.subr.mxu0 0.0
        %1270 = vmatpush1.xpose.msra.mxu0 %v1233
        %1271 = vmatprep.subr.mxu0 0.0
        %1272 = vmatpush2.xpose.msra.mxu0 0.0
        %1273 = vmatprep.subr.mxu0 0.0
        %1274 = vmatpush2.xpose.msra.mxu0 0.0
        %1275 = vmatprep.subr.mxu0 0.0
        %1276 = vmatpush2.xpose.msra.mxu0 0.0
        %1277 = vmatprep.subr.mxu0 0.0
        %1278 = vmatpush2.xpose.msra.mxu0 0.0
        %1279 = vmatprep.subr.mxu0 0.0
        %1280 = vmatpush2.xpose.msra.mxu0 0.0
        %1281 = vmatprep.subr.mxu0 0.0
        %1282 = vmatpush2.xpose.msra.mxu0 0.0
        %1283 = vmatprep.subr.mxu0 0.0
        %1284 = vmatpush2.xpose.msra.mxu0 0.0
        %1285 = vmatprep.subr.mxu0 0.0
        %1286 = vmatpush2.xpose.msra.mxu0 0.0
        %1287 = vmatprep.subr.mxu0 0.0
        %1288 = vmatpush2.xpose.msra.mxu0 0.0
        %1289 = vmatprep.subr.mxu0 0.0
        %1290 = vmatpush2.xpose.msra.mxu0 0.0
        %1291 = vmatprep.subr.mxu0 0.0
        %1292 = vmatpush2.xpose.msra.mxu0 0.0
        %1293 = vmatprep.subr.mxu0 0.0
        %1294 = vmatpush2.xpose.msra.mxu0 0.0
        %1295 = vmatprep.subr.mxu0 0.0
        %1296 = vmatpush2.xpose.msra.mxu0 0.0
        %1297 = vmatprep.subr.mxu0 0.0
        %1298 = vmatpush2.xpose.msra.mxu0 0.0
        %1299 = vmatprep.subr.mxu0 0.0
        %1300 = vmatpush2.xpose.msra.mxu0 0.0
        %1301 = vmatprep.subr.mxu0 0.0
        %1302 = vmatpush2.xpose.msra.mxu0 0.0
        %1303 = vmatprep.mubr.f32.mxu0 0.0
        %1304 = vmatmul.mubr.f32.gmra.mxu0 %v1227
        %v1305 = vpop.f32.mrf.mxu0
        %v1306 = vadd.f32 0.0, %v1305
        %v1307 = vpop.f32.mrf.mxu0
        %1308 = vmatprep.mubr.f32.mxu0 0.0
        %1309 = vmatmul.mubr.f32.gmra.mxu0 %v1229
        %v1310 = vpop.f32.mrf.mxu0
        %v1311 = vadd.f32 0.0, %v1310
        %v1312 = vpop.f32.mrf.mxu0
        %1313 = vmatprep.mubr.f32.mxu0 0.0
        %1314 = vmatmul.mubr.f32.gmra.mxu0 %v1231
        %v1315 = vpop.f32.mrf.mxu0
        %v1316 = vadd.f32 0.0, %v1315
        %v1317 = vpop.f32.mrf.mxu0
        %1318 = vdwg.mxu0
        %v1319 = vmul.f32 %v1306, 0.35355338
        %v1320 = vmul.f32 %v1311, 0.35355338
        %v1321 = vmul.f32 %v1316, 0.35355338
        %v1322 = vld [vmem:[%s950] sm:$0xff]
        %v1323 = vld [vmem:[%s950 + $0x8] sm:$0xff]
        %v1324 = vld [vmem:[%s950 + $0x10] sm:$0xff]
        %v1325 = vadd.f32 %v1319, %v1322
        %v1326 = vadd.f32 %v1320, %v1323
        %v1327 = vadd.f32 %v1321, %v1324
        %vm1328 = vcmask 195584
        %v1329 = vsel %vm1328, %v1325, -inf
        %1330 = vmax.xlane.f32.xlu0 %v1329
        %v1331 = vpop.xlane.xlu0 %1330
        %v1332 = vsel %vm1328, %v1326, -inf
        %1333 = vmax.xlane.f32.xlu0 %v1332
        %v1334 = vpop.xlane.xlu0 %1333
        %v1335 = vsel %vm1328, %v1327, -inf
        %1336 = vmax.xlane.f32.xlu0 %v1335
        %v1337 = vpop.xlane.xlu0 %1336
        %v1338 = vsub.f32 %v1325, %v1331
        %v1339 = vsub.f32 %v1326, %v1334
        %v1340 = vsub.f32 %v1327, %v1337
        %v1341 = vmul.f32 %v1338, 1.442695
        %v1342 = vpow.pop %v1341
        %v1343 = vmul.f32 %v1339, 1.442695
        %v1344 = vpow.pop %v1343
        %v1345 = vmul.f32 %v1340, 1.442695
        %v1346 = vpow.pop %v1345
        %v1347 = vsel %vm1328, %v1342, 0.0
        %1348 = vadd.xlane.f32.xlu0 %v1347
        %v1349 = vpop.xlane.xlu0 %1348
        %v1350 = vsel %vm1328, %v1344, 0.0
        %1351 = vadd.xlane.f32.xlu0 %v1350
        %v1352 = vpop.xlane.xlu0 %1351
        %v1353 = vsel %vm1328, %v1346, 0.0
        %1354 = vadd.xlane.f32.xlu0 %v1353
        %v1355 = vpop.xlane.xlu0 %1354
        %v1356 = vrcp.pop %v1349
        %v1357 = vrcp.pop %v1352
        %v1358 = vrcp.pop %v1355
        %v1359 = vmul.f32 %v1342, %v1356
        %v1360 = vmul.f32 %v1344, %v1357
        %v1361 = vmul.f32 %v1346, %v1358
        %1362 = vrot.lane.b32.xlu0 %v1189, 64
        %v1363 = vpop.permute.xlu0 %1362
        %1364 = vrot.lane.b32.xlu0 %v1194, 64
        %v1365 = vpop.permute.xlu0 %1364
        %1366 = vrot.lane.b32.xlu0 %v1199, 64
        %v1367 = vpop.permute.xlu0 %1366
        %v1372 = vsel %vm1328, %v1359, 0
        %v1375 = vsel %vm1328, %v1360, 0
        %v1378 = vsel %vm1328, %v1361, 0
        %1380 = vmatprep.subr.mxu0 0.0
        %1381 = vmatpush1.msra.mxu0 0.0
        %1382 = vmatprep.subr.mxu0 0.0
        %1383 = vmatpush1.msra.mxu0 0.0
        %1384 = vmatprep.subr.mxu0 0.0
        %1385 = vmatpush1.msra.mxu0 0.0
        %1386 = vmatprep.subr.mxu0 0.0
        %1387 = vmatpush1.msra.mxu0 0.0
        %1388 = vmatprep.subr.mxu0 0.0
        %1389 = vmatpush1.msra.mxu0 0.0
        %1390 = vmatprep.subr.mxu0 0.0
        %1391 = vmatpush1.msra.mxu0 0.0
        %1392 = vmatprep.subr.mxu0 0.0
        %1393 = vmatpush1.msra.mxu0 0.0
        %1394 = vmatprep.subr.mxu0 0.0
        %1395 = vmatpush1.msra.mxu0 0.0
        %1396 = vmatprep.subr.mxu0 0.0
        %1397 = vmatpush1.msra.mxu0 0.0
        %1398 = vmatprep.subr.mxu0 0.0
        %1399 = vmatpush1.msra.mxu0 0.0
        %1400 = vmatprep.subr.mxu0 0.0
        %1401 = vmatpush1.msra.mxu0 0.0
        %1402 = vmatprep.subr.mxu0 0.0
        %1403 = vmatpush1.msra.mxu0 0.0
        %1404 = vmatprep.subr.mxu0 0.0
        %1405 = vmatpush1.msra.mxu0 0.0
        %1406 = vmatprep.subr.mxu0 0.0
        %1407 = vmatpush1.msra.mxu0 %v1367
        %1408 = vmatprep.subr.mxu0 0.0
        %1409 = vmatpush1.msra.mxu0 %v1365
        %1410 = vmatprep.subr.mxu0 0.0
        %1411 = vmatpush1.msra.mxu0 %v1363
        %1412 = vmatprep.subr.mxu0 0.0
        %1413 = vmatpush2.msra.mxu0 0.0
        %1414 = vmatprep.subr.mxu0 0.0
        %1415 = vmatpush2.msra.mxu0 0.0
        %1416 = vmatprep.subr.mxu0 0.0
        %1417 = vmatpush2.msra.mxu0 0.0
        %1418 = vmatprep.subr.mxu0 0.0
        %1419 = vmatpush2.msra.mxu0 0.0
        %1420 = vmatprep.subr.mxu0 0.0
        %1421 = vmatpush2.msra.mxu0 0.0
        %1422 = vmatprep.subr.mxu0 0.0
        %1423 = vmatpush2.msra.mxu0 0.0
        %1424 = vmatprep.subr.mxu0 0.0
        %1425 = vmatpush2.msra.mxu0 0.0
        %1426 = vmatprep.subr.mxu0 0.0
        %1427 = vmatpush2.msra.mxu0 0.0
        %1428 = vmatprep.subr.mxu0 0.0
        %1429 = vmatpush2.msra.mxu0 0.0
        %1430 = vmatprep.subr.mxu0 0.0
        %1431 = vmatpush2.msra.mxu0 0.0
        %1432 = vmatprep.subr.mxu0 0.0
        %1433 = vmatpush2.msra.mxu0 0.0
        %1434 = vmatprep.subr.mxu0 0.0
        %1435 = vmatpush2.msra.mxu0 0.0
        %1436 = vmatprep.subr.mxu0 0.0
        %1437 = vmatpush2.msra.mxu0 0.0
        %1438 = vmatprep.subr.mxu0 0.0
        %1439 = vmatpush2.msra.mxu0 0.0
        %1440 = vmatprep.subr.mxu0 0.0
        %1441 = vmatpush2.msra.mxu0 0.0
        %1442 = vmatprep.subr.mxu0 0.0
        %1443 = vmatpush2.msra.mxu0 0.0
        %1444 = vmatprep.mubr.f32.mxu0 0.0
        %1445 = vmatmul.mubr.f32.gmra.mxu0 %v1372
        %v1446 = vpop.f32.mrf.mxu0
        %v1447 = vadd.f32 0.0, %v1446
        %v1448 = vpop.f32.mrf.mxu0
        %1449 = vmatprep.mubr.f32.mxu0 0.0
        %1450 = vmatmul.mubr.f32.gmra.mxu0 %v1375
        %v1451 = vpop.f32.mrf.mxu0
        %v1452 = vadd.f32 0.0, %v1451
        %v1453 = vpop.f32.mrf.mxu0
        %1454 = vmatprep.mubr.f32.mxu0 0.0
        %1455 = vmatmul.mubr.f32.gmra.mxu0 %v1378
        %v1456 = vpop.f32.mrf.mxu0
        %v1457 = vadd.f32 0.0, %v1456
        %v1458 = vpop.f32.mrf.mxu0
        %1459 = vdwg.mxu0
        %1460 = vrot.lane.b32.xlu0 %v1189, 120
        %v1461 = vpop.permute.xlu0 %1460
        %1462 = vrot.lane.b32.xlu0 %v1194, 120
        %v1463 = vpop.permute.xlu0 %1462
        %1464 = vrot.lane.b32.xlu0 %v1199, 120
        %v1465 = vpop.permute.xlu0 %1464
        %1466 = vrot.lane.b32.xlu0 %v1189, 88
        %v1467 = vpop.permute.xlu0 %1466
        %1468 = vrot.lane.b32.xlu0 %v1194, 88
        %v1469 = vpop.permute.xlu0 %1468
        %1470 = vrot.lane.b32.xlu0 %v1199, 88
        %v1471 = vpop.permute.xlu0 %1470
        %v1472 = vsel %vm1226, %v1461, 0
        %v1474 = vsel %vm1226, %v1463, 0
        %v1476 = vsel %vm1226, %v1465, 0
        %v1478 = vsel %vm1226, %v1467, 0
        %v1480 = vsel %vm1226, %v1469, 0
        %v1482 = vsel %vm1226, %v1471, 0
        %1484 = vmatprep.subr.mxu0 0.0
        %1485 = vmatpush1.xpose.msra.mxu0 0.0
        %1486 = vmatprep.subr.mxu0 0.0
        %1487 = vmatpush1.xpose.msra.mxu0 0.0
        %1488 = vmatprep.subr.mxu0 0.0
        %1489 = vmatpush1.xpose.msra.mxu0 0.0
        %1490 = vmatprep.subr.mxu0 0.0
        %1491 = vmatpush1.xpose.msra.mxu0 0.0
        %1492 = vmatprep.subr.mxu0 0.0
        %1493 = vmatpush1.xpose.msra.mxu0 0.0
        %1494 = vmatprep.subr.mxu0 0.0
        %1495 = vmatpush1.xpose.msra.mxu0 0.0
        %1496 = vmatprep.subr.mxu0 0.0
        %1497 = vmatpush1.xpose.msra.mxu0 0.0
        %1498 = vmatprep.subr.mxu0 0.0
        %1499 = vmatpush1.xpose.msra.mxu0 0.0
        %1500 = vmatprep.subr.mxu0 0.0
        %1501 = vmatpush1.xpose.msra.mxu0 0.0
        %1502 = vmatprep.subr.mxu0 0.0
        %1503 = vmatpush1.xpose.msra.mxu0 0.0
        %1504 = vmatprep.subr.mxu0 0.0
        %1505 = vmatpush1.xpose.msra.mxu0 0.0
        %1506 = vmatprep.subr.mxu0 0.0
        %1507 = vmatpush1.xpose.msra.mxu0 0.0
        %1508 = vmatprep.subr.mxu0 0.0
        %1509 = vmatpush1.xpose.msra.mxu0 0.0
        %1510 = vmatprep.subr.mxu0 0.0
        %1511 = vmatpush1.xpose.msra.mxu0 %v1482
        %1512 = vmatprep.subr.mxu0 0.0
        %1513 = vmatpush1.xpose.msra.mxu0 %v1480
        %1514 = vmatprep.subr.mxu0 0.0
        %1515 = vmatpush1.xpose.msra.mxu0 %v1478
        %1516 = vmatprep.subr.mxu0 0.0
        %1517 = vmatpush2.xpose.msra.mxu0 0.0
        %1518 = vmatprep.subr.mxu0 0.0
        %1519 = vmatpush2.xpose.msra.mxu0 0.0
        %1520 = vmatprep.subr.mxu0 0.0
        %1521 = vmatpush2.xpose.msra.mxu0 0.0
        %1522 = vmatprep.subr.mxu0 0.0
        %1523 = vmatpush2.xpose.msra.mxu0 0.0
        %1524 = vmatprep.subr.mxu0 0.0
        %1525 = vmatpush2.xpose.msra.mxu0 0.0
        %1526 = vmatprep.subr.mxu0 0.0
        %1527 = vmatpush2.xpose.msra.mxu0 0.0
        %1528 = vmatprep.subr.mxu0 0.0
        %1529 = vmatpush2.xpose.msra.mxu0 0.0
        %1530 = vmatprep.subr.mxu0 0.0
        %1531 = vmatpush2.xpose.msra.mxu0 0.0
        %1532 = vmatprep.subr.mxu0 0.0
        %1533 = vmatpush2.xpose.msra.mxu0 0.0
        %1534 = vmatprep.subr.mxu0 0.0
        %1535 = vmatpush2.xpose.msra.mxu0 0.0
        %1536 = vmatprep.subr.mxu0 0.0
        %1537 = vmatpush2.xpose.msra.mxu0 0.0
        %1538 = vmatprep.subr.mxu0 0.0
        %1539 = vmatpush2.xpose.msra.mxu0 0.0
        %1540 = vmatprep.subr.mxu0 0.0
        %1541 = vmatpush2.xpose.msra.mxu0 0.0
        %1542 = vmatprep.subr.mxu0 0.0
        %1543 = vmatpush2.xpose.msra.mxu0 0.0
        %1544 = vmatprep.subr.mxu0 0.0
        %1545 = vmatpush2.xpose.msra.mxu0 0.0
        %1546 = vmatprep.subr.mxu0 0.0
        %1547 = vmatpush2.xpose.msra.mxu0 0.0
        %1548 = vmatprep.mubr.f32.mxu0 0.0
        %1549 = vmatmul.mubr.f32.gmra.mxu0 %v1472
        %v1550 = vpop.f32.mrf.mxu0
        %v1551 = vadd.f32 0.0, %v1550
        %v1552 = vpop.f32.mrf.mxu0
        %1553 = vmatprep.mubr.f32.mxu0 0.0
        %1554 = vmatmul.mubr.f32.gmra.mxu0 %v1474
        %v1555 = vpop.f32.mrf.mxu0
        %v1556 = vadd.f32 0.0, %v1555
        %v1557 = vpop.f32.mrf.mxu0
        %1558 = vmatprep.mubr.f32.mxu0 0.0
        %1559 = vmatmul.mubr.f32.gmra.mxu0 %v1476
        %v1560 = vpop.f32.mrf.mxu0
        %v1561 = vadd.f32 0.0, %v1560
        %v1562 = vpop.f32.mrf.mxu0
        %1563 = vdwg.mxu0
        %v1564 = vmul.f32 %v1551, 0.35355338
        %v1565 = vmul.f32 %v1556, 0.35355338
        %v1566 = vmul.f32 %v1561, 0.35355338
        %s1567 = scalar_lea.vmem %s950, 24
        %v1568 = vld [vmem:[%s1567] sm:$0xff]
        %v1569 = vld [vmem:[%s1567 + $0x8] sm:$0xff]
        %v1570 = vld [vmem:[%s1567 + $0x10] sm:$0xff]
        %v1571 = vadd.f32 %v1564, %v1568
        %v1572 = vadd.f32 %v1565, %v1569
        %v1573 = vadd.f32 %v1566, %v1570
        %v1574 = vsel %vm1328, %v1571, -inf
        %1575 = vmax.xlane.f32.xlu0 %v1574
        %v1576 = vpop.xlane.xlu0 %1575
        %v1577 = vsel %vm1328, %v1572, -inf
        %1578 = vmax.xlane.f32.xlu0 %v1577
        %v1579 = vpop.xlane.xlu0 %1578
        %v1580 = vsel %vm1328, %v1573, -inf
        %1581 = vmax.xlane.f32.xlu0 %v1580
        %v1582 = vpop.xlane.xlu0 %1581
        %v1583 = vsub.f32 %v1571, %v1576
        %v1584 = vsub.f32 %v1572, %v1579
        %v1585 = vsub.f32 %v1573, %v1582
        %v1586 = vmul.f32 %v1583, 1.442695
        %v1587 = vpow.pop %v1586
        %v1588 = vmul.f32 %v1584, 1.442695
        %v1589 = vpow.pop %v1588
        %v1590 = vmul.f32 %v1585, 1.442695
        %v1591 = vpow.pop %v1590
        %v1592 = vsel %vm1328, %v1587, 0.0
        %1593 = vadd.xlane.f32.xlu0 %v1592
        %v1594 = vpop.xlane.xlu0 %1593
        %v1595 = vsel %vm1328, %v1589, 0.0
        %1596 = vadd.xlane.f32.xlu0 %v1595
        %v1597 = vpop.xlane.xlu0 %1596
        %v1598 = vsel %vm1328, %v1591, 0.0
        %1599 = vadd.xlane.f32.xlu0 %v1598
        %v1600 = vpop.xlane.xlu0 %1599
        %v1601 = vrcp.pop %v1594
        %v1602 = vrcp.pop %v1597
        %v1603 = vrcp.pop %v1600
        %v1604 = vmul.f32 %v1587, %v1601
        %v1605 = vmul.f32 %v1589, %v1602
        %v1606 = vmul.f32 %v1591, %v1603
        %1607 = vrot.lane.b32.xlu0 %v1189, 56
        %v1608 = vpop.permute.xlu0 %1607
        %1609 = vrot.lane.b32.xlu0 %v1194, 56
        %v1610 = vpop.permute.xlu0 %1609
        %1611 = vrot.lane.b32.xlu0 %v1199, 56
        %v1612 = vpop.permute.xlu0 %1611
        %v1617 = vsel %vm1328, %v1604, 0
        %v1620 = vsel %vm1328, %v1605, 0
        %v1623 = vsel %vm1328, %v1606, 0
        %1625 = vmatprep.subr.mxu0 0.0
        %1626 = vmatpush1.msra.mxu0 0.0
        %1627 = vmatprep.subr.mxu0 0.0
        %1628 = vmatpush1.msra.mxu0 0.0
        %1629 = vmatprep.subr.mxu0 0.0
        %1630 = vmatpush1.msra.mxu0 0.0
        %1631 = vmatprep.subr.mxu0 0.0
        %1632 = vmatpush1.msra.mxu0 0.0
        %1633 = vmatprep.subr.mxu0 0.0
        %1634 = vmatpush1.msra.mxu0 0.0
        %1635 = vmatprep.subr.mxu0 0.0
        %1636 = vmatpush1.msra.mxu0 0.0
        %1637 = vmatprep.subr.mxu0 0.0
        %1638 = vmatpush1.msra.mxu0 0.0
        %1639 = vmatprep.subr.mxu0 0.0
        %1640 = vmatpush1.msra.mxu0 0.0
        %1641 = vmatprep.subr.mxu0 0.0
        %1642 = vmatpush1.msra.mxu0 0.0
        %1643 = vmatprep.subr.mxu0 0.0
        %1644 = vmatpush1.msra.mxu0 0.0
        %1645 = vmatprep.subr.mxu0 0.0
        %1646 = vmatpush1.msra.mxu0 0.0
        %1647 = vmatprep.subr.mxu0 0.0
        %1648 = vmatpush1.msra.mxu0 0.0
        %1649 = vmatprep.subr.mxu0 0.0
        %1650 = vmatpush1.msra.mxu0 0.0
        %1651 = vmatprep.subr.mxu0 0.0
        %1652 = vmatpush1.msra.mxu0 %v1612
        %1653 = vmatprep.subr.mxu0 0.0
        %1654 = vmatpush1.msra.mxu0 %v1610
        %1655 = vmatprep.subr.mxu0 0.0
        %1656 = vmatpush1.msra.mxu0 %v1608
        %1657 = vmatprep.subr.mxu0 0.0
        %1658 = vmatpush2.msra.mxu0 0.0
        %1659 = vmatprep.subr.mxu0 0.0
        %1660 = vmatpush2.msra.mxu0 0.0
        %1661 = vmatprep.subr.mxu0 0.0
        %1662 = vmatpush2.msra.mxu0 0.0
        %1663 = vmatprep.subr.mxu0 0.0
        %1664 = vmatpush2.msra.mxu0 0.0
        %1665 = vmatprep.subr.mxu0 0.0
        %1666 = vmatpush2.msra.mxu0 0.0
        %1667 = vmatprep.subr.mxu0 0.0
        %1668 = vmatpush2.msra.mxu0 0.0
        %1669 = vmatprep.subr.mxu0 0.0
        %1670 = vmatpush2.msra.mxu0 0.0
        %1671 = vmatprep.subr.mxu0 0.0
        %1672 = vmatpush2.msra.mxu0 0.0
        %1673 = vmatprep.subr.mxu0 0.0
        %1674 = vmatpush2.msra.mxu0 0.0
        %1675 = vmatprep.subr.mxu0 0.0
        %1676 = vmatpush2.msra.mxu0 0.0
        %1677 = vmatprep.subr.mxu0 0.0
        %1678 = vmatpush2.msra.mxu0 0.0
        %1679 = vmatprep.subr.mxu0 0.0
        %1680 = vmatpush2.msra.mxu0 0.0
        %1681 = vmatprep.subr.mxu0 0.0
        %1682 = vmatpush2.msra.mxu0 0.0
        %1683 = vmatprep.subr.mxu0 0.0
        %1684 = vmatpush2.msra.mxu0 0.0
        %1685 = vmatprep.subr.mxu0 0.0
        %1686 = vmatpush2.msra.mxu0 0.0
        %1687 = vmatprep.subr.mxu0 0.0
        %1688 = vmatpush2.msra.mxu0 0.0
        %1689 = vmatprep.mubr.f32.mxu0 0.0
        %1690 = vmatmul.mubr.f32.gmra.mxu0 %v1617
        %v1691 = vpop.f32.mrf.mxu0
        %v1692 = vadd.f32 0.0, %v1691
        %v1693 = vpop.f32.mrf.mxu0
        %1694 = vmatprep.mubr.f32.mxu0 0.0
        %1695 = vmatmul.mubr.f32.gmra.mxu0 %v1620
        %v1696 = vpop.f32.mrf.mxu0
        %v1697 = vadd.f32 0.0, %v1696
        %v1698 = vpop.f32.mrf.mxu0
        %1699 = vmatprep.mubr.f32.mxu0 0.0
        %1700 = vmatmul.mubr.f32.gmra.mxu0 %v1623
        %v1701 = vpop.f32.mrf.mxu0
        %v1702 = vadd.f32 0.0, %v1701
        %v1703 = vpop.f32.mrf.mxu0
        %1704 = vdwg.mxu0
        %1705 = vrot.lane.b32.xlu0 %v1189, 112
        %v1706 = vpop.permute.xlu0 %1705
        %1707 = vrot.lane.b32.xlu0 %v1194, 112
        %v1708 = vpop.permute.xlu0 %1707
        %1709 = vrot.lane.b32.xlu0 %v1199, 112
        %v1710 = vpop.permute.xlu0 %1709
        %1711 = vrot.lane.b32.xlu0 %v1189, 80
        %v1712 = vpop.permute.xlu0 %1711
        %1713 = vrot.lane.b32.xlu0 %v1194, 80
        %v1714 = vpop.permute.xlu0 %1713
        %1715 = vrot.lane.b32.xlu0 %v1199, 80
        %v1716 = vpop.permute.xlu0 %1715
        %v1717 = vsel %vm1226, %v1706, 0
        %v1719 = vsel %vm1226, %v1708, 0
        %v1721 = vsel %vm1226, %v1710, 0
        %v1723 = vsel %vm1226, %v1712, 0
        %v1725 = vsel %vm1226, %v1714, 0
        %v1727 = vsel %vm1226, %v1716, 0
        %1729 = vmatprep.subr.mxu0 0.0
        %1730 = vmatpush1.xpose.msra.mxu0 0.0
        %1731 = vmatprep.subr.mxu0 0.0
        %1732 = vmatpush1.xpose.msra.mxu0 0.0
        %1733 = vmatprep.subr.mxu0 0.0
        %1734 = vmatpush1.xpose.msra.mxu0 0.0
        %1735 = vmatprep.subr.mxu0 0.0
        %1736 = vmatpush1.xpose.msra.mxu0 0.0
        %1737 = vmatprep.subr.mxu0 0.0
        %1738 = vmatpush1.xpose.msra.mxu0 0.0
        %1739 = vmatprep.subr.mxu0 0.0
        %1740 = vmatpush1.xpose.msra.mxu0 0.0
        %1741 = vmatprep.subr.mxu0 0.0
        %1742 = vmatpush1.xpose.msra.mxu0 0.0
        %1743 = vmatprep.subr.mxu0 0.0
        %1744 = vmatpush1.xpose.msra.mxu0 0.0
        %1745 = vmatprep.subr.mxu0 0.0
        %1746 = vmatpush1.xpose.msra.mxu0 0.0
        %1747 = vmatprep.subr.mxu0 0.0
        %1748 = vmatpush1.xpose.msra.mxu0 0.0
        %1749 = vmatprep.subr.mxu0 0.0
        %1750 = vmatpush1.xpose.msra.mxu0 0.0
        %1751 = vmatprep.subr.mxu0 0.0
        %1752 = vmatpush1.xpose.msra.mxu0 0.0
        %1753 = vmatprep.subr.mxu0 0.0
        %1754 = vmatpush1.xpose.msra.mxu0 0.0
        %1755 = vmatprep.subr.mxu0 0.0
        %1756 = vmatpush1.xpose.msra.mxu0 %v1727
        %1757 = vmatprep.subr.mxu0 0.0
        %1758 = vmatpush1.xpose.msra.mxu0 %v1725
        %1759 = vmatprep.subr.mxu0 0.0
        %1760 = vmatpush1.xpose.msra.mxu0 %v1723
        %1761 = vmatprep.subr.mxu0 0.0
        %1762 = vmatpush2.xpose.msra.mxu0 0.0
        %1763 = vmatprep.subr.mxu0 0.0
        %1764 = vmatpush2.xpose.msra.mxu0 0.0
        %1765 = vmatprep.subr.mxu0 0.0
        %1766 = vmatpush2.xpose.msra.mxu0 0.0
        %1767 = vmatprep.subr.mxu0 0.0
        %1768 = vmatpush2.xpose.msra.mxu0 0.0
        %1769 = vmatprep.subr.mxu0 0.0
        %1770 = vmatpush2.xpose.msra.mxu0 0.0
        %1771 = vmatprep.subr.mxu0 0.0
        %1772 = vmatpush2.xpose.msra.mxu0 0.0
        %1773 = vmatprep.subr.mxu0 0.0
        %1774 = vmatpush2.xpose.msra.mxu0 0.0
        %1775 = vmatprep.subr.mxu0 0.0
        %1776 = vmatpush2.xpose.msra.mxu0 0.0
        %1777 = vmatprep.subr.mxu0 0.0
        %1778 = vmatpush2.xpose.msra.mxu0 0.0
        %1779 = vmatprep.subr.mxu0 0.0
        %1780 = vmatpush2.xpose.msra.mxu0 0.0
        %1781 = vmatprep.subr.mxu0 0.0
        %1782 = vmatpush2.xpose.msra.mxu0 0.0
        %1783 = vmatprep.subr.mxu0 0.0
        %1784 = vmatpush2.xpose.msra.mxu0 0.0
        %1785 = vmatprep.subr.mxu0 0.0
        %1786 = vmatpush2.xpose.msra.mxu0 0.0
        %1787 = vmatprep.subr.mxu0 0.0
        %1788 = vmatpush2.xpose.msra.mxu0 0.0
        %1789 = vmatprep.subr.mxu0 0.0
        %1790 = vmatpush2.xpose.msra.mxu0 0.0
        %1791 = vmatprep.subr.mxu0 0.0
        %1792 = vmatpush2.xpose.msra.mxu0 0.0
        %1793 = vmatprep.mubr.f32.mxu0 0.0
        %1794 = vmatmul.mubr.f32.gmra.mxu0 %v1717
        %v1795 = vpop.f32.mrf.mxu0
        %v1796 = vadd.f32 0.0, %v1795
        %v1797 = vpop.f32.mrf.mxu0
        %1798 = vmatprep.mubr.f32.mxu0 0.0
        %1799 = vmatmul.mubr.f32.gmra.mxu0 %v1719
        %v1800 = vpop.f32.mrf.mxu0
        %v1801 = vadd.f32 0.0, %v1800
        %v1802 = vpop.f32.mrf.mxu0
        %1803 = vmatprep.mubr.f32.mxu0 0.0
        %1804 = vmatmul.mubr.f32.gmra.mxu0 %v1721
        %v1805 = vpop.f32.mrf.mxu0
        %v1806 = vadd.f32 0.0, %v1805
        %v1807 = vpop.f32.mrf.mxu0
        %1808 = vdwg.mxu0
        %v1809 = vmul.f32 %v1796, 0.35355338
        %v1810 = vmul.f32 %v1801, 0.35355338
        %v1811 = vmul.f32 %v1806, 0.35355338
        %s1812 = scalar_lea.vmem %s950, 48
        %v1813 = vld [vmem:[%s1812] sm:$0xff]
        %v1814 = vld [vmem:[%s1812 + $0x8] sm:$0xff]
        %v1815 = vld [vmem:[%s1812 + $0x10] sm:$0xff]
        %v1816 = vadd.f32 %v1809, %v1813
        %v1817 = vadd.f32 %v1810, %v1814
        %v1818 = vadd.f32 %v1811, %v1815
        %v1819 = vsel %vm1328, %v1816, -inf
        %1820 = vmax.xlane.f32.xlu0 %v1819
        %v1821 = vpop.xlane.xlu0 %1820
        %v1822 = vsel %vm1328, %v1817, -inf
        %1823 = vmax.xlane.f32.xlu0 %v1822
        %v1824 = vpop.xlane.xlu0 %1823
        %v1825 = vsel %vm1328, %v1818, -inf
        %1826 = vmax.xlane.f32.xlu0 %v1825
        %v1827 = vpop.xlane.xlu0 %1826
        %v1828 = vsub.f32 %v1816, %v1821
        %v1829 = vsub.f32 %v1817, %v1824
        %v1830 = vsub.f32 %v1818, %v1827
        %v1831 = vmul.f32 %v1828, 1.442695
        %v1832 = vpow.pop %v1831
        %v1833 = vmul.f32 %v1829, 1.442695
        %v1834 = vpow.pop %v1833
        %v1835 = vmul.f32 %v1830, 1.442695
        %v1836 = vpow.pop %v1835
        %v1837 = vsel %vm1328, %v1832, 0.0
        %1838 = vadd.xlane.f32.xlu0 %v1837
        %v1839 = vpop.xlane.xlu0 %1838
        %v1840 = vsel %vm1328, %v1834, 0.0
        %1841 = vadd.xlane.f32.xlu0 %v1840
        %v1842 = vpop.xlane.xlu0 %1841
        %v1843 = vsel %vm1328, %v1836, 0.0
        %1844 = vadd.xlane.f32.xlu0 %v1843
        %v1845 = vpop.xlane.xlu0 %1844
        %v1846 = vrcp.pop %v1839
        %v1847 = vrcp.pop %v1842
        %v1848 = vrcp.pop %v1845
        %v1849 = vmul.f32 %v1832, %v1846
        %v1850 = vmul.f32 %v1834, %v1847
        %v1851 = vmul.f32 %v1836, %v1848
        %1852 = vrot.lane.b32.xlu0 %v1189, 48
        %v1853 = vpop.permute.xlu0 %1852
        %1854 = vrot.lane.b32.xlu0 %v1194, 48
        %v1855 = vpop.permute.xlu0 %1854
        %1856 = vrot.lane.b32.xlu0 %v1199, 48
        %v1857 = vpop.permute.xlu0 %1856
        %v1862 = vsel %vm1328, %v1849, 0
        %v1865 = vsel %vm1328, %v1850, 0
        %v1868 = vsel %vm1328, %v1851, 0
        %1870 = vmatprep.subr.mxu0 0.0
        %1871 = vmatpush1.msra.mxu0 0.0
        %1872 = vmatprep.subr.mxu0 0.0
        %1873 = vmatpush1.msra.mxu0 0.0
        %1874 = vmatprep.subr.mxu0 0.0
        %1875 = vmatpush1.msra.mxu0 0.0
        %1876 = vmatprep.subr.mxu0 0.0
        %1877 = vmatpush1.msra.mxu0 0.0
        %1878 = vmatprep.subr.mxu0 0.0
        %1879 = vmatpush1.msra.mxu0 0.0
        %1880 = vmatprep.subr.mxu0 0.0
        %1881 = vmatpush1.msra.mxu0 0.0
        %1882 = vmatprep.subr.mxu0 0.0
        %1883 = vmatpush1.msra.mxu0 0.0
        %1884 = vmatprep.subr.mxu0 0.0
        %1885 = vmatpush1.msra.mxu0 0.0
        %1886 = vmatprep.subr.mxu0 0.0
        %1887 = vmatpush1.msra.mxu0 0.0
        %1888 = vmatprep.subr.mxu0 0.0
        %1889 = vmatpush1.msra.mxu0 0.0
        %1890 = vmatprep.subr.mxu0 0.0
        %1891 = vmatpush1.msra.mxu0 0.0
        %1892 = vmatprep.subr.mxu0 0.0
        %1893 = vmatpush1.msra.mxu0 0.0
        %1894 = vmatprep.subr.mxu0 0.0
        %1895 = vmatpush1.msra.mxu0 0.0
        %1896 = vmatprep.subr.mxu0 0.0
        %1897 = vmatpush1.msra.mxu0 %v1857
        %1898 = vmatprep.subr.mxu0 0.0
        %1899 = vmatpush1.msra.mxu0 %v1855
        %1900 = vmatprep.subr.mxu0 0.0
        %1901 = vmatpush1.msra.mxu0 %v1853
        %1902 = vmatprep.subr.mxu0 0.0
        %1903 = vmatpush2.msra.mxu0 0.0
        %1904 = vmatprep.subr.mxu0 0.0
        %1905 = vmatpush2.msra.mxu0 0.0
        %1906 = vmatprep.subr.mxu0 0.0
        %1907 = vmatpush2.msra.mxu0 0.0
        %1908 = vmatprep.subr.mxu0 0.0
        %1909 = vmatpush2.msra.mxu0 0.0
        %1910 = vmatprep.subr.mxu0 0.0
        %1911 = vmatpush2.msra.mxu0 0.0
        %1912 = vmatprep.subr.mxu0 0.0
        %1913 = vmatpush2.msra.mxu0 0.0
        %1914 = vmatprep.subr.mxu0 0.0
        %1915 = vmatpush2.msra.mxu0 0.0
        %1916 = vmatprep.subr.mxu0 0.0
        %1917 = vmatpush2.msra.mxu0 0.0
        %1918 = vmatprep.subr.mxu0 0.0
        %1919 = vmatpush2.msra.mxu0 0.0
        %1920 = vmatprep.subr.mxu0 0.0
        %1921 = vmatpush2.msra.mxu0 0.0
        %1922 = vmatprep.subr.mxu0 0.0
        %1923 = vmatpush2.msra.mxu0 0.0
        %1924 = vmatprep.subr.mxu0 0.0
        %1925 = vmatpush2.msra.mxu0 0.0
        %1926 = vmatprep.subr.mxu0 0.0
        %1927 = vmatpush2.msra.mxu0 0.0
        %1928 = vmatprep.subr.mxu0 0.0
        %1929 = vmatpush2.msra.mxu0 0.0
        %1930 = vmatprep.subr.mxu0 0.0
        %1931 = vmatpush2.msra.mxu0 0.0
        %1932 = vmatprep.subr.mxu0 0.0
        %1933 = vmatpush2.msra.mxu0 0.0
        %1934 = vmatprep.mubr.f32.mxu0 0.0
        %1935 = vmatmul.mubr.f32.gmra.mxu0 %v1862
        %v1936 = vpop.f32.mrf.mxu0
        %v1937 = vadd.f32 0.0, %v1936
        %v1938 = vpop.f32.mrf.mxu0
        %1939 = vmatprep.mubr.f32.mxu0 0.0
        %1940 = vmatmul.mubr.f32.gmra.mxu0 %v1865
        %v1941 = vpop.f32.mrf.mxu0
        %v1942 = vadd.f32 0.0, %v1941
        %v1943 = vpop.f32.mrf.mxu0
        %1944 = vmatprep.mubr.f32.mxu0 0.0
        %1945 = vmatmul.mubr.f32.gmra.mxu0 %v1868
        %v1946 = vpop.f32.mrf.mxu0
        %v1947 = vadd.f32 0.0, %v1946
        %v1948 = vpop.f32.mrf.mxu0
        %1949 = vdwg.mxu0
        %1950 = vrot.lane.b32.xlu0 %v1189, 104
        %v1951 = vpop.permute.xlu0 %1950
        %1952 = vrot.lane.b32.xlu0 %v1194, 104
        %v1953 = vpop.permute.xlu0 %1952
        %1954 = vrot.lane.b32.xlu0 %v1199, 104
        %v1955 = vpop.permute.xlu0 %1954
        %1956 = vrot.lane.b32.xlu0 %v1189, 72
        %v1957 = vpop.permute.xlu0 %1956
        %1958 = vrot.lane.b32.xlu0 %v1194, 72
        %v1959 = vpop.permute.xlu0 %1958
        %1960 = vrot.lane.b32.xlu0 %v1199, 72
        %v1961 = vpop.permute.xlu0 %1960
        %v1962 = vsel %vm1226, %v1951, 0
        %v1964 = vsel %vm1226, %v1953, 0
        %v1966 = vsel %vm1226, %v1955, 0
        %v1968 = vsel %vm1226, %v1957, 0
        %v1970 = vsel %vm1226, %v1959, 0
        %v1972 = vsel %vm1226, %v1961, 0
        %1974 = vmatprep.subr.mxu0 0.0
        %1975 = vmatpush1.xpose.msra.mxu0 0.0
        %1976 = vmatprep.subr.mxu0 0.0
        %1977 = vmatpush1.xpose.msra.mxu0 0.0
        %1978 = vmatprep.subr.mxu0 0.0
        %1979 = vmatpush1.xpose.msra.mxu0 0.0
        %1980 = vmatprep.subr.mxu0 0.0
        %1981 = vmatpush1.xpose.msra.mxu0 0.0
        %1982 = vmatprep.subr.mxu0 0.0
        %1983 = vmatpush1.xpose.msra.mxu0 0.0
        %1984 = vmatprep.subr.mxu0 0.0
        %1985 = vmatpush1.xpose.msra.mxu0 0.0
        %1986 = vmatprep.subr.mxu0 0.0
        %1987 = vmatpush1.xpose.msra.mxu0 0.0
        %1988 = vmatprep.subr.mxu0 0.0
        %1989 = vmatpush1.xpose.msra.mxu0 0.0
        %1990 = vmatprep.subr.mxu0 0.0
        %1991 = vmatpush1.xpose.msra.mxu0 0.0
        %1992 = vmatprep.subr.mxu0 0.0
        %1993 = vmatpush1.xpose.msra.mxu0 0.0
        %1994 = vmatprep.subr.mxu0 0.0
        %1995 = vmatpush1.xpose.msra.mxu0 0.0
        %1996 = vmatprep.subr.mxu0 0.0
        %1997 = vmatpush1.xpose.msra.mxu0 0.0
        %1998 = vmatprep.subr.mxu0 0.0
        %1999 = vmatpush1.xpose.msra.mxu0 0.0
        %2000 = vmatprep.subr.mxu0 0.0
        %2001 = vmatpush1.xpose.msra.mxu0 %v1972
        %2002 = vmatprep.subr.mxu0 0.0
        %2003 = vmatpush1.xpose.msra.mxu0 %v1970
        %2004 = vmatprep.subr.mxu0 0.0
        %2005 = vmatpush1.xpose.msra.mxu0 %v1968
        %2006 = vmatprep.subr.mxu0 0.0
        %2007 = vmatpush2.xpose.msra.mxu0 0.0
        %2008 = vmatprep.subr.mxu0 0.0
        %2009 = vmatpush2.xpose.msra.mxu0 0.0
        %2010 = vmatprep.subr.mxu0 0.0
        %2011 = vmatpush2.xpose.msra.mxu0 0.0
        %2012 = vmatprep.subr.mxu0 0.0
        %2013 = vmatpush2.xpose.msra.mxu0 0.0
        %2014 = vmatprep.subr.mxu0 0.0
        %2015 = vmatpush2.xpose.msra.mxu0 0.0
        %2016 = vmatprep.subr.mxu0 0.0
        %2017 = vmatpush2.xpose.msra.mxu0 0.0
        %2018 = vmatprep.subr.mxu0 0.0
        %2019 = vmatpush2.xpose.msra.mxu0 0.0
        %2020 = vmatprep.subr.mxu0 0.0
        %2021 = vmatpush2.xpose.msra.mxu0 0.0
        %2022 = vmatprep.subr.mxu0 0.0
        %2023 = vmatpush2.xpose.msra.mxu0 0.0
        %2024 = vmatprep.subr.mxu0 0.0
        %2025 = vmatpush2.xpose.msra.mxu0 0.0
        %2026 = vmatprep.subr.mxu0 0.0
        %2027 = vmatpush2.xpose.msra.mxu0 0.0
        %2028 = vmatprep.subr.mxu0 0.0
        %2029 = vmatpush2.xpose.msra.mxu0 0.0
        %2030 = vmatprep.subr.mxu0 0.0
        %2031 = vmatpush2.xpose.msra.mxu0 0.0
        %2032 = vmatprep.subr.mxu0 0.0
        %2033 = vmatpush2.xpose.msra.mxu0 0.0
        %2034 = vmatprep.subr.mxu0 0.0
        %2035 = vmatpush2.xpose.msra.mxu0 0.0
        %2036 = vmatprep.subr.mxu0 0.0
        %2037 = vmatpush2.xpose.msra.mxu0 0.0
        %2038 = vmatprep.mubr.f32.mxu0 0.0
        %2039 = vmatmul.mubr.f32.gmra.mxu0 %v1962
        %v2040 = vpop.f32.mrf.mxu0
        %v2041 = vadd.f32 0.0, %v2040
        %v2042 = vpop.f32.mrf.mxu0
        %2043 = vmatprep.mubr.f32.mxu0 0.0
        %2044 = vmatmul.mubr.f32.gmra.mxu0 %v1964
        %v2045 = vpop.f32.mrf.mxu0
        %v2046 = vadd.f32 0.0, %v2045
        %v2047 = vpop.f32.mrf.mxu0
        %2048 = vmatprep.mubr.f32.mxu0 0.0
        %2049 = vmatmul.mubr.f32.gmra.mxu0 %v1966
        %v2050 = vpop.f32.mrf.mxu0
        %v2051 = vadd.f32 0.0, %v2050
        %v2052 = vpop.f32.mrf.mxu0
        %2053 = vdwg.mxu0
        %v2054 = vmul.f32 %v2041, 0.35355338
        %v2055 = vmul.f32 %v2046, 0.35355338
        %v2056 = vmul.f32 %v2051, 0.35355338
        %s2057 = scalar_lea.vmem %s950, 72
        %v2058 = vld [vmem:[%s2057] sm:$0xff]
        %v2059 = vld [vmem:[%s2057 + $0x8] sm:$0xff]
        %v2060 = vld [vmem:[%s2057 + $0x10] sm:$0xff]
        %v2061 = vadd.f32 %v2054, %v2058
        %v2062 = vadd.f32 %v2055, %v2059
        %v2063 = vadd.f32 %v2056, %v2060
        %v2064 = vsel %vm1328, %v2061, -inf
        %2065 = vmax.xlane.f32.xlu0 %v2064
        %v2066 = vpop.xlane.xlu0 %2065
        %v2067 = vsel %vm1328, %v2062, -inf
        %2068 = vmax.xlane.f32.xlu0 %v2067
        %v2069 = vpop.xlane.xlu0 %2068
        %v2070 = vsel %vm1328, %v2063, -inf
        %2071 = vmax.xlane.f32.xlu0 %v2070
        %v2072 = vpop.xlane.xlu0 %2071
        %v2073 = vsub.f32 %v2061, %v2066
        %v2074 = vsub.f32 %v2062, %v2069
        %v2075 = vsub.f32 %v2063, %v2072
        %v2076 = vmul.f32 %v2073, 1.442695
        %v2077 = vpow.pop %v2076
        %v2078 = vmul.f32 %v2074, 1.442695
        %v2079 = vpow.pop %v2078
        %v2080 = vmul.f32 %v2075, 1.442695
        %v2081 = vpow.pop %v2080
        %v2082 = vsel %vm1328, %v2077, 0.0
        %2083 = vadd.xlane.f32.xlu0 %v2082
        %v2084 = vpop.xlane.xlu0 %2083
        %v2085 = vsel %vm1328, %v2079, 0.0
        %2086 = vadd.xlane.f32.xlu0 %v2085
        %v2087 = vpop.xlane.xlu0 %2086
        %v2088 = vsel %vm1328, %v2081, 0.0
        %2089 = vadd.xlane.f32.xlu0 %v2088
        %v2090 = vpop.xlane.xlu0 %2089
        %v2091 = vrcp.pop %v2084
        %v2092 = vrcp.pop %v2087
        %v2093 = vrcp.pop %v2090
        %v2094 = vmul.f32 %v2077, %v2091
        %v2095 = vmul.f32 %v2079, %v2092
        %v2096 = vmul.f32 %v2081, %v2093
        %2097 = vrot.lane.b32.xlu0 %v1189, 40
        %v2098 = vpop.permute.xlu0 %2097
        %2099 = vrot.lane.b32.xlu0 %v1194, 40
        %v2100 = vpop.permute.xlu0 %2099
        %2101 = vrot.lane.b32.xlu0 %v1199, 40
        %v2102 = vpop.permute.xlu0 %2101
        %v2107 = vsel %vm1328, %v2094, 0
        %v2110 = vsel %vm1328, %v2095, 0
        %v2113 = vsel %vm1328, %v2096, 0
        %2115 = vmatprep.subr.mxu0 0.0
        %2116 = vmatpush1.msra.mxu0 0.0
        %2117 = vmatprep.subr.mxu0 0.0
        %2118 = vmatpush1.msra.mxu0 0.0
        %2119 = vmatprep.subr.mxu0 0.0
        %2120 = vmatpush1.msra.mxu0 0.0
        %2121 = vmatprep.subr.mxu0 0.0
        %2122 = vmatpush1.msra.mxu0 0.0
        %2123 = vmatprep.subr.mxu0 0.0
        %2124 = vmatpush1.msra.mxu0 0.0
        %2125 = vmatprep.subr.mxu0 0.0
        %2126 = vmatpush1.msra.mxu0 0.0
        %2127 = vmatprep.subr.mxu0 0.0
        %2128 = vmatpush1.msra.mxu0 0.0
        %2129 = vmatprep.subr.mxu0 0.0
        %2130 = vmatpush1.msra.mxu0 0.0
        %2131 = vmatprep.subr.mxu0 0.0
        %2132 = vmatpush1.msra.mxu0 0.0
        %2133 = vmatprep.subr.mxu0 0.0
        %2134 = vmatpush1.msra.mxu0 0.0
        %2135 = vmatprep.subr.mxu0 0.0
        %2136 = vmatpush1.msra.mxu0 0.0
        %2137 = vmatprep.subr.mxu0 0.0
        %2138 = vmatpush1.msra.mxu0 0.0
        %2139 = vmatprep.subr.mxu0 0.0
        %2140 = vmatpush1.msra.mxu0 0.0
        %2141 = vmatprep.subr.mxu0 0.0
        %2142 = vmatpush1.msra.mxu0 %v2102
        %2143 = vmatprep.subr.mxu0 0.0
        %2144 = vmatpush1.msra.mxu0 %v2100
        %2145 = vmatprep.subr.mxu0 0.0
        %2146 = vmatpush1.msra.mxu0 %v2098
        %2147 = vmatprep.subr.mxu0 0.0
        %2148 = vmatpush2.msra.mxu0 0.0
        %2149 = vmatprep.subr.mxu0 0.0
        %2150 = vmatpush2.msra.mxu0 0.0
        %2151 = vmatprep.subr.mxu0 0.0
        %2152 = vmatpush2.msra.mxu0 0.0
        %2153 = vmatprep.subr.mxu0 0.0
        %2154 = vmatpush2.msra.mxu0 0.0
        %2155 = vmatprep.subr.mxu0 0.0
        %2156 = vmatpush2.msra.mxu0 0.0
        %2157 = vmatprep.subr.mxu0 0.0
        %2158 = vmatpush2.msra.mxu0 0.0
        %2159 = vmatprep.subr.mxu0 0.0
        %2160 = vmatpush2.msra.mxu0 0.0
        %2161 = vmatprep.subr.mxu0 0.0
        %2162 = vmatpush2.msra.mxu0 0.0
        %2163 = vmatprep.subr.mxu0 0.0
        %2164 = vmatpush2.msra.mxu0 0.0
        %2165 = vmatprep.subr.mxu0 0.0
        %2166 = vmatpush2.msra.mxu0 0.0
        %2167 = vmatprep.subr.mxu0 0.0
        %2168 = vmatpush2.msra.mxu0 0.0
        %2169 = vmatprep.subr.mxu0 0.0
        %2170 = vmatpush2.msra.mxu0 0.0
        %2171 = vmatprep.subr.mxu0 0.0
        %2172 = vmatpush2.msra.mxu0 0.0
        %2173 = vmatprep.subr.mxu0 0.0
        %2174 = vmatpush2.msra.mxu0 0.0
        %2175 = vmatprep.subr.mxu0 0.0
        %2176 = vmatpush2.msra.mxu0 0.0
        %2177 = vmatprep.subr.mxu0 0.0
        %2178 = vmatpush2.msra.mxu0 0.0
        %2179 = vmatprep.mubr.f32.mxu0 0.0
        %2180 = vmatmul.mubr.f32.gmra.mxu0 %v2107
        %v2181 = vpop.f32.mrf.mxu0
        %v2182 = vadd.f32 0.0, %v2181
        %v2183 = vpop.f32.mrf.mxu0
        %2184 = vmatprep.mubr.f32.mxu0 0.0
        %2185 = vmatmul.mubr.f32.gmra.mxu0 %v2110
        %v2186 = vpop.f32.mrf.mxu0
        %v2187 = vadd.f32 0.0, %v2186
        %v2188 = vpop.f32.mrf.mxu0
        %2189 = vmatprep.mubr.f32.mxu0 0.0
        %2190 = vmatmul.mubr.f32.gmra.mxu0 %v2113
        %v2191 = vpop.f32.mrf.mxu0
        %v2192 = vadd.f32 0.0, %v2191
        %v2193 = vpop.f32.mrf.mxu0
        %2194 = vdwg.mxu0
        %2198 = vrot.lane.b32.xlu0 %v1692, 8
        %v2199 = vpop.permute.xlu0 %2198
        %2200 = vrot.lane.b32.xlu0 %v1697, 8
        %v2201 = vpop.permute.xlu0 %2200
        %2202 = vrot.lane.b32.xlu0 %v1702, 8
        %v2203 = vpop.permute.xlu0 %2202
        %2210 = vrot.lane.b32.xlu0 %v1937, 16
        %v2211 = vpop.permute.xlu0 %2210
        %2212 = vrot.lane.b32.xlu0 %v1942, 16
        %v2213 = vpop.permute.xlu0 %2212
        %2214 = vrot.lane.b32.xlu0 %v1947, 16
        %v2215 = vpop.permute.xlu0 %2214
        %2222 = vrot.lane.b32.xlu0 %v2182, 24
        %v2223 = vpop.permute.xlu0 %2222
        %2224 = vrot.lane.b32.xlu0 %v2187, 24
        %v2225 = vpop.permute.xlu0 %2224
        %2226 = vrot.lane.b32.xlu0 %v2192, 24
        %v2227 = vpop.permute.xlu0 %2226
        %v2231 = vsel %vm1226, %v1447, %v2199
        %v2232 = vsel %vm1226, %v1452, %v2201
        %v2233 = vsel %vm1226, %v1457, %v2203
        %vm2234 = vcmask 130048
        %v2235 = vsel %vm2234, %v2231, %v2211
        %v2236 = vsel %vm2234, %v2232, %v2213
        %v2237 = vsel %vm2234, %v2233, %v2215
        %v2238 = vsel %vm1328, %v2235, %v2223
        %v2239 = vsel %vm1328, %v2236, %v2225
        %v2240 = vsel %vm1328, %v2237, %v2227
        %2244 = vrot.lane.b32.xlu0 %v1204, 96
        %v2245 = vpop.permute.xlu0 %2244
        %2246 = vrot.lane.b32.xlu0 %v1209, 96
        %v2247 = vpop.permute.xlu0 %2246
        %2248 = vrot.lane.b32.xlu0 %v1214, 96
        %v2249 = vpop.permute.xlu0 %2248
        %v2250 = vsel %vm1226, %v1204, 0
        %v2252 = vsel %vm1226, %v1209, 0
        %v2254 = vsel %vm1226, %v1214, 0
        %v2256 = vsel %vm1226, %v2245, 0
        %v2258 = vsel %vm1226, %v2247, 0
        %v2260 = vsel %vm1226, %v2249, 0
        %2262 = vmatprep.subr.mxu0 0.0
        %2263 = vmatpush1.xpose.msra.mxu0 0.0
        %2264 = vmatprep.subr.mxu0 0.0
        %2265 = vmatpush1.xpose.msra.mxu0 0.0
        %2266 = vmatprep.subr.mxu0 0.0
        %2267 = vmatpush1.xpose.msra.mxu0 0.0
        %2268 = vmatprep.subr.mxu0 0.0
        %2269 = vmatpush1.xpose.msra.mxu0 0.0
        %2270 = vmatprep.subr.mxu0 0.0
        %2271 = vmatpush1.xpose.msra.mxu0 0.0
        %2272 = vmatprep.subr.mxu0 0.0
        %2273 = vmatpush1.xpose.msra.mxu0 0.0
        %2274 = vmatprep.subr.mxu0 0.0
        %2275 = vmatpush1.xpose.msra.mxu0 0.0
        %2276 = vmatprep.subr.mxu0 0.0
        %2277 = vmatpush1.xpose.msra.mxu0 0.0
        %2278 = vmatprep.subr.mxu0 0.0
        %2279 = vmatpush1.xpose.msra.mxu0 0.0
        %2280 = vmatprep.subr.mxu0 0.0
        %2281 = vmatpush1.xpose.msra.mxu0 0.0
        %2282 = vmatprep.subr.mxu0 0.0
        %2283 = vmatpush1.xpose.msra.mxu0 0.0
        %2284 = vmatprep.subr.mxu0 0.0
        %2285 = vmatpush1.xpose.msra.mxu0 0.0
        %2286 = vmatprep.subr.mxu0 0.0
        %2287 = vmatpush1.xpose.msra.mxu0 0.0
        %2288 = vmatprep.subr.mxu0 0.0
        %2289 = vmatpush1.xpose.msra.mxu0 %v2260
        %2290 = vmatprep.subr.mxu0 0.0
        %2291 = vmatpush1.xpose.msra.mxu0 %v2258
        %2292 = vmatprep.subr.mxu0 0.0
        %2293 = vmatpush1.xpose.msra.mxu0 %v2256
        %2294 = vmatprep.subr.mxu0 0.0
        %2295 = vmatpush2.xpose.msra.mxu0 0.0
        %2296 = vmatprep.subr.mxu0 0.0
        %2297 = vmatpush2.xpose.msra.mxu0 0.0
        %2298 = vmatprep.subr.mxu0 0.0
        %2299 = vmatpush2.xpose.msra.mxu0 0.0
        %2300 = vmatprep.subr.mxu0 0.0
        %2301 = vmatpush2.xpose.msra.mxu0 0.0
        %2302 = vmatprep.subr.mxu0 0.0
        %2303 = vmatpush2.xpose.msra.mxu0 0.0
        %2304 = vmatprep.subr.mxu0 0.0
        %2305 = vmatpush2.xpose.msra.mxu0 0.0
        %2306 = vmatprep.subr.mxu0 0.0
        %2307 = vmatpush2.xpose.msra.mxu0 0.0
        %2308 = vmatprep.subr.mxu0 0.0
        %2309 = vmatpush2.xpose.msra.mxu0 0.0
        %2310 = vmatprep.subr.mxu0 0.0
        %2311 = vmatpush2.xpose.msra.mxu0 0.0
        %2312 = vmatprep.subr.mxu0 0.0
        %2313 = vmatpush2.xpose.msra.mxu0 0.0
        %2314 = vmatprep.subr.mxu0 0.0
        %2315 = vmatpush2.xpose.msra.mxu0 0.0
        %2316 = vmatprep.subr.mxu0 0.0
        %2317 = vmatpush2.xpose.msra.mxu0 0.0
        %2318 = vmatprep.subr.mxu0 0.0
        %2319 = vmatpush2.xpose.msra.mxu0 0.0
        %2320 = vmatprep.subr.mxu0 0.0
        %2321 = vmatpush2.xpose.msra.mxu0 0.0
        %2322 = vmatprep.subr.mxu0 0.0
        %2323 = vmatpush2.xpose.msra.mxu0 0.0
        %2324 = vmatprep.subr.mxu0 0.0
        %2325 = vmatpush2.xpose.msra.mxu0 0.0
        %2326 = vmatprep.mubr.f32.mxu0 0.0
        %2327 = vmatmul.mubr.f32.gmra.mxu0 %v2250
        %v2328 = vpop.f32.mrf.mxu0
        %v2329 = vadd.f32 0.0, %v2328
        %v2330 = vpop.f32.mrf.mxu0
        %2331 = vmatprep.mubr.f32.mxu0 0.0
        %2332 = vmatmul.mubr.f32.gmra.mxu0 %v2252
        %v2333 = vpop.f32.mrf.mxu0
        %v2334 = vadd.f32 0.0, %v2333
        %v2335 = vpop.f32.mrf.mxu0
        %2336 = vmatprep.mubr.f32.mxu0 0.0
        %2337 = vmatmul.mubr.f32.gmra.mxu0 %v2254
        %v2338 = vpop.f32.mrf.mxu0
        %v2339 = vadd.f32 0.0, %v2338
        %v2340 = vpop.f32.mrf.mxu0
        %2341 = vdwg.mxu0
        %v2342 = vmul.f32 %v2329, 0.35355338
        %v2343 = vmul.f32 %v2334, 0.35355338
        %v2344 = vmul.f32 %v2339, 0.35355338
        %v2345 = vadd.f32 %v2342, %v1322
        %v2346 = vadd.f32 %v2343, %v1323
        %v2347 = vadd.f32 %v2344, %v1324
        %v2348 = vsel %vm1328, %v2345, -inf
        %2349 = vmax.xlane.f32.xlu0 %v2348
        %v2350 = vpop.xlane.xlu0 %2349
        %v2351 = vsel %vm1328, %v2346, -inf
        %2352 = vmax.xlane.f32.xlu0 %v2351
        %v2353 = vpop.xlane.xlu0 %2352
        %v2354 = vsel %vm1328, %v2347, -inf
        %2355 = vmax.xlane.f32.xlu0 %v2354
        %v2356 = vpop.xlane.xlu0 %2355
        %v2357 = vsub.f32 %v2345, %v2350
        %v2358 = vsub.f32 %v2346, %v2353
        %v2359 = vsub.f32 %v2347, %v2356
        %v2360 = vmul.f32 %v2357, 1.442695
        %v2361 = vpow.pop %v2360
        %v2362 = vmul.f32 %v2358, 1.442695
        %v2363 = vpow.pop %v2362
        %v2364 = vmul.f32 %v2359, 1.442695
        %v2365 = vpow.pop %v2364
        %v2366 = vsel %vm1328, %v2361, 0.0
        %2367 = vadd.xlane.f32.xlu0 %v2366
        %v2368 = vpop.xlane.xlu0 %2367
        %v2369 = vsel %vm1328, %v2363, 0.0
        %2370 = vadd.xlane.f32.xlu0 %v2369
        %v2371 = vpop.xlane.xlu0 %2370
        %v2372 = vsel %vm1328, %v2365, 0.0
        %2373 = vadd.xlane.f32.xlu0 %v2372
        %v2374 = vpop.xlane.xlu0 %2373
        %v2375 = vrcp.pop %v2368
        %v2376 = vrcp.pop %v2371
        %v2377 = vrcp.pop %v2374
        %v2378 = vmul.f32 %v2361, %v2375
        %v2379 = vmul.f32 %v2363, %v2376
        %v2380 = vmul.f32 %v2365, %v2377
        %2381 = vrot.lane.b32.xlu0 %v1204, 64
        %v2382 = vpop.permute.xlu0 %2381
        %2383 = vrot.lane.b32.xlu0 %v1209, 64
        %v2384 = vpop.permute.xlu0 %2383
        %2385 = vrot.lane.b32.xlu0 %v1214, 64
        %v2386 = vpop.permute.xlu0 %2385
        %v2391 = vsel %vm1328, %v2378, 0
        %v2394 = vsel %vm1328, %v2379, 0
        %v2397 = vsel %vm1328, %v2380, 0
        %2399 = vmatprep.subr.mxu0 0.0
        %2400 = vmatpush1.msra.mxu0 0.0
        %2401 = vmatprep.subr.mxu0 0.0
        %2402 = vmatpush1.msra.mxu0 0.0
        %2403 = vmatprep.subr.mxu0 0.0
        %2404 = vmatpush1.msra.mxu0 0.0
        %2405 = vmatprep.subr.mxu0 0.0
        %2406 = vmatpush1.msra.mxu0 0.0
        %2407 = vmatprep.subr.mxu0 0.0
        %2408 = vmatpush1.msra.mxu0 0.0
        %2409 = vmatprep.subr.mxu0 0.0
        %2410 = vmatpush1.msra.mxu0 0.0
        %2411 = vmatprep.subr.mxu0 0.0
        %2412 = vmatpush1.msra.mxu0 0.0
        %2413 = vmatprep.subr.mxu0 0.0
        %2414 = vmatpush1.msra.mxu0 0.0
        %2415 = vmatprep.subr.mxu0 0.0
        %2416 = vmatpush1.msra.mxu0 0.0
        %2417 = vmatprep.subr.mxu0 0.0
        %2418 = vmatpush1.msra.mxu0 0.0
        %2419 = vmatprep.subr.mxu0 0.0
        %2420 = vmatpush1.msra.mxu0 0.0
        %2421 = vmatprep.subr.mxu0 0.0
        %2422 = vmatpush1.msra.mxu0 0.0
        %2423 = vmatprep.subr.mxu0 0.0
        %2424 = vmatpush1.msra.mxu0 0.0
        %2425 = vmatprep.subr.mxu0 0.0
        %2426 = vmatpush1.msra.mxu0 %v2386
        %2427 = vmatprep.subr.mxu0 0.0
        %2428 = vmatpush1.msra.mxu0 %v2384
        %2429 = vmatprep.subr.mxu0 0.0
        %2430 = vmatpush1.msra.mxu0 %v2382
        %2431 = vmatprep.subr.mxu0 0.0
        %2432 = vmatpush2.msra.mxu0 0.0
        %2433 = vmatprep.subr.mxu0 0.0
        %2434 = vmatpush2.msra.mxu0 0.0
        %2435 = vmatprep.subr.mxu0 0.0
        %2436 = vmatpush2.msra.mxu0 0.0
        %2437 = vmatprep.subr.mxu0 0.0
        %2438 = vmatpush2.msra.mxu0 0.0
        %2439 = vmatprep.subr.mxu0 0.0
        %2440 = vmatpush2.msra.mxu0 0.0
        %2441 = vmatprep.subr.mxu0 0.0
        %2442 = vmatpush2.msra.mxu0 0.0
        %2443 = vmatprep.subr.mxu0 0.0
        %2444 = vmatpush2.msra.mxu0 0.0
        %2445 = vmatprep.subr.mxu0 0.0
        %2446 = vmatpush2.msra.mxu0 0.0
        %2447 = vmatprep.subr.mxu0 0.0
        %2448 = vmatpush2.msra.mxu0 0.0
        %2449 = vmatprep.subr.mxu0 0.0
        %2450 = vmatpush2.msra.mxu0 0.0
        %2451 = vmatprep.subr.mxu0 0.0
        %2452 = vmatpush2.msra.mxu0 0.0
        %2453 = vmatprep.subr.mxu0 0.0
        %2454 = vmatpush2.msra.mxu0 0.0
        %2455 = vmatprep.subr.mxu0 0.0
        %2456 = vmatpush2.msra.mxu0 0.0
        %2457 = vmatprep.subr.mxu0 0.0
        %2458 = vmatpush2.msra.mxu0 0.0
        %2459 = vmatprep.subr.mxu0 0.0
        %2460 = vmatpush2.msra.mxu0 0.0
        %2461 = vmatprep.subr.mxu0 0.0
        %2462 = vmatpush2.msra.mxu0 0.0
        %2463 = vmatprep.mubr.f32.mxu0 0.0
        %2464 = vmatmul.mubr.f32.gmra.mxu0 %v2391
        %v2465 = vpop.f32.mrf.mxu0
        %v2466 = vadd.f32 0.0, %v2465
        %v2467 = vpop.f32.mrf.mxu0
        %2468 = vmatprep.mubr.f32.mxu0 0.0
        %2469 = vmatmul.mubr.f32.gmra.mxu0 %v2394
        %v2470 = vpop.f32.mrf.mxu0
        %v2471 = vadd.f32 0.0, %v2470
        %v2472 = vpop.f32.mrf.mxu0
        %2473 = vmatprep.mubr.f32.mxu0 0.0
        %2474 = vmatmul.mubr.f32.gmra.mxu0 %v2397
        %v2475 = vpop.f32.mrf.mxu0
        %v2476 = vadd.f32 0.0, %v2475
        %v2477 = vpop.f32.mrf.mxu0
        %2478 = vdwg.mxu0
        %2479 = vrot.lane.b32.xlu0 %v1204, 120
        %v2480 = vpop.permute.xlu0 %2479
        %2481 = vrot.lane.b32.xlu0 %v1209, 120
        %v2482 = vpop.permute.xlu0 %2481
        %2483 = vrot.lane.b32.xlu0 %v1214, 120
        %v2484 = vpop.permute.xlu0 %2483
        %2485 = vrot.lane.b32.xlu0 %v1204, 88
        %v2486 = vpop.permute.xlu0 %2485
        %2487 = vrot.lane.b32.xlu0 %v1209, 88
        %v2488 = vpop.permute.xlu0 %2487
        %2489 = vrot.lane.b32.xlu0 %v1214, 88
        %v2490 = vpop.permute.xlu0 %2489
        %v2491 = vsel %vm1226, %v2480, 0
        %v2493 = vsel %vm1226, %v2482, 0
        %v2495 = vsel %vm1226, %v2484, 0
        %v2497 = vsel %vm1226, %v2486, 0
        %v2499 = vsel %vm1226, %v2488, 0
        %v2501 = vsel %vm1226, %v2490, 0
        %2503 = vmatprep.subr.mxu0 0.0
        %2504 = vmatpush1.xpose.msra.mxu0 0.0
        %2505 = vmatprep.subr.mxu0 0.0
        %2506 = vmatpush1.xpose.msra.mxu0 0.0
        %2507 = vmatprep.subr.mxu0 0.0
        %2508 = vmatpush1.xpose.msra.mxu0 0.0
        %2509 = vmatprep.subr.mxu0 0.0
        %2510 = vmatpush1.xpose.msra.mxu0 0.0
        %2511 = vmatprep.subr.mxu0 0.0
        %2512 = vmatpush1.xpose.msra.mxu0 0.0
        %2513 = vmatprep.subr.mxu0 0.0
        %2514 = vmatpush1.xpose.msra.mxu0 0.0
        %2515 = vmatprep.subr.mxu0 0.0
        %2516 = vmatpush1.xpose.msra.mxu0 0.0
        %2517 = vmatprep.subr.mxu0 0.0
        %2518 = vmatpush1.xpose.msra.mxu0 0.0
        %2519 = vmatprep.subr.mxu0 0.0
        %2520 = vmatpush1.xpose.msra.mxu0 0.0
        %2521 = vmatprep.subr.mxu0 0.0
        %2522 = vmatpush1.xpose.msra.mxu0 0.0
        %2523 = vmatprep.subr.mxu0 0.0
        %2524 = vmatpush1.xpose.msra.mxu0 0.0
        %2525 = vmatprep.subr.mxu0 0.0
        %2526 = vmatpush1.xpose.msra.mxu0 0.0
        %2527 = vmatprep.subr.mxu0 0.0
        %2528 = vmatpush1.xpose.msra.mxu0 0.0
        %2529 = vmatprep.subr.mxu0 0.0
        %2530 = vmatpush1.xpose.msra.mxu0 %v2501
        %2531 = vmatprep.subr.mxu0 0.0
        %2532 = vmatpush1.xpose.msra.mxu0 %v2499
        %2533 = vmatprep.subr.mxu0 0.0
        %2534 = vmatpush1.xpose.msra.mxu0 %v2497
        %2535 = vmatprep.subr.mxu0 0.0
        %2536 = vmatpush2.xpose.msra.mxu0 0.0
        %2537 = vmatprep.subr.mxu0 0.0
        %2538 = vmatpush2.xpose.msra.mxu0 0.0
        %2539 = vmatprep.subr.mxu0 0.0
        %2540 = vmatpush2.xpose.msra.mxu0 0.0
        %2541 = vmatprep.subr.mxu0 0.0
        %2542 = vmatpush2.xpose.msra.mxu0 0.0
        %2543 = vmatprep.subr.mxu0 0.0
        %2544 = vmatpush2.xpose.msra.mxu0 0.0
        %2545 = vmatprep.subr.mxu0 0.0
        %2546 = vmatpush2.xpose.msra.mxu0 0.0
        %2547 = vmatprep.subr.mxu0 0.0
        %2548 = vmatpush2.xpose.msra.mxu0 0.0
        %2549 = vmatprep.subr.mxu0 0.0
        %2550 = vmatpush2.xpose.msra.mxu0 0.0
        %2551 = vmatprep.subr.mxu0 0.0
        %2552 = vmatpush2.xpose.msra.mxu0 0.0
        %2553 = vmatprep.subr.mxu0 0.0
        %2554 = vmatpush2.xpose.msra.mxu0 0.0
        %2555 = vmatprep.subr.mxu0 0.0
        %2556 = vmatpush2.xpose.msra.mxu0 0.0
        %2557 = vmatprep.subr.mxu0 0.0
        %2558 = vmatpush2.xpose.msra.mxu0 0.0
        %2559 = vmatprep.subr.mxu0 0.0
        %2560 = vmatpush2.xpose.msra.mxu0 0.0
        %2561 = vmatprep.subr.mxu0 0.0
        %2562 = vmatpush2.xpose.msra.mxu0 0.0
        %2563 = vmatprep.subr.mxu0 0.0
        %2564 = vmatpush2.xpose.msra.mxu0 0.0
        %2565 = vmatprep.subr.mxu0 0.0
        %2566 = vmatpush2.xpose.msra.mxu0 0.0
        %2567 = vmatprep.mubr.f32.mxu0 0.0
        %2568 = vmatmul.mubr.f32.gmra.mxu0 %v2491
        %v2569 = vpop.f32.mrf.mxu0
        %v2570 = vadd.f32 0.0, %v2569
        %v2571 = vpop.f32.mrf.mxu0
        %2572 = vmatprep.mubr.f32.mxu0 0.0
        %2573 = vmatmul.mubr.f32.gmra.mxu0 %v2493
        %v2574 = vpop.f32.mrf.mxu0
        %v2575 = vadd.f32 0.0, %v2574
        %v2576 = vpop.f32.mrf.mxu0
        %2577 = vmatprep.mubr.f32.mxu0 0.0
        %2578 = vmatmul.mubr.f32.gmra.mxu0 %v2495
        %v2579 = vpop.f32.mrf.mxu0
        %v2580 = vadd.f32 0.0, %v2579
        %v2581 = vpop.f32.mrf.mxu0
        %2582 = vdwg.mxu0
        %v2583 = vmul.f32 %v2570, 0.35355338
        %v2584 = vmul.f32 %v2575, 0.35355338
        %v2585 = vmul.f32 %v2580, 0.35355338
        %v2586 = vadd.f32 %v2583, %v1568
        %v2587 = vadd.f32 %v2584, %v1569
        %v2588 = vadd.f32 %v2585, %v1570
        %v2589 = vsel %vm1328, %v2586, -inf
        %2590 = vmax.xlane.f32.xlu0 %v2589
        %v2591 = vpop.xlane.xlu0 %2590
        %v2592 = vsel %vm1328, %v2587, -inf
        %2593 = vmax.xlane.f32.xlu0 %v2592
        %v2594 = vpop.xlane.xlu0 %2593
        %v2595 = vsel %vm1328, %v2588, -inf
        %2596 = vmax.xlane.f32.xlu0 %v2595
        %v2597 = vpop.xlane.xlu0 %2596
        %v2598 = vsub.f32 %v2586, %v2591
        %v2599 = vsub.f32 %v2587, %v2594
        %v2600 = vsub.f32 %v2588, %v2597
        %v2601 = vmul.f32 %v2598, 1.442695
        %v2602 = vpow.pop %v2601
        %v2603 = vmul.f32 %v2599, 1.442695
        %v2604 = vpow.pop %v2603
        %v2605 = vmul.f32 %v2600, 1.442695
        %v2606 = vpow.pop %v2605
        %v2607 = vsel %vm1328, %v2602, 0.0
        %2608 = vadd.xlane.f32.xlu0 %v2607
        %v2609 = vpop.xlane.xlu0 %2608
        %v2610 = vsel %vm1328, %v2604, 0.0
        %2611 = vadd.xlane.f32.xlu0 %v2610
        %v2612 = vpop.xlane.xlu0 %2611
        %v2613 = vsel %vm1328, %v2606, 0.0
        %2614 = vadd.xlane.f32.xlu0 %v2613
        %v2615 = vpop.xlane.xlu0 %2614
        %v2616 = vrcp.pop %v2609
        %v2617 = vrcp.pop %v2612
        %v2618 = vrcp.pop %v2615
        %v2619 = vmul.f32 %v2602, %v2616
        %v2620 = vmul.f32 %v2604, %v2617
        %v2621 = vmul.f32 %v2606, %v2618
        %2622 = vrot.lane.b32.xlu0 %v1204, 56
        %v2623 = vpop.permute.xlu0 %2622
        %2624 = vrot.lane.b32.xlu0 %v1209, 56
        %v2625 = vpop.permute.xlu0 %2624
        %2626 = vrot.lane.b32.xlu0 %v1214, 56
        %v2627 = vpop.permute.xlu0 %2626
        %v2632 = vsel %vm1328, %v2619, 0
        %v2635 = vsel %vm1328, %v2620, 0
        %v2638 = vsel %vm1328, %v2621, 0
        %2640 = vmatprep.subr.mxu0 0.0
        %2641 = vmatpush1.msra.mxu0 0.0
        %2642 = vmatprep.subr.mxu0 0.0
        %2643 = vmatpush1.msra.mxu0 0.0
        %2644 = vmatprep.subr.mxu0 0.0
        %2645 = vmatpush1.msra.mxu0 0.0
        %2646 = vmatprep.subr.mxu0 0.0
        %2647 = vmatpush1.msra.mxu0 0.0
        %2648 = vmatprep.subr.mxu0 0.0
        %2649 = vmatpush1.msra.mxu0 0.0
        %2650 = vmatprep.subr.mxu0 0.0
        %2651 = vmatpush1.msra.mxu0 0.0
        %2652 = vmatprep.subr.mxu0 0.0
        %2653 = vmatpush1.msra.mxu0 0.0
        %2654 = vmatprep.subr.mxu0 0.0
        %2655 = vmatpush1.msra.mxu0 0.0
        %2656 = vmatprep.subr.mxu0 0.0
        %2657 = vmatpush1.msra.mxu0 0.0
        %2658 = vmatprep.subr.mxu0 0.0
        %2659 = vmatpush1.msra.mxu0 0.0
        %2660 = vmatprep.subr.mxu0 0.0
        %2661 = vmatpush1.msra.mxu0 0.0
        %2662 = vmatprep.subr.mxu0 0.0
        %2663 = vmatpush1.msra.mxu0 0.0
        %2664 = vmatprep.subr.mxu0 0.0
        %2665 = vmatpush1.msra.mxu0 0.0
        %2666 = vmatprep.subr.mxu0 0.0
        %2667 = vmatpush1.msra.mxu0 %v2627
        %2668 = vmatprep.subr.mxu0 0.0
        %2669 = vmatpush1.msra.mxu0 %v2625
        %2670 = vmatprep.subr.mxu0 0.0
        %2671 = vmatpush1.msra.mxu0 %v2623
        %2672 = vmatprep.subr.mxu0 0.0
        %2673 = vmatpush2.msra.mxu0 0.0
        %2674 = vmatprep.subr.mxu0 0.0
        %2675 = vmatpush2.msra.mxu0 0.0
        %2676 = vmatprep.subr.mxu0 0.0
        %2677 = vmatpush2.msra.mxu0 0.0
        %2678 = vmatprep.subr.mxu0 0.0
        %2679 = vmatpush2.msra.mxu0 0.0
        %2680 = vmatprep.subr.mxu0 0.0
        %2681 = vmatpush2.msra.mxu0 0.0
        %2682 = vmatprep.subr.mxu0 0.0
        %2683 = vmatpush2.msra.mxu0 0.0
        %2684 = vmatprep.subr.mxu0 0.0
        %2685 = vmatpush2.msra.mxu0 0.0
        %2686 = vmatprep.subr.mxu0 0.0
        %2687 = vmatpush2.msra.mxu0 0.0
        %2688 = vmatprep.subr.mxu0 0.0
        %2689 = vmatpush2.msra.mxu0 0.0
        %2690 = vmatprep.subr.mxu0 0.0
        %2691 = vmatpush2.msra.mxu0 0.0
        %2692 = vmatprep.subr.mxu0 0.0
        %2693 = vmatpush2.msra.mxu0 0.0
        %2694 = vmatprep.subr.mxu0 0.0
        %2695 = vmatpush2.msra.mxu0 0.0
        %2696 = vmatprep.subr.mxu0 0.0
        %2697 = vmatpush2.msra.mxu0 0.0
        %2698 = vmatprep.subr.mxu0 0.0
        %2699 = vmatpush2.msra.mxu0 0.0
        %2700 = vmatprep.subr.mxu0 0.0
        %2701 = vmatpush2.msra.mxu0 0.0
        %2702 = vmatprep.subr.mxu0 0.0
        %2703 = vmatpush2.msra.mxu0 0.0
        %2704 = vmatprep.mubr.f32.mxu0 0.0
        %2705 = vmatmul.mubr.f32.gmra.mxu0 %v2632
        %v2706 = vpop.f32.mrf.mxu0
        %v2707 = vadd.f32 0.0, %v2706
        %v2708 = vpop.f32.mrf.mxu0
        %2709 = vmatprep.mubr.f32.mxu0 0.0
        %2710 = vmatmul.mubr.f32.gmra.mxu0 %v2635
        %v2711 = vpop.f32.mrf.mxu0
        %v2712 = vadd.f32 0.0, %v2711
        %v2713 = vpop.f32.mrf.mxu0
        %2714 = vmatprep.mubr.f32.mxu0 0.0
        %2715 = vmatmul.mubr.f32.gmra.mxu0 %v2638
        %v2716 = vpop.f32.mrf.mxu0
        %v2717 = vadd.f32 0.0, %v2716
        %v2718 = vpop.f32.mrf.mxu0
        %2719 = vdwg.mxu0
        %2720 = vrot.lane.b32.xlu0 %v1204, 112
        %v2721 = vpop.permute.xlu0 %2720
        %2722 = vrot.lane.b32.xlu0 %v1209, 112
        %v2723 = vpop.permute.xlu0 %2722
        %2724 = vrot.lane.b32.xlu0 %v1214, 112
        %v2725 = vpop.permute.xlu0 %2724
        %2726 = vrot.lane.b32.xlu0 %v1204, 80
        %v2727 = vpop.permute.xlu0 %2726
        %2728 = vrot.lane.b32.xlu0 %v1209, 80
        %v2729 = vpop.permute.xlu0 %2728
        %2730 = vrot.lane.b32.xlu0 %v1214, 80
        %v2731 = vpop.permute.xlu0 %2730
        %v2732 = vsel %vm1226, %v2721, 0
        %v2734 = vsel %vm1226, %v2723, 0
        %v2736 = vsel %vm1226, %v2725, 0
        %v2738 = vsel %vm1226, %v2727, 0
        %v2740 = vsel %vm1226, %v2729, 0
        %v2742 = vsel %vm1226, %v2731, 0
        %2744 = vmatprep.subr.mxu0 0.0
        %2745 = vmatpush1.xpose.msra.mxu0 0.0
        %2746 = vmatprep.subr.mxu0 0.0
        %2747 = vmatpush1.xpose.msra.mxu0 0.0
        %2748 = vmatprep.subr.mxu0 0.0
        %2749 = vmatpush1.xpose.msra.mxu0 0.0
        %2750 = vmatprep.subr.mxu0 0.0
        %2751 = vmatpush1.xpose.msra.mxu0 0.0
        %2752 = vmatprep.subr.mxu0 0.0
        %2753 = vmatpush1.xpose.msra.mxu0 0.0
        %2754 = vmatprep.subr.mxu0 0.0
        %2755 = vmatpush1.xpose.msra.mxu0 0.0
        %2756 = vmatprep.subr.mxu0 0.0
        %2757 = vmatpush1.xpose.msra.mxu0 0.0
        %2758 = vmatprep.subr.mxu0 0.0
        %2759 = vmatpush1.xpose.msra.mxu0 0.0
        %2760 = vmatprep.subr.mxu0 0.0
        %2761 = vmatpush1.xpose.msra.mxu0 0.0
        %2762 = vmatprep.subr.mxu0 0.0
        %2763 = vmatpush1.xpose.msra.mxu0 0.0
        %2764 = vmatprep.subr.mxu0 0.0
        %2765 = vmatpush1.xpose.msra.mxu0 0.0
        %2766 = vmatprep.subr.mxu0 0.0
        %2767 = vmatpush1.xpose.msra.mxu0 0.0
        %2768 = vmatprep.subr.mxu0 0.0
        %2769 = vmatpush1.xpose.msra.mxu0 0.0
        %2770 = vmatprep.subr.mxu0 0.0
        %2771 = vmatpush1.xpose.msra.mxu0 %v2742
        %2772 = vmatprep.subr.mxu0 0.0
        %2773 = vmatpush1.xpose.msra.mxu0 %v2740
        %2774 = vmatprep.subr.mxu0 0.0
        %2775 = vmatpush1.xpose.msra.mxu0 %v2738
        %2776 = vmatprep.subr.mxu0 0.0
        %2777 = vmatpush2.xpose.msra.mxu0 0.0
        %2778 = vmatprep.subr.mxu0 0.0
        %2779 = vmatpush2.xpose.msra.mxu0 0.0
        %2780 = vmatprep.subr.mxu0 0.0
        %2781 = vmatpush2.xpose.msra.mxu0 0.0
        %2782 = vmatprep.subr.mxu0 0.0
        %2783 = vmatpush2.xpose.msra.mxu0 0.0
        %2784 = vmatprep.subr.mxu0 0.0
        %2785 = vmatpush2.xpose.msra.mxu0 0.0
        %2786 = vmatprep.subr.mxu0 0.0
        %2787 = vmatpush2.xpose.msra.mxu0 0.0
        %2788 = vmatprep.subr.mxu0 0.0
        %2789 = vmatpush2.xpose.msra.mxu0 0.0
        %2790 = vmatprep.subr.mxu0 0.0
        %2791 = vmatpush2.xpose.msra.mxu0 0.0
        %2792 = vmatprep.subr.mxu0 0.0
        %2793 = vmatpush2.xpose.msra.mxu0 0.0
        %2794 = vmatprep.subr.mxu0 0.0
        %2795 = vmatpush2.xpose.msra.mxu0 0.0
        %2796 = vmatprep.subr.mxu0 0.0
        %2797 = vmatpush2.xpose.msra.mxu0 0.0
        %2798 = vmatprep.subr.mxu0 0.0
        %2799 = vmatpush2.xpose.msra.mxu0 0.0
        %2800 = vmatprep.subr.mxu0 0.0
        %2801 = vmatpush2.xpose.msra.mxu0 0.0
        %2802 = vmatprep.subr.mxu0 0.0
        %2803 = vmatpush2.xpose.msra.mxu0 0.0
        %2804 = vmatprep.subr.mxu0 0.0
        %2805 = vmatpush2.xpose.msra.mxu0 0.0
        %2806 = vmatprep.subr.mxu0 0.0
        %2807 = vmatpush2.xpose.msra.mxu0 0.0
        %2808 = vmatprep.mubr.f32.mxu0 0.0
        %2809 = vmatmul.mubr.f32.gmra.mxu0 %v2732
        %v2810 = vpop.f32.mrf.mxu0
        %v2811 = vadd.f32 0.0, %v2810
        %v2812 = vpop.f32.mrf.mxu0
        %2813 = vmatprep.mubr.f32.mxu0 0.0
        %2814 = vmatmul.mubr.f32.gmra.mxu0 %v2734
        %v2815 = vpop.f32.mrf.mxu0
        %v2816 = vadd.f32 0.0, %v2815
        %v2817 = vpop.f32.mrf.mxu0
        %2818 = vmatprep.mubr.f32.mxu0 0.0
        %2819 = vmatmul.mubr.f32.gmra.mxu0 %v2736
        %v2820 = vpop.f32.mrf.mxu0
        %v2821 = vadd.f32 0.0, %v2820
        %v2822 = vpop.f32.mrf.mxu0
        %2823 = vdwg.mxu0
        %v2824 = vmul.f32 %v2811, 0.35355338
        %v2825 = vmul.f32 %v2816, 0.35355338
        %v2826 = vmul.f32 %v2821, 0.35355338
        %v2827 = vadd.f32 %v2824, %v1813
        %v2828 = vadd.f32 %v2825, %v1814
        %v2829 = vadd.f32 %v2826, %v1815
        %v2830 = vsel %vm1328, %v2827, -inf
        %2831 = vmax.xlane.f32.xlu0 %v2830
        %v2832 = vpop.xlane.xlu0 %2831
        %v2833 = vsel %vm1328, %v2828, -inf
        %2834 = vmax.xlane.f32.xlu0 %v2833
        %v2835 = vpop.xlane.xlu0 %2834
        %v2836 = vsel %vm1328, %v2829, -inf
        %2837 = vmax.xlane.f32.xlu0 %v2836
        %v2838 = vpop.xlane.xlu0 %2837
        %v2839 = vsub.f32 %v2827, %v2832
        %v2840 = vsub.f32 %v2828, %v2835
        %v2841 = vsub.f32 %v2829, %v2838
        %v2842 = vmul.f32 %v2839, 1.442695
        %v2843 = vpow.pop %v2842
        %v2844 = vmul.f32 %v2840, 1.442695
        %v2845 = vpow.pop %v2844
        %v2846 = vmul.f32 %v2841, 1.442695
        %v2847 = vpow.pop %v2846
        %v2848 = vsel %vm1328, %v2843, 0.0
        %2849 = vadd.xlane.f32.xlu0 %v2848
        %v2850 = vpop.xlane.xlu0 %2849
        %v2851 = vsel %vm1328, %v2845, 0.0
        %2852 = vadd.xlane.f32.xlu0 %v2851
        %v2853 = vpop.xlane.xlu0 %2852
        %v2854 = vsel %vm1328, %v2847, 0.0
        %2855 = vadd.xlane.f32.xlu0 %v2854
        %v2856 = vpop.xlane.xlu0 %2855
        %v2857 = vrcp.pop %v2850
        %v2858 = vrcp.pop %v2853
        %v2859 = vrcp.pop %v2856
        %v2860 = vmul.f32 %v2843, %v2857
        %v2861 = vmul.f32 %v2845, %v2858
        %v2862 = vmul.f32 %v2847, %v2859
        %2863 = vrot.lane.b32.xlu0 %v1204, 48
        %v2864 = vpop.permute.xlu0 %2863
        %2865 = vrot.lane.b32.xlu0 %v1209, 48
        %v2866 = vpop.permute.xlu0 %2865
        %2867 = vrot.lane.b32.xlu0 %v1214, 48
        %v2868 = vpop.permute.xlu0 %2867
        %v2873 = vsel %vm1328, %v2860, 0
        %v2876 = vsel %vm1328, %v2861, 0
        %v2879 = vsel %vm1328, %v2862, 0
        %2881 = vmatprep.subr.mxu0 0.0
        %2882 = vmatpush1.msra.mxu0 0.0
        %2883 = vmatprep.subr.mxu0 0.0
        %2884 = vmatpush1.msra.mxu0 0.0
        %2885 = vmatprep.subr.mxu0 0.0
        %2886 = vmatpush1.msra.mxu0 0.0
        %2887 = vmatprep.subr.mxu0 0.0
        %2888 = vmatpush1.msra.mxu0 0.0
        %2889 = vmatprep.subr.mxu0 0.0
        %2890 = vmatpush1.msra.mxu0 0.0
        %2891 = vmatprep.subr.mxu0 0.0
        %2892 = vmatpush1.msra.mxu0 0.0
        %2893 = vmatprep.subr.mxu0 0.0
        %2894 = vmatpush1.msra.mxu0 0.0
        %2895 = vmatprep.subr.mxu0 0.0
        %2896 = vmatpush1.msra.mxu0 0.0
        %2897 = vmatprep.subr.mxu0 0.0
        %2898 = vmatpush1.msra.mxu0 0.0
        %2899 = vmatprep.subr.mxu0 0.0
        %2900 = vmatpush1.msra.mxu0 0.0
        %2901 = vmatprep.subr.mxu0 0.0
        %2902 = vmatpush1.msra.mxu0 0.0
        %2903 = vmatprep.subr.mxu0 0.0
        %2904 = vmatpush1.msra.mxu0 0.0
        %2905 = vmatprep.subr.mxu0 0.0
        %2906 = vmatpush1.msra.mxu0 0.0
        %2907 = vmatprep.subr.mxu0 0.0
        %2908 = vmatpush1.msra.mxu0 %v2868
        %2909 = vmatprep.subr.mxu0 0.0
        %2910 = vmatpush1.msra.mxu0 %v2866
        %2911 = vmatprep.subr.mxu0 0.0
        %2912 = vmatpush1.msra.mxu0 %v2864
        %2913 = vmatprep.subr.mxu0 0.0
        %2914 = vmatpush2.msra.mxu0 0.0
        %2915 = vmatprep.subr.mxu0 0.0
        %2916 = vmatpush2.msra.mxu0 0.0
        %2917 = vmatprep.subr.mxu0 0.0
        %2918 = vmatpush2.msra.mxu0 0.0
        %2919 = vmatprep.subr.mxu0 0.0
        %2920 = vmatpush2.msra.mxu0 0.0
        %2921 = vmatprep.subr.mxu0 0.0
        %2922 = vmatpush2.msra.mxu0 0.0
        %2923 = vmatprep.subr.mxu0 0.0
        %2924 = vmatpush2.msra.mxu0 0.0
        %2925 = vmatprep.subr.mxu0 0.0
        %2926 = vmatpush2.msra.mxu0 0.0
        %2927 = vmatprep.subr.mxu0 0.0
        %2928 = vmatpush2.msra.mxu0 0.0
        %2929 = vmatprep.subr.mxu0 0.0
        %2930 = vmatpush2.msra.mxu0 0.0
        %2931 = vmatprep.subr.mxu0 0.0
        %2932 = vmatpush2.msra.mxu0 0.0
        %2933 = vmatprep.subr.mxu0 0.0
        %2934 = vmatpush2.msra.mxu0 0.0
        %2935 = vmatprep.subr.mxu0 0.0
        %2936 = vmatpush2.msra.mxu0 0.0
        %2937 = vmatprep.subr.mxu0 0.0
        %2938 = vmatpush2.msra.mxu0 0.0
        %2939 = vmatprep.subr.mxu0 0.0
        %2940 = vmatpush2.msra.mxu0 0.0
        %2941 = vmatprep.subr.mxu0 0.0
        %2942 = vmatpush2.msra.mxu0 0.0
        %2943 = vmatprep.subr.mxu0 0.0
        %2944 = vmatpush2.msra.mxu0 0.0
        %2945 = vmatprep.mubr.f32.mxu0 0.0
        %2946 = vmatmul.mubr.f32.gmra.mxu0 %v2873
        %v2947 = vpop.f32.mrf.mxu0
        %v2948 = vadd.f32 0.0, %v2947
        %v2949 = vpop.f32.mrf.mxu0
        %2950 = vmatprep.mubr.f32.mxu0 0.0
        %2951 = vmatmul.mubr.f32.gmra.mxu0 %v2876
        %v2952 = vpop.f32.mrf.mxu0
        %v2953 = vadd.f32 0.0, %v2952
        %v2954 = vpop.f32.mrf.mxu0
        %2955 = vmatprep.mubr.f32.mxu0 0.0
        %2956 = vmatmul.mubr.f32.gmra.mxu0 %v2879
        %v2957 = vpop.f32.mrf.mxu0
        %v2958 = vadd.f32 0.0, %v2957
        %v2959 = vpop.f32.mrf.mxu0
        %2960 = vdwg.mxu0
        %2961 = vrot.lane.b32.xlu0 %v1204, 104
        %v2962 = vpop.permute.xlu0 %2961
        %2963 = vrot.lane.b32.xlu0 %v1209, 104
        %v2964 = vpop.permute.xlu0 %2963
        %2965 = vrot.lane.b32.xlu0 %v1214, 104
        %v2966 = vpop.permute.xlu0 %2965
        %2967 = vrot.lane.b32.xlu0 %v1204, 72
        %v2968 = vpop.permute.xlu0 %2967
        %2969 = vrot.lane.b32.xlu0 %v1209, 72
        %v2970 = vpop.permute.xlu0 %2969
        %2971 = vrot.lane.b32.xlu0 %v1214, 72
        %v2972 = vpop.permute.xlu0 %2971
        %v2973 = vsel %vm1226, %v2962, 0
        %v2975 = vsel %vm1226, %v2964, 0
        %v2977 = vsel %vm1226, %v2966, 0
        %v2979 = vsel %vm1226, %v2968, 0
        %v2981 = vsel %vm1226, %v2970, 0
        %v2983 = vsel %vm1226, %v2972, 0
        %2985 = vmatprep.subr.mxu0 0.0
        %2986 = vmatpush1.xpose.msra.mxu0 0.0
        %2987 = vmatprep.subr.mxu0 0.0
        %2988 = vmatpush1.xpose.msra.mxu0 0.0
        %2989 = vmatprep.subr.mxu0 0.0
        %2990 = vmatpush1.xpose.msra.mxu0 0.0
        %2991 = vmatprep.subr.mxu0 0.0
        %2992 = vmatpush1.xpose.msra.mxu0 0.0
        %2993 = vmatprep.subr.mxu0 0.0
        %2994 = vmatpush1.xpose.msra.mxu0 0.0
        %2995 = vmatprep.subr.mxu0 0.0
        %2996 = vmatpush1.xpose.msra.mxu0 0.0
        %2997 = vmatprep.subr.mxu0 0.0
        %2998 = vmatpush1.xpose.msra.mxu0 0.0
        %2999 = vmatprep.subr.mxu0 0.0
        %3000 = vmatpush1.xpose.msra.mxu0 0.0
        %3001 = vmatprep.subr.mxu0 0.0
        %3002 = vmatpush1.xpose.msra.mxu0 0.0
        %3003 = vmatprep.subr.mxu0 0.0
        %3004 = vmatpush1.xpose.msra.mxu0 0.0
        %3005 = vmatprep.subr.mxu0 0.0
        %3006 = vmatpush1.xpose.msra.mxu0 0.0
        %3007 = vmatprep.subr.mxu0 0.0
        %3008 = vmatpush1.xpose.msra.mxu0 0.0
        %3009 = vmatprep.subr.mxu0 0.0
        %3010 = vmatpush1.xpose.msra.mxu0 0.0
        %3011 = vmatprep.subr.mxu0 0.0
        %3012 = vmatpush1.xpose.msra.mxu0 %v2983
        %3013 = vmatprep.subr.mxu0 0.0
        %3014 = vmatpush1.xpose.msra.mxu0 %v2981
        %3015 = vmatprep.subr.mxu0 0.0
        %3016 = vmatpush1.xpose.msra.mxu0 %v2979
        %3017 = vmatprep.subr.mxu0 0.0
        %3018 = vmatpush2.xpose.msra.mxu0 0.0
        %3019 = vmatprep.subr.mxu0 0.0
        %3020 = vmatpush2.xpose.msra.mxu0 0.0
        %3021 = vmatprep.subr.mxu0 0.0
        %3022 = vmatpush2.xpose.msra.mxu0 0.0
        %3023 = vmatprep.subr.mxu0 0.0
        %3024 = vmatpush2.xpose.msra.mxu0 0.0
        %3025 = vmatprep.subr.mxu0 0.0
        %3026 = vmatpush2.xpose.msra.mxu0 0.0
        %3027 = vmatprep.subr.mxu0 0.0
        %3028 = vmatpush2.xpose.msra.mxu0 0.0
        %3029 = vmatprep.subr.mxu0 0.0
        %3030 = vmatpush2.xpose.msra.mxu0 0.0
        %3031 = vmatprep.subr.mxu0 0.0
        %3032 = vmatpush2.xpose.msra.mxu0 0.0
        %3033 = vmatprep.subr.mxu0 0.0
        %3034 = vmatpush2.xpose.msra.mxu0 0.0
        %3035 = vmatprep.subr.mxu0 0.0
        %3036 = vmatpush2.xpose.msra.mxu0 0.0
        %3037 = vmatprep.subr.mxu0 0.0
        %3038 = vmatpush2.xpose.msra.mxu0 0.0
        %3039 = vmatprep.subr.mxu0 0.0
        %3040 = vmatpush2.xpose.msra.mxu0 0.0
        %3041 = vmatprep.subr.mxu0 0.0
        %3042 = vmatpush2.xpose.msra.mxu0 0.0
        %3043 = vmatprep.subr.mxu0 0.0
        %3044 = vmatpush2.xpose.msra.mxu0 0.0
        %3045 = vmatprep.subr.mxu0 0.0
        %3046 = vmatpush2.xpose.msra.mxu0 0.0
        %3047 = vmatprep.subr.mxu0 0.0
        %3048 = vmatpush2.xpose.msra.mxu0 0.0
        %3049 = vmatprep.mubr.f32.mxu0 0.0
        %3050 = vmatmul.mubr.f32.gmra.mxu0 %v2973
        %v3051 = vpop.f32.mrf.mxu0
        %v3052 = vadd.f32 0.0, %v3051
        %v3053 = vpop.f32.mrf.mxu0
        %3054 = vmatprep.mubr.f32.mxu0 0.0
        %3055 = vmatmul.mubr.f32.gmra.mxu0 %v2975
        %v3056 = vpop.f32.mrf.mxu0
        %v3057 = vadd.f32 0.0, %v3056
        %v3058 = vpop.f32.mrf.mxu0
        %3059 = vmatprep.mubr.f32.mxu0 0.0
        %3060 = vmatmul.mubr.f32.gmra.mxu0 %v2977
        %v3061 = vpop.f32.mrf.mxu0
        %v3062 = vadd.f32 0.0, %v3061
        %v3063 = vpop.f32.mrf.mxu0
        %3064 = vdwg.mxu0
        %v3065 = vmul.f32 %v3052, 0.35355338
        %v3066 = vmul.f32 %v3057, 0.35355338
        %v3067 = vmul.f32 %v3062, 0.35355338
        %v3068 = vadd.f32 %v3065, %v2058
        %v3069 = vadd.f32 %v3066, %v2059
        %v3070 = vadd.f32 %v3067, %v2060
        %v3071 = vsel %vm1328, %v3068, -inf
        %3072 = vmax.xlane.f32.xlu0 %v3071
        %v3073 = vpop.xlane.xlu0 %3072
        %v3074 = vsel %vm1328, %v3069, -inf
        %3075 = vmax.xlane.f32.xlu0 %v3074
        %v3076 = vpop.xlane.xlu0 %3075
        %v3077 = vsel %vm1328, %v3070, -inf
        %3078 = vmax.xlane.f32.xlu0 %v3077
        %v3079 = vpop.xlane.xlu0 %3078
        %v3080 = vsub.f32 %v3068, %v3073
        %v3081 = vsub.f32 %v3069, %v3076
        %v3082 = vsub.f32 %v3070, %v3079
        %v3083 = vmul.f32 %v3080, 1.442695
        %v3084 = vpow.pop %v3083
        %v3085 = vmul.f32 %v3081, 1.442695
        %v3086 = vpow.pop %v3085
        %v3087 = vmul.f32 %v3082, 1.442695
        %v3088 = vpow.pop %v3087
        %v3089 = vsel %vm1328, %v3084, 0.0
        %3090 = vadd.xlane.f32.xlu0 %v3089
        %v3091 = vpop.xlane.xlu0 %3090
        %v3092 = vsel %vm1328, %v3086, 0.0
        %3093 = vadd.xlane.f32.xlu0 %v3092
        %v3094 = vpop.xlane.xlu0 %3093
        %v3095 = vsel %vm1328, %v3088, 0.0
        %3096 = vadd.xlane.f32.xlu0 %v3095
        %v3097 = vpop.xlane.xlu0 %3096
        %v3098 = vrcp.pop %v3091
        %v3099 = vrcp.pop %v3094
        %v3100 = vrcp.pop %v3097
        %v3101 = vmul.f32 %v3084, %v3098
        %v3102 = vmul.f32 %v3086, %v3099
        %v3103 = vmul.f32 %v3088, %v3100
        %3104 = vrot.lane.b32.xlu0 %v1204, 40
        %v3105 = vpop.permute.xlu0 %3104
        %3106 = vrot.lane.b32.xlu0 %v1209, 40
        %v3107 = vpop.permute.xlu0 %3106
        %3108 = vrot.lane.b32.xlu0 %v1214, 40
        %v3109 = vpop.permute.xlu0 %3108
        %v3114 = vsel %vm1328, %v3101, 0
        %v3117 = vsel %vm1328, %v3102, 0
        %v3120 = vsel %vm1328, %v3103, 0
        %3122 = vmatprep.subr.mxu0 0.0
        %3123 = vmatpush1.msra.mxu0 0.0
        %3124 = vmatprep.subr.mxu0 0.0
        %3125 = vmatpush1.msra.mxu0 0.0
        %3126 = vmatprep.subr.mxu0 0.0
        %3127 = vmatpush1.msra.mxu0 0.0
        %3128 = vmatprep.subr.mxu0 0.0
        %3129 = vmatpush1.msra.mxu0 0.0
        %3130 = vmatprep.subr.mxu0 0.0
        %3131 = vmatpush1.msra.mxu0 0.0
        %3132 = vmatprep.subr.mxu0 0.0
        %3133 = vmatpush1.msra.mxu0 0.0
        %3134 = vmatprep.subr.mxu0 0.0
        %3135 = vmatpush1.msra.mxu0 0.0
        %3136 = vmatprep.subr.mxu0 0.0
        %3137 = vmatpush1.msra.mxu0 0.0
        %3138 = vmatprep.subr.mxu0 0.0
        %3139 = vmatpush1.msra.mxu0 0.0
        %3140 = vmatprep.subr.mxu0 0.0
        %3141 = vmatpush1.msra.mxu0 0.0
        %3142 = vmatprep.subr.mxu0 0.0
        %3143 = vmatpush1.msra.mxu0 0.0
        %3144 = vmatprep.subr.mxu0 0.0
        %3145 = vmatpush1.msra.mxu0 0.0
        %3146 = vmatprep.subr.mxu0 0.0
        %3147 = vmatpush1.msra.mxu0 0.0
        %3148 = vmatprep.subr.mxu0 0.0
        %3149 = vmatpush1.msra.mxu0 %v3109
        %3150 = vmatprep.subr.mxu0 0.0
        %3151 = vmatpush1.msra.mxu0 %v3107
        %3152 = vmatprep.subr.mxu0 0.0
        %3153 = vmatpush1.msra.mxu0 %v3105
        %3154 = vmatprep.subr.mxu0 0.0
        %3155 = vmatpush2.msra.mxu0 0.0
        %3156 = vmatprep.subr.mxu0 0.0
        %3157 = vmatpush2.msra.mxu0 0.0
        %3158 = vmatprep.subr.mxu0 0.0
        %3159 = vmatpush2.msra.mxu0 0.0
        %3160 = vmatprep.subr.mxu0 0.0
        %3161 = vmatpush2.msra.mxu0 0.0
        %3162 = vmatprep.subr.mxu0 0.0
        %3163 = vmatpush2.msra.mxu0 0.0
        %3164 = vmatprep.subr.mxu0 0.0
        %3165 = vmatpush2.msra.mxu0 0.0
        %3166 = vmatprep.subr.mxu0 0.0
        %3167 = vmatpush2.msra.mxu0 0.0
        %3168 = vmatprep.subr.mxu0 0.0
        %3169 = vmatpush2.msra.mxu0 0.0
        %3170 = vmatprep.subr.mxu0 0.0
        %3171 = vmatpush2.msra.mxu0 0.0
        %3172 = vmatprep.subr.mxu0 0.0
        %3173 = vmatpush2.msra.mxu0 0.0
        %3174 = vmatprep.subr.mxu0 0.0
        %3175 = vmatpush2.msra.mxu0 0.0
        %3176 = vmatprep.subr.mxu0 0.0
        %3177 = vmatpush2.msra.mxu0 0.0
        %3178 = vmatprep.subr.mxu0 0.0
        %3179 = vmatpush2.msra.mxu0 0.0
        %3180 = vmatprep.subr.mxu0 0.0
        %3181 = vmatpush2.msra.mxu0 0.0
        %3182 = vmatprep.subr.mxu0 0.0
        %3183 = vmatpush2.msra.mxu0 0.0
        %3184 = vmatprep.subr.mxu0 0.0
        %3185 = vmatpush2.msra.mxu0 0.0
        %3186 = vmatprep.mubr.f32.mxu0 0.0
        %3187 = vmatmul.mubr.f32.gmra.mxu0 %v3114
        %v3188 = vpop.f32.mrf.mxu0
        %v3189 = vadd.f32 0.0, %v3188
        %v3190 = vpop.f32.mrf.mxu0
        %3191 = vmatprep.mubr.f32.mxu0 0.0
        %3192 = vmatmul.mubr.f32.gmra.mxu0 %v3117
        %v3193 = vpop.f32.mrf.mxu0
        %v3194 = vadd.f32 0.0, %v3193
        %v3195 = vpop.f32.mrf.mxu0
        %3196 = vmatprep.mubr.f32.mxu0 0.0
        %3197 = vmatmul.mubr.f32.gmra.mxu0 %v3120
        %v3198 = vpop.f32.mrf.mxu0
        %v3199 = vadd.f32 0.0, %v3198
        %v3200 = vpop.f32.mrf.mxu0
        %3201 = vdwg.mxu0
        %3205 = vrot.lane.b32.xlu0 %v2707, 8
        %v3206 = vpop.permute.xlu0 %3205
        %3207 = vrot.lane.b32.xlu0 %v2712, 8
        %v3208 = vpop.permute.xlu0 %3207
        %3209 = vrot.lane.b32.xlu0 %v2717, 8
        %v3210 = vpop.permute.xlu0 %3209
        %3217 = vrot.lane.b32.xlu0 %v2948, 16
        %v3218 = vpop.permute.xlu0 %3217
        %3219 = vrot.lane.b32.xlu0 %v2953, 16
        %v3220 = vpop.permute.xlu0 %3219
        %3221 = vrot.lane.b32.xlu0 %v2958, 16
        %v3222 = vpop.permute.xlu0 %3221
        %3229 = vrot.lane.b32.xlu0 %v3189, 24
        %v3230 = vpop.permute.xlu0 %3229
        %3231 = vrot.lane.b32.xlu0 %v3194, 24
        %v3232 = vpop.permute.xlu0 %3231
        %3233 = vrot.lane.b32.xlu0 %v3199, 24
        %v3234 = vpop.permute.xlu0 %3233
        %v3238 = vsel %vm1226, %v2466, %v3206
        %v3239 = vsel %vm1226, %v2471, %v3208
        %v3240 = vsel %vm1226, %v2476, %v3210
        %v3241 = vsel %vm2234, %v3238, %v3218
        %v3242 = vsel %vm2234, %v3239, %v3220
        %v3243 = vsel %vm2234, %v3240, %v3222
        %v3244 = vsel %vm1328, %v3241, %v3230
        %v3245 = vsel %vm1328, %v3242, %v3232
        %v3246 = vsel %vm1328, %v3243, %v3234
        %v3247 = vld [vmem:[%s955] sm:$0xff]
        %v3248 = vld [vmem:[%s955 + $0x8] sm:$0xff]
        %v3249 = vld [vmem:[%s955 + $0x10] sm:$0xff]
        %v3250 = vld [vmem:[%s955 + $0x18] sm:$0xff]
        %v3251 = vld [vmem:[%s779] sm:$0x1]
        %v3253 = vlaneseq
        %v3254 = vshrl.u32 %v3253, 7
        %v3255 = vsub.s32 0, %v3254
        %v3256 = vrot.slane %v3251, %v3255
        %v3259 = vsel %vm989, %v2238, 0
        %v3262 = vsel %vm989, %v2239, 0
        %v3265 = vsel %vm989, %v2240, 0
        %v3268 = vsel %vm989, %v3244, 0
        %v3271 = vsel %vm989, %v3245, 0
        %v3274 = vsel %vm989, %v3246, 0
        %3276 = vmatprep.subr.mxu0 0.0
        %3277 = vmatpush1.msra.mxu0 0.0
        %3278 = vmatprep.subr.mxu0 0.0
        %3279 = vmatpush1.msra.mxu0 0.0
        %3280 = vmatprep.subr.mxu0 0.0
        %3281 = vmatpush1.msra.mxu0 0.0
        %3282 = vmatprep.subr.mxu0 0.0
        %3283 = vmatpush1.msra.mxu0 0.0
        %3284 = vmatprep.subr.mxu0 0.0
        %3285 = vmatpush1.msra.mxu0 0.0
        %3286 = vmatprep.subr.mxu0 0.0
        %3287 = vmatpush1.msra.mxu0 0.0
        %3288 = vmatprep.subr.mxu0 0.0
        %3289 = vmatpush1.msra.mxu0 0.0
        %3290 = vmatprep.subr.mxu0 0.0
        %3291 = vmatpush1.msra.mxu0 0.0
        %3292 = vmatprep.subr.mxu0 0.0
        %3293 = vmatpush1.msra.mxu0 0.0
        %3294 = vmatprep.subr.mxu0 0.0
        %3295 = vmatpush1.msra.mxu0 0.0
        %3296 = vmatprep.subr.mxu0 0.0
        %3297 = vmatpush1.msra.mxu0 0.0
        %3298 = vmatprep.subr.mxu0 0.0
        %3299 = vmatpush1.msra.mxu0 0.0
        %3300 = vmatprep.subr.mxu0 0.0
        %3301 = vmatpush1.msra.mxu0 %v3250
        %3302 = vmatprep.subr.mxu0 0.0
        %3303 = vmatpush1.msra.mxu0 %v3249
        %3304 = vmatprep.subr.mxu0 0.0
        %3305 = vmatpush1.msra.mxu0 %v3248
        %3306 = vmatprep.subr.mxu0 0.0
        %3307 = vmatpush1.msra.mxu0 %v3247
        %3308 = vmatprep.subr.mxu0 0.0
        %3309 = vmatpush2.msra.mxu0 0.0
        %3310 = vmatprep.subr.mxu0 0.0
        %3311 = vmatpush2.msra.mxu0 0.0
        %3312 = vmatprep.subr.mxu0 0.0
        %3313 = vmatpush2.msra.mxu0 0.0
        %3314 = vmatprep.subr.mxu0 0.0
        %3315 = vmatpush2.msra.mxu0 0.0
        %3316 = vmatprep.subr.mxu0 0.0
        %3317 = vmatpush2.msra.mxu0 0.0
        %3318 = vmatprep.subr.mxu0 0.0
        %3319 = vmatpush2.msra.mxu0 0.0
        %3320 = vmatprep.subr.mxu0 0.0
        %3321 = vmatpush2.msra.mxu0 0.0
        %3322 = vmatprep.subr.mxu0 0.0
        %3323 = vmatpush2.msra.mxu0 0.0
        %3324 = vmatprep.subr.mxu0 0.0
        %3325 = vmatpush2.msra.mxu0 0.0
        %3326 = vmatprep.subr.mxu0 0.0
        %3327 = vmatpush2.msra.mxu0 0.0
        %3328 = vmatprep.subr.mxu0 0.0
        %3329 = vmatpush2.msra.mxu0 0.0
        %3330 = vmatprep.subr.mxu0 0.0
        %3331 = vmatpush2.msra.mxu0 0.0
        %3332 = vmatprep.subr.mxu0 0.0
        %3333 = vmatpush2.msra.mxu0 0.0
        %3334 = vmatprep.subr.mxu0 0.0
        %3335 = vmatpush2.msra.mxu0 0.0
        %3336 = vmatprep.subr.mxu0 0.0
        %3337 = vmatpush2.msra.mxu0 0.0
        %3338 = vmatprep.subr.mxu0 0.0
        %3339 = vmatpush2.msra.mxu0 0.0
        %3340 = vmatprep.mubr.f32.mxu0 0.0
        %3341 = vmatmul.mubr.f32.gmra.mxu0 %v3259
        %v3342 = vpop.f32.mrf.mxu0
        %v3343 = vadd.f32 %v3256, %v3342
        %v3344 = vpop.f32.mrf.mxu0
        %3345 = vmatprep.mubr.f32.mxu0 0.0
        %3346 = vmatmul.mubr.f32.gmra.mxu0 %v3262
        %v3347 = vpop.f32.mrf.mxu0
        %v3348 = vadd.f32 %v3256, %v3347
        %v3349 = vpop.f32.mrf.mxu0
        %3350 = vmatprep.mubr.f32.mxu0 0.0
        %3351 = vmatmul.mubr.f32.gmra.mxu0 %v3265
        %v3352 = vpop.f32.mrf.mxu0
        %v3353 = vadd.f32 %v3256, %v3352
        %v3354 = vpop.f32.mrf.mxu0
        %3355 = vmatprep.mubr.f32.mxu0 0.0
        %3356 = vmatmul.mubr.f32.gmra.mxu0 %v3268
        %v3357 = vpop.f32.mrf.mxu0
        %v3358 = vadd.f32 %v3256, %v3357
        %v3359 = vpop.f32.mrf.mxu0
        %3360 = vmatprep.mubr.f32.mxu0 0.0
        %3361 = vmatmul.mubr.f32.gmra.mxu0 %v3271
        %v3362 = vpop.f32.mrf.mxu0
        %v3363 = vadd.f32 %v3256, %v3362
        %v3364 = vpop.f32.mrf.mxu0
        %3365 = vmatprep.mubr.f32.mxu0 0.0
        %3366 = vmatmul.mubr.f32.gmra.mxu0 %v3274
        %v3367 = vpop.f32.mrf.mxu0
        %v3368 = vadd.f32 %v3256, %v3367
        %v3369 = vpop.f32.mrf.mxu0
        %3370 = vdwg.mxu0
        %v3371 = vld [vmem:[%s787] sm:$0x1]
        %v3373 = vlaneseq
        %v3374 = vshrl.u32 %v3373, 7
        %v3375 = vsub.s32 0, %v3374
        %v3376 = vrot.slane %v3371, %v3375
        %v3378 = vmul.f32 %v3376, %v3343
        %v3379 = vmul.f32 %v3376, %v3348
        %v3380 = vmul.f32 %v3376, %v3353
        %v3381 = vmul.f32 %v3376, %v3358
        %v3382 = vmul.f32 %v3376, %v3363
        %v3383 = vmul.f32 %v3376, %v3368
        %v3384 = vadd.f32 %v981, %v3378
        %v3385 = vadd.f32 %v982, %v3379
        %v3386 = vadd.f32 %v983, %v3380
        %v3387 = vadd.f32 %v984, %v3381
        %v3388 = vadd.f32 %v985, %v3382
        %v3389 = vadd.f32 %v986, %v3383
        %v3390 = vld [vmem:[%s958] sm:$0x1]
        %v3391 = vld [vmem:[%s795] sm:$0x1]
        %v3392 = vsel %vm989, %v3384, 0.0
        %3393 = vadd.xlane.f32.xlu0 %v3392
        %v3394 = vpop.xlane.xlu0 %3393
        %v3395 = vsel %vm989, %v3385, 0.0
        %3396 = vadd.xlane.f32.xlu0 %v3395
        %v3397 = vpop.xlane.xlu0 %3396
        %v3398 = vsel %vm989, %v3386, 0.0
        %3399 = vadd.xlane.f32.xlu0 %v3398
        %v3400 = vpop.xlane.xlu0 %3399
        %v3401 = vsel %vm989, %v3387, 0.0
        %3402 = vadd.xlane.f32.xlu0 %v3401
        %v3403 = vpop.xlane.xlu0 %3402
        %v3404 = vsel %vm989, %v3388, 0.0
        %3405 = vadd.xlane.f32.xlu0 %v3404
        %v3406 = vpop.xlane.xlu0 %3405
        %v3407 = vsel %vm989, %v3389, 0.0
        %3408 = vadd.xlane.f32.xlu0 %v3407
        %v3409 = vpop.xlane.xlu0 %3408
        %v3410 = vmul.f32 %v3394, %v1008
        %v3411 = vmul.f32 %v3397, %v1008
        %v3412 = vmul.f32 %v3400, %v1008
        %v3413 = vmul.f32 %v3403, %v1008
        %v3414 = vmul.f32 %v3406, %v1008
        %v3415 = vmul.f32 %v3409, %v1008
        %v3416 = vsub.f32 %v3384, %v3410
        %v3417 = vsub.f32 %v3385, %v3411
        %v3418 = vsub.f32 %v3386, %v3412
        %v3419 = vsub.f32 %v3387, %v3413
        %v3420 = vsub.f32 %v3388, %v3414
        %v3421 = vsub.f32 %v3389, %v3415
        %v3422 = vmul.f32 %v3416, %v3416
        %v3423 = vmul.f32 %v3417, %v3417
        %v3424 = vmul.f32 %v3418, %v3418
        %v3425 = vmul.f32 %v3419, %v3419
        %v3426 = vmul.f32 %v3420, %v3420
        %v3427 = vmul.f32 %v3421, %v3421
        %v3428 = vsel %vm989, %v3422, 0.0
        %3429 = vadd.xlane.f32.xlu0 %v3428
        %v3430 = vpop.xlane.xlu0 %3429
        %v3431 = vsel %vm989, %v3423, 0.0
        %3432 = vadd.xlane.f32.xlu0 %v3431
        %v3433 = vpop.xlane.xlu0 %3432
        %v3434 = vsel %vm989, %v3424, 0.0
        %3435 = vadd.xlane.f32.xlu0 %v3434
        %v3436 = vpop.xlane.xlu0 %3435
        %v3437 = vsel %vm989, %v3425, 0.0
        %3438 = vadd.xlane.f32.xlu0 %v3437
        %v3439 = vpop.xlane.xlu0 %3438
        %v3440 = vsel %vm989, %v3426, 0.0
        %3441 = vadd.xlane.f32.xlu0 %v3440
        %v3442 = vpop.xlane.xlu0 %3441
        %v3443 = vsel %vm989, %v3427, 0.0
        %3444 = vadd.xlane.f32.xlu0 %v3443
        %v3445 = vpop.xlane.xlu0 %3444
        %v3446 = vmul.f32 %v3430, %v1008
        %v3447 = vmul.f32 %v3433, %v1008
        %v3448 = vmul.f32 %v3436, %v1008
        %v3449 = vmul.f32 %v3439, %v1008
        %v3450 = vmul.f32 %v3442, %v1008
        %v3451 = vmul.f32 %v3445, %v1008
        %v3452 = vadd.f32 %v3446, 1e-12
        %v3453 = vadd.f32 %v3447, 1e-12
        %v3454 = vadd.f32 %v3448, 1e-12
        %v3455 = vadd.f32 %v3449, 1e-12
        %v3456 = vadd.f32 %v3450, 1e-12
        %v3457 = vadd.f32 %v3451, 1e-12
        %v3458 = vrsqrt.pop %v3452
        %v3459 = vrsqrt.pop %v3453
        %v3460 = vrsqrt.pop %v3454
        %v3461 = vrsqrt.pop %v3455
        %v3462 = vrsqrt.pop %v3456
        %v3463 = vrsqrt.pop %v3457
        %v3464 = vmul.f32 %v3416, %v3458
        %v3465 = vmul.f32 %v3417, %v3459
        %v3466 = vmul.f32 %v3418, %v3460
        %v3467 = vmul.f32 %v3419, %v3461
        %v3468 = vmul.f32 %v3420, %v3462
        %v3469 = vmul.f32 %v3421, %v3463
        %v3471 = vlaneseq
        %v3472 = vshrl.u32 %v3471, 7
        %v3473 = vsub.s32 0, %v3472
        %v3474 = vrot.slane %v3390, %v3473
        %v3476 = vmul.f32 %v3464, %v3474
        %v3477 = vmul.f32 %v3465, %v3474
        %v3478 = vmul.f32 %v3466, %v3474
        %v3479 = vmul.f32 %v3467, %v3474
        %v3480 = vmul.f32 %v3468, %v3474
        %v3481 = vmul.f32 %v3469, %v3474
        %v3483 = vlaneseq
        %v3484 = vshrl.u32 %v3483, 7
        %v3485 = vsub.s32 0, %v3484
        %v3486 = vrot.slane %v3391, %v3485
        %v3488 = vadd.f32 %v3476, %v3486
        %v3489 = vadd.f32 %v3477, %v3486
        %v3490 = vadd.f32 %v3478, %v3486
        %v3491 = vadd.f32 %v3479, %v3486
        %v3492 = vadd.f32 %v3480, %v3486
        %v3493 = vadd.f32 %v3481, %v3486
        %v3494 = vld [vmem:[%s804] sm:$0xff]
        %v3495 = vld [vmem:[%s804 + $0x8] sm:$0xff]
        %v3496 = vld [vmem:[%s804 + $0x10] sm:$0xff]
        %v3497 = vld [vmem:[%s804 + $0x18] sm:$0xff]
        %v3498 = vld [vmem:[%s812] sm:$0x1]
        %v3500 = vlaneseq
        %v3501 = vshrl.u32 %v3500, 7
        %v3502 = vsub.s32 0, %v3501
        %v3503 = vrot.slane %v3498, %v3502
        %v3506 = vsel %vm989, %v3488, 0
        %v3509 = vsel %vm989, %v3489, 0
        %v3512 = vsel %vm989, %v3490, 0
        %v3515 = vsel %vm989, %v3491, 0
        %v3518 = vsel %vm989, %v3492, 0
        %v3521 = vsel %vm989, %v3493, 0
        %3523 = vmatprep.subr.mxu0 0.0
        %3524 = vmatpush1.msra.mxu0 0.0
        %3525 = vmatprep.subr.mxu0 0.0
        %3526 = vmatpush1.msra.mxu0 0.0
        %3527 = vmatprep.subr.mxu0 0.0
        %3528 = vmatpush1.msra.mxu0 0.0
        %3529 = vmatprep.subr.mxu0 0.0
        %3530 = vmatpush1.msra.mxu0 0.0
        %3531 = vmatprep.subr.mxu0 0.0
        %3532 = vmatpush1.msra.mxu0 0.0
        %3533 = vmatprep.subr.mxu0 0.0
        %3534 = vmatpush1.msra.mxu0 0.0
        %3535 = vmatprep.subr.mxu0 0.0
        %3536 = vmatpush1.msra.mxu0 0.0
        %3537 = vmatprep.subr.mxu0 0.0
        %3538 = vmatpush1.msra.mxu0 0.0
        %3539 = vmatprep.subr.mxu0 0.0
        %3540 = vmatpush1.msra.mxu0 0.0
        %3541 = vmatprep.subr.mxu0 0.0
        %3542 = vmatpush1.msra.mxu0 0.0
        %3543 = vmatprep.subr.mxu0 0.0
        %3544 = vmatpush1.msra.mxu0 0.0
        %3545 = vmatprep.subr.mxu0 0.0
        %3546 = vmatpush1.msra.mxu0 0.0
        %3547 = vmatprep.subr.mxu0 0.0
        %3548 = vmatpush1.msra.mxu0 %v3497
        %3549 = vmatprep.subr.mxu0 0.0
        %3550 = vmatpush1.msra.mxu0 %v3496
        %3551 = vmatprep.subr.mxu0 0.0
        %3552 = vmatpush1.msra.mxu0 %v3495
        %3553 = vmatprep.subr.mxu0 0.0
        %3554 = vmatpush1.msra.mxu0 %v3494
        %3555 = vmatprep.subr.mxu0 0.0
        %3556 = vmatpush2.msra.mxu0 0.0
        %3557 = vmatprep.subr.mxu0 0.0
        %3558 = vmatpush2.msra.mxu0 0.0
        %3559 = vmatprep.subr.mxu0 0.0
        %3560 = vmatpush2.msra.mxu0 0.0
        %3561 = vmatprep.subr.mxu0 0.0
        %3562 = vmatpush2.msra.mxu0 0.0
        %3563 = vmatprep.subr.mxu0 0.0
        %3564 = vmatpush2.msra.mxu0 0.0
        %3565 = vmatprep.subr.mxu0 0.0
        %3566 = vmatpush2.msra.mxu0 0.0
        %3567 = vmatprep.subr.mxu0 0.0
        %3568 = vmatpush2.msra.mxu0 0.0
        %3569 = vmatprep.subr.mxu0 0.0
        %3570 = vmatpush2.msra.mxu0 0.0
        %3571 = vmatprep.subr.mxu0 0.0
        %3572 = vmatpush2.msra.mxu0 0.0
        %3573 = vmatprep.subr.mxu0 0.0
        %3574 = vmatpush2.msra.mxu0 0.0
        %3575 = vmatprep.subr.mxu0 0.0
        %3576 = vmatpush2.msra.mxu0 0.0
        %3577 = vmatprep.subr.mxu0 0.0
        %3578 = vmatpush2.msra.mxu0 0.0
        %3579 = vmatprep.subr.mxu0 0.0
        %3580 = vmatpush2.msra.mxu0 0.0
        %3581 = vmatprep.subr.mxu0 0.0
        %3582 = vmatpush2.msra.mxu0 0.0
        %3583 = vmatprep.subr.mxu0 0.0
        %3584 = vmatpush2.msra.mxu0 0.0
        %3585 = vmatprep.subr.mxu0 0.0
        %3586 = vmatpush2.msra.mxu0 0.0
        %3587 = vmatprep.mubr.f32.mxu0 0.0
        %3588 = vmatmul.mubr.f32.gmra.mxu0 %v3506
        %v3589 = vpop.f32.mrf.mxu0
        %v3590 = vadd.f32 %v3503, %v3589
        %v3591 = vpop.f32.mrf.mxu0
        %3592 = vmatprep.mubr.f32.mxu0 0.0
        %3593 = vmatmul.mubr.f32.gmra.mxu0 %v3509
        %v3594 = vpop.f32.mrf.mxu0
        %v3595 = vadd.f32 %v3503, %v3594
        %v3596 = vpop.f32.mrf.mxu0
        %3597 = vmatprep.mubr.f32.mxu0 0.0
        %3598 = vmatmul.mubr.f32.gmra.mxu0 %v3512
        %v3599 = vpop.f32.mrf.mxu0
        %v3600 = vadd.f32 %v3503, %v3599
        %v3601 = vpop.f32.mrf.mxu0
        %3602 = vmatprep.mubr.f32.mxu0 0.0
        %3603 = vmatmul.mubr.f32.gmra.mxu0 %v3515
        %v3604 = vpop.f32.mrf.mxu0
        %v3605 = vadd.f32 %v3503, %v3604
        %v3606 = vpop.f32.mrf.mxu0
        %3607 = vmatprep.mubr.f32.mxu0 0.0
        %3608 = vmatmul.mubr.f32.gmra.mxu0 %v3518
        %v3609 = vpop.f32.mrf.mxu0
        %v3610 = vadd.f32 %v3503, %v3609
        %v3611 = vpop.f32.mrf.mxu0
        %3612 = vmatprep.mubr.f32.mxu0 0.0
        %3613 = vmatmul.mubr.f32.gmra.mxu0 %v3521
        %v3614 = vpop.f32.mrf.mxu0
        %v3615 = vadd.f32 %v3503, %v3614
        %v3616 = vpop.f32.mrf.mxu0
        %3617 = vdwg.mxu0
        %v3618 = vmul.f32 %v3590, 0.5
        %v3619 = vmul.f32 %v3595, 0.5
        %v3620 = vmul.f32 %v3600, 0.5
        %v3621 = vmul.f32 %v3605, 0.5
        %v3622 = vmul.f32 %v3610, 0.5
        %v3623 = vmul.f32 %v3615, 0.5
        %v3624 = vmul.f32 %v3590, 0.044715
        %v3625 = vmul.f32 %v3595, 0.044715
        %v3626 = vmul.f32 %v3600, 0.044715
        %v3627 = vmul.f32 %v3605, 0.044715
        %v3628 = vmul.f32 %v3610, 0.044715
        %v3629 = vmul.f32 %v3615, 0.044715
        %v3630 = vmul.f32 %v3624, %v3590
        %v3631 = vmul.f32 %v3625, %v3595
        %v3632 = vmul.f32 %v3626, %v3600
        %v3633 = vmul.f32 %v3627, %v3605
        %v3634 = vmul.f32 %v3628, %v3610
        %v3635 = vmul.f32 %v3629, %v3615
        %v3636 = vmul.f32 %v3630, %v3590
        %v3637 = vmul.f32 %v3631, %v3595
        %v3638 = vmul.f32 %v3632, %v3600
        %v3639 = vmul.f32 %v3633, %v3605
        %v3640 = vmul.f32 %v3634, %v3610
        %v3641 = vmul.f32 %v3635, %v3615
        %v3642 = vadd.f32 %v3590, %v3636
        %v3643 = vadd.f32 %v3595, %v3637
        %v3644 = vadd.f32 %v3600, %v3638
        %v3645 = vadd.f32 %v3605, %v3639
        %v3646 = vadd.f32 %v3610, %v3640
        %v3647 = vadd.f32 %v3615, %v3641
        %v3648 = vmul.f32 %v3642, 0.7978846
        %v3649 = vmul.f32 %v3643, 0.7978846
        %v3650 = vmul.f32 %v3644, 0.7978846
        %v3651 = vmul.f32 %v3645, 0.7978846
        %v3652 = vmul.f32 %v3646, 0.7978846
        %v3653 = vmul.f32 %v3647, 0.7978846
        %v3654 = vtanh.pop %v3648
        %v3655 = vtanh.pop %v3649
        %v3656 = vtanh.pop %v3650
        %v3657 = vtanh.pop %v3651
        %v3658 = vtanh.pop %v3652
        %v3659 = vtanh.pop %v3653
        %v3660 = vadd.f32 %v3654, 1.0
        %v3661 = vadd.f32 %v3655, 1.0
        %v3662 = vadd.f32 %v3656, 1.0
        %v3663 = vadd.f32 %v3657, 1.0
        %v3664 = vadd.f32 %v3658, 1.0
        %v3665 = vadd.f32 %v3659, 1.0
        %v3666 = vmul.f32 %v3618, %v3660
        %v3667 = vmul.f32 %v3619, %v3661
        %v3668 = vmul.f32 %v3620, %v3662
        %v3669 = vmul.f32 %v3621, %v3663
        %v3670 = vmul.f32 %v3622, %v3664
        %v3671 = vmul.f32 %v3623, %v3665
        %v3672 = vld [vmem:[%s963] sm:$0xff]
        %v3673 = vld [vmem:[%s963 + $0x8] sm:$0xff]
        %v3674 = vld [vmem:[%s963 + $0x10] sm:$0xff]
        %v3675 = vld [vmem:[%s963 + $0x18] sm:$0xff]
        %v3676 = vld [vmem:[%s963 + $0x20] sm:$0xff]
        %v3677 = vld [vmem:[%s963 + $0x28] sm:$0xff]
        %v3678 = vld [vmem:[%s963 + $0x30] sm:$0xff]
        %v3679 = vld [vmem:[%s963 + $0x38] sm:$0xff]
        %v3680 = vld [vmem:[%s820] sm:$0x1]
        %v3682 = vlaneseq
        %v3683 = vshrl.u32 %v3682, 7
        %v3684 = vsub.s32 0, %v3683
        %v3685 = vrot.slane %v3680, %v3684
        %vm3687 = vcmask 523264
        %v3689 = vsel %vm3687, %v3666, 0
        %v3692 = vsel %vm3687, %v3667, 0
        %v3695 = vsel %vm3687, %v3668, 0
        %v3698 = vsel %vm3687, %v3669, 0
        %v3701 = vsel %vm3687, %v3670, 0
        %v3704 = vsel %vm3687, %v3671, 0
        %3706 = vmatprep.subr.mxu0 0.0
        %3707 = vmatpush1.msra.mxu0 0.0
        %3708 = vmatprep.subr.mxu0 0.0
        %3709 = vmatpush1.msra.mxu0 0.0
        %3710 = vmatprep.subr.mxu0 0.0
        %3711 = vmatpush1.msra.mxu0 0.0
        %3712 = vmatprep.subr.mxu0 0.0
        %3713 = vmatpush1.msra.mxu0 0.0
        %3714 = vmatprep.subr.mxu0 0.0
        %3715 = vmatpush1.msra.mxu0 0.0
        %3716 = vmatprep.subr.mxu0 0.0
        %3717 = vmatpush1.msra.mxu0 0.0
        %3718 = vmatprep.subr.mxu0 0.0
        %3719 = vmatpush1.msra.mxu0 0.0
        %3720 = vmatprep.subr.mxu0 0.0
        %3721 = vmatpush1.msra.mxu0 0.0
        %3722 = vmatprep.subr.mxu0 0.0
        %3723 = vmatpush1.msra.mxu0 %v3679
        %3724 = vmatprep.subr.mxu0 0.0
        %3725 = vmatpush1.msra.mxu0 %v3678
        %3726 = vmatprep.subr.mxu0 0.0
        %3727 = vmatpush1.msra.mxu0 %v3677
        %3728 = vmatprep.subr.mxu0 0.0
        %3729 = vmatpush1.msra.mxu0 %v3676
        %3730 = vmatprep.subr.mxu0 0.0
        %3731 = vmatpush1.msra.mxu0 %v3675
        %3732 = vmatprep.subr.mxu0 0.0
        %3733 = vmatpush1.msra.mxu0 %v3674
        %3734 = vmatprep.subr.mxu0 0.0
        %3735 = vmatpush1.msra.mxu0 %v3673
        %3736 = vmatprep.subr.mxu0 0.0
        %3737 = vmatpush1.msra.mxu0 %v3672
        %3738 = vmatprep.subr.mxu0 0.0
        %3739 = vmatpush2.msra.mxu0 0.0
        %3740 = vmatprep.subr.mxu0 0.0
        %3741 = vmatpush2.msra.mxu0 0.0
        %3742 = vmatprep.subr.mxu0 0.0
        %3743 = vmatpush2.msra.mxu0 0.0
        %3744 = vmatprep.subr.mxu0 0.0
        %3745 = vmatpush2.msra.mxu0 0.0
        %3746 = vmatprep.subr.mxu0 0.0
        %3747 = vmatpush2.msra.mxu0 0.0
        %3748 = vmatprep.subr.mxu0 0.0
        %3749 = vmatpush2.msra.mxu0 0.0
        %3750 = vmatprep.subr.mxu0 0.0
        %3751 = vmatpush2.msra.mxu0 0.0
        %3752 = vmatprep.subr.mxu0 0.0
        %3753 = vmatpush2.msra.mxu0 0.0
        %3754 = vmatprep.subr.mxu0 0.0
        %3755 = vmatpush2.msra.mxu0 0.0
        %3756 = vmatprep.subr.mxu0 0.0
        %3757 = vmatpush2.msra.mxu0 0.0
        %3758 = vmatprep.subr.mxu0 0.0
        %3759 = vmatpush2.msra.mxu0 0.0
        %3760 = vmatprep.subr.mxu0 0.0
        %3761 = vmatpush2.msra.mxu0 0.0
        %3762 = vmatprep.subr.mxu0 0.0
        %3763 = vmatpush2.msra.mxu0 0.0
        %3764 = vmatprep.subr.mxu0 0.0
        %3765 = vmatpush2.msra.mxu0 0.0
        %3766 = vmatprep.subr.mxu0 0.0
        %3767 = vmatpush2.msra.mxu0 0.0
        %3768 = vmatprep.subr.mxu0 0.0
        %3769 = vmatpush2.msra.mxu0 0.0
        %3770 = vmatprep.mubr.f32.mxu0 0.0
        %3771 = vmatmul.mubr.f32.gmra.mxu0 %v3689
        %v3772 = vpop.f32.mrf.mxu0
        %v3773 = vadd.f32 %v3685, %v3772
        %v3774 = vpop.f32.mrf.mxu0
        %3775 = vmatprep.mubr.f32.mxu0 0.0
        %3776 = vmatmul.mubr.f32.gmra.mxu0 %v3692
        %v3777 = vpop.f32.mrf.mxu0
        %v3778 = vadd.f32 %v3685, %v3777
        %v3779 = vpop.f32.mrf.mxu0
        %3780 = vmatprep.mubr.f32.mxu0 0.0
        %3781 = vmatmul.mubr.f32.gmra.mxu0 %v3695
        %v3782 = vpop.f32.mrf.mxu0
        %v3783 = vadd.f32 %v3685, %v3782
        %v3784 = vpop.f32.mrf.mxu0
        %3785 = vmatprep.mubr.f32.mxu0 0.0
        %3786 = vmatmul.mubr.f32.gmra.mxu0 %v3698
        %v3787 = vpop.f32.mrf.mxu0
        %v3788 = vadd.f32 %v3685, %v3787
        %v3789 = vpop.f32.mrf.mxu0
        %3790 = vmatprep.mubr.f32.mxu0 0.0
        %3791 = vmatmul.mubr.f32.gmra.mxu0 %v3701
        %v3792 = vpop.f32.mrf.mxu0
        %v3793 = vadd.f32 %v3685, %v3792
        %v3794 = vpop.f32.mrf.mxu0
        %3795 = vmatprep.mubr.f32.mxu0 0.0
        %3796 = vmatmul.mubr.f32.gmra.mxu0 %v3704
        %v3797 = vpop.f32.mrf.mxu0
        %v3798 = vadd.f32 %v3685, %v3797
        %v3799 = vpop.f32.mrf.mxu0
        %3800 = vdwg.mxu0
        %v3801 = vld [vmem:[%s828] sm:$0x1]
        %v3803 = vlaneseq
        %v3804 = vshrl.u32 %v3803, 7
        %v3805 = vsub.s32 0, %v3804
        %v3806 = vrot.slane %v3801, %v3805
        %v3808 = vmul.f32 %v3806, %v3773
        %v3809 = vmul.f32 %v3806, %v3778
        %v3810 = vmul.f32 %v3806, %v3783
        %v3811 = vmul.f32 %v3806, %v3788
        %v3812 = vmul.f32 %v3806, %v3793
        %v3813 = vmul.f32 %v3806, %v3798
        %v3814 = vadd.f32 %v3384, %v3808
        %v3815 = vadd.f32 %v3385, %v3809
        %v3816 = vadd.f32 %v3386, %v3810
        %v3817 = vadd.f32 %v3387, %v3811
        %v3818 = vadd.f32 %v3388, %v3812
        %v3819 = vadd.f32 %v3389, %v3813
        %3820 = vst.msk [vmem:[#allocation2] sm:$0xff] %vm989, %v3814
        %3821 = vst.msk [vmem:[#allocation2 + $0x8] sm:$0xff] %vm989, %v3815
        %3822 = vst.msk [vmem:[#allocation2 + $0x10] sm:$0xff] %vm989, %v3816
        %3823 = vst.msk [vmem:[#allocation2 + $0x18] sm:$0xff] %vm989, %v3817
        %3824 = vst.msk [vmem:[#allocation2 + $0x20] sm:$0xff] %vm989, %v3818
        %3825 = vst.msk [vmem:[#allocation2 + $0x28] sm:$0xff] %vm989, %v3819
        %p3826 = scmp.eq.s32.totalorder %s45, 1
        // Predicated region
        $region137: #{nlp_beit_forward.1} parent=91 // pred_check
          %p3827 = pneg %p3826
        $region138: #{nlp_beit_forward.1} parent=91 // pred_check_branch
          %3829 = sbr.rel (%p3827) target = $region140
        $region139: #{nlp_beit_forward.1} parent=91 // pred_region
          %v3831 = vrot.slane %v3817, 7
          %vm3833 = vcmask 1040384
          %v3834 = vsel %vm3833, %v3814, %v3831
          %v3835 = vld [vmem:[#allocation17] sm:$0xff]
          %v3836 = vld [vmem:[#allocation17 + $0x8] sm:$0xff]
          %v3837 = vld [vmem:[#allocation17 + $0x10] sm:$0xff]
          %v3838 = vld [vmem:[#allocation17 + $0x18] sm:$0xff]
          %v3839 = vld [vmem:[%s17] sm:$0x1]
          %v3841 = vlaneseq
          %v3842 = vshrl.u32 %v3841, 7
          %v3843 = vsub.s32 0, %v3842
          %v3844 = vrot.slane %v3839, %v3843
          %v3847 = vsel %vm989, %v3834, 0
          %3849 = vmatprep.subr.mxu0 0.0
          %3850 = vmatpush1.msra.mxu0 0.0
          %3851 = vmatprep.subr.mxu0 0.0
          %3852 = vmatpush1.msra.mxu0 0.0
          %3853 = vmatprep.subr.mxu0 0.0
          %3854 = vmatpush1.msra.mxu0 0.0
          %3855 = vmatprep.subr.mxu0 0.0
          %3856 = vmatpush1.msra.mxu0 0.0
          %3857 = vmatprep.subr.mxu0 0.0
          %3858 = vmatpush1.msra.mxu0 0.0
          %3859 = vmatprep.subr.mxu0 0.0
          %3860 = vmatpush1.msra.mxu0 0.0
          %3861 = vmatprep.subr.mxu0 0.0
          %3862 = vmatpush1.msra.mxu0 0.0
          %3863 = vmatprep.subr.mxu0 0.0
          %3864 = vmatpush1.msra.mxu0 0.0
          %3865 = vmatprep.subr.mxu0 0.0
          %3866 = vmatpush1.msra.mxu0 0.0
          %3867 = vmatprep.subr.mxu0 0.0
          %3868 = vmatpush1.msra.mxu0 0.0
          %3869 = vmatprep.subr.mxu0 0.0
          %3870 = vmatpush1.msra.mxu0 0.0
          %3871 = vmatprep.subr.mxu0 0.0
          %3872 = vmatpush1.msra.mxu0 0.0
          %3873 = vmatprep.subr.mxu0 0.0
          %3874 = vmatpush1.msra.mxu0 %v3838
          %3875 = vmatprep.subr.mxu0 0.0
          %3876 = vmatpush1.msra.mxu0 %v3837
          %3877 = vmatprep.subr.mxu0 0.0
          %3878 = vmatpush1.msra.mxu0 %v3836
          %3879 = vmatprep.subr.mxu0 0.0
          %3880 = vmatpush1.msra.mxu0 %v3835
          %3881 = vmatprep.subr.mxu0 0.0
          %3882 = vmatpush2.msra.mxu0 0.0
          %3883 = vmatprep.subr.mxu0 0.0
          %3884 = vmatpush2.msra.mxu0 0.0
          %3885 = vmatprep.subr.mxu0 0.0
          %3886 = vmatpush2.msra.mxu0 0.0
          %3887 = vmatprep.subr.mxu0 0.0
          %3888 = vmatpush2.msra.mxu0 0.0
          %3889 = vmatprep.subr.mxu0 0.0
          %3890 = vmatpush2.msra.mxu0 0.0
          %3891 = vmatprep.subr.mxu0 0.0
          %3892 = vmatpush2.msra.mxu0 0.0
          %3893 = vmatprep.subr.mxu0 0.0
          %3894 = vmatpush2.msra.mxu0 0.0
          %3895 = vmatprep.subr.mxu0 0.0
          %3896 = vmatpush2.msra.mxu0 0.0
          %3897 = vmatprep.subr.mxu0 0.0
          %3898 = vmatpush2.msra.mxu0 0.0
          %3899 = vmatprep.subr.mxu0 0.0
          %3900 = vmatpush2.msra.mxu0 0.0
          %3901 = vmatprep.subr.mxu0 0.0
          %3902 = vmatpush2.msra.mxu0 0.0
          %3903 = vmatprep.subr.mxu0 0.0
          %3904 = vmatpush2.msra.mxu0 0.0
          %3905 = vmatprep.subr.mxu0 0.0
          %3906 = vmatpush2.msra.mxu0 0.0
          %3907 = vmatprep.subr.mxu0 0.0
          %3908 = vmatpush2.msra.mxu0 0.0
          %3909 = vmatprep.subr.mxu0 0.0
          %3910 = vmatpush2.msra.mxu0 0.0
          %3911 = vmatprep.subr.mxu0 0.0
          %3912 = vmatpush2.msra.mxu0 0.0
          %3913 = vmatprep.mubr.f32.mxu0 0.0
          %3914 = vmatmul.mubr.f32.gmra.mxu0 %v3847
          %v3915 = vpop.f32.mrf.mxu0
          %v3916 = vadd.f32 %v3844, %v3915
          %v3917 = vpop.f32.mrf.mxu0
          %3918 = vdwg.mxu0
          %vm3919 = vcmask 1041408
          %v3920 = vsel %vm3919, %v3916, 0.0
          %3921 = vst [vmem:[%s18] sm:$0xff] %v3920
        $region140: #{nlp_beit_forward.1} parent=91 // pred_fallthru
          _
        // Predicated region
        $region141: #{nlp_beit_forward.1} parent=91 // pred_check
          %p3922 = pneg %p511
        $region142: #{nlp_beit_forward.1} parent=91 // pred_check_branch
          %3924 = sbr.rel (%p3922) target = $region144
        $region143: #{nlp_beit_forward.1} parent=91 // pred_region
          _
        $region144: #{nlp_beit_forward.1} parent=91 // pred_fallthru
          _
        // Predicated region
        $region145: #{nlp_beit_forward.1} parent=91 // pred_check
          %p3925 = pneg %p511
        $region146: #{nlp_beit_forward.1} parent=91 // pred_check_branch
          %3927 = sbr.rel (%p3925) target = $region148
        $region147: #{nlp_beit_forward.1} parent=91 // pred_region
          _
        $region148: #{nlp_beit_forward.1} parent=91 // pred_fallthru
          _
      $region92: #{nlp_beit_forward.1} parent=5 // pred_fallthru
        _
      %p3928 = scmp.le.s32.totalorder 2, %s40
      // Predicated region
      $region149: #{nlp_beit_forward.1} parent=5 // pred_check
        %p3929 = pneg %p3928
      $region150: #{nlp_beit_forward.1} parent=5 // pred_check_branch
        %3931 = sbr.rel (%p3929) target = $region152
      $region151: #{nlp_beit_forward.1} parent=5 // pred_region
        %s3932 = ssub.s32 %s40, 2
      $region152: #{nlp_beit_forward.1} parent=5 // pred_fallthru
        _
    $region6: #{nlp_beit_forward.1} parent=1 // loop_footer
      %s44 = sadd.s32 1, %s40
    $region7: #{nlp_beit_forward.1} parent=1 // loop_footer_branch
      %39 = sbr.rel target = $region3
    $region8: #{nlp_beit_forward.1} parent=1 // loop_exit
      _
    %3933 = vsyncpa [#allocation4], 1
    %s3934 = scalar_lea.sflag [#allocation4], 1
    %3935 = vsyncpa %s3934, 1
    %3936 = vsyncpa [#allocation6], 1
    %s3937 = scalar_lea.sflag [#allocation6], 1
    %3938 = vsyncpa %s3937, 1
    %3939 = vsyncpa [#allocation9], 1
    %s3940 = scalar_lea.sflag [#allocation9], 1
    %3941 = vsyncpa %s3940, 1
    %3942 = vsyncpa [#allocation12], 1
    %s3943 = scalar_lea.sflag [#allocation12], 1
    %3944 = vsyncpa %s3943, 1
    %3945 = vsyncpa [#allocation15], 1
    %s3946 = scalar_lea.sflag [#allocation15], 1
    %3947 = vsyncpa %s3946, 1
    %3948 = vsyncpa [#allocation18], 1

</llo_original>
